<compile_context>
chip_gen: v6e
topology: v6e:2x2x1
jax: 0.10.0
libtpu: 0.0.40
codegen_flags: <defaults>
</compile_context>

<pallas_src>
import functools

import jax
import jax.numpy as jnp
from jax.experimental import pallas as pl
from jax.experimental.pallas import tpu as pltpu


# ----------------------------- kernel helpers --------------------------------

def _layer_norm(x, w, b, eps=1e-5):
    """LayerNorm over the last dim, fp32 math (matches the LayerNorm subclass)."""
    mu = jnp.mean(x, axis=-1, keepdims=True)
    var = jnp.mean((x - mu) ** 2, axis=-1, keepdims=True)
    return (x - mu) * jax.lax.rsqrt(var + eps) * w + b


# --------------------------------- kernel ------------------------------------

def _transformer_kernel(x_ref,
                        ln1_w_ref, ln1_b_ref,
                        qkv_w_ref, qkv_b_ref,
                        out_w_ref, out_b_ref,
                        ln2_w_ref, ln2_b_ref,
                        fc_w_ref, fc_b_ref,
                        pj_w_ref, pj_b_ref,
                        state_ref,
                        *, n_head):
    """grid = (batch_blocks, layers).  The layer axis is sequential ('arbitrary');
    the output block (B_TILE rows) stays resident in VMEM and carries the
    residual stream (f32) across layers."""
    layer = pl.program_id(1)

    # Initialize the residual stream from the input on the first layer.
    @pl.when(layer == 0)
    def _():
        state_ref[...] = x_ref[...]

    x = state_ref[...]                        # (Bt, L, D) float32
    Bt, L, D = x.shape
    H = n_head
    hd = D // H
    M = Bt * L
    scale = hd ** -0.5

    xf = x.reshape(M, D)                      # flatten batch*seq for the projections

    # ---- x = x + out_proj(MHA(ln_1(x))) ----
    h1 = _layer_norm(xf, ln1_w_ref[0, 0], ln1_b_ref[0, 0])
    # fused QKV projection: one (M, D) x (D, 3D) MXU pass, bf16 operands, f32 accum
    qkv = jnp.dot(h1.astype(jnp.bfloat16), qkv_w_ref[0],
                  preferred_element_type=jnp.float32) + qkv_b_ref[0, 0]   # (M, 3D)

    q = (qkv[:, 0:D] * scale).reshape(Bt, L, D).astype(jnp.bfloat16)
    k = qkv[:, D:2 * D].reshape(Bt, L, D).astype(jnp.bfloat16)
    v = qkv[:, 2 * D:3 * D].reshape(Bt, L, D).astype(jnp.bfloat16)

    w_out = out_w_ref[0]                      # (D, D) in (in_features, out_features)
    attn = jnp.zeros((M, D), jnp.float32)
    for h in range(H):                        # static unroll over heads
        sl = slice(h * hd, (h + 1) * hd)
        s = jnp.einsum('bld,bmd->blm', q[:, :, sl], k[:, :, sl],
                       preferred_element_type=jnp.float32)                # (Bt, L, L)
        s = s - jnp.max(s, axis=-1, keepdims=True)
        p = jnp.exp(s)
        p = p * pl.reciprocal(jnp.sum(p, axis=-1, keepdims=True), approx=True)
        oh = jnp.einsum('blm,bmd->bld', p.astype(jnp.bfloat16), v[:, :, sl],
                        preferred_element_type=jnp.float32)               # (Bt, L, hd)
        # accumulate the output projection per head -> no lane-axis concat
        attn = attn + jnp.dot(oh.reshape(M, hd).astype(jnp.bfloat16),
                              w_out[sl, :], preferred_element_type=jnp.float32)
    xf = xf + attn + out_b_ref[0, 0]

    # ---- x = x + c_proj(QuickGELU(c_fc(ln_2(x)))) ----
    h2 = _layer_norm(xf, ln2_w_ref[0, 0], ln2_b_ref[0, 0])
    ff = jnp.dot(h2.astype(jnp.bfloat16), fc_w_ref[0],
                 preferred_element_type=jnp.float32) + fc_b_ref[0, 0]     # (M, 4D)
    ff = ff * jax.nn.sigmoid(1.702 * ff)                                  # QuickGELU
    ff = jnp.dot(ff.astype(jnp.bfloat16), pj_w_ref[0],
                 preferred_element_type=jnp.float32) + pj_b_ref[0, 0]     # (M, D)
    xf = xf + ff

    state_ref[...] = xf.reshape(Bt, L, D)


# -------------------------------- wrapper -------------------------------------

def transformer_forward(x_lnd, params, *, n_head, block_b=None, vmem_limit_bytes=None):
    """x_lnd: (L, N, D)  -- PyTorch (seq, batch, width) convention.  params in
    PyTorch f32 layout (see init_params)."""
    L, N, D = x_lnd.shape
    layers = params["ln1_w"].shape[0]
    x_bld = jnp.transpose(x_lnd, (1, 0, 2)).astype(jnp.float32)           # (B, L, D)

    # Batch tile: amortize per-layer weight DMA over several rows, but keep >= 2
    # batch blocks so the parallel axis can be split across v7x's 2 TensorCores.
    if block_b is None:
        block_b = max(1, min(8, N // 2)) if N > 1 else 1
        while N % block_b:
            block_b -= 1
    assert N % block_b == 0, "batch must be divisible by block_b"
    Bt = block_b

    # Pre-transpose weights once on the host to (in_features, out_features) and
    # cast to bf16 (MXU-native on v5e/v6e/v7x, halves weight HBM traffic / VMEM).
    wdt = jnp.bfloat16
    qkv_w = jnp.transpose(params["in_w"], (0, 2, 1)).astype(wdt)   # (layers, D, 3D)
    out_w = jnp.transpose(params["out_w"], (0, 2, 1)).astype(wdt)  # (layers, D, D)
    fc_w = jnp.transpose(params["fc_w"], (0, 2, 1)).astype(wdt)    # (layers, D, 4D)
    pj_w = jnp.transpose(params["pj_w"], (0, 2, 1)).astype(wdt)    # (layers, 4D, D)

    if vmem_limit_bytes is None:
        # double-buffered bf16 weights + resident state + qkv/ff activations
        w_bytes = 2 * 2 * D * (3 * D + D + 4 * D + 4 * D)
        act_bytes = 2 * 4 * Bt * L * (2 * D + 3 * D + 4 * D)
        vmem_limit_bytes = max(32 << 20,
                               min(int(1.5 * (w_bytes + act_bytes)) + (4 << 20),
                                   100 << 20))
        # TODO(synk): on v7x (64 MiB physical VMEM) keep block_b small enough that
        # this estimate stays under ~56 MiB; the demo sizes are far below that.

    lspec = lambda shape: pl.BlockSpec(shape, lambda b, l: (l, 0, 0))
    kernel = functools.partial(_transformer_kernel, n_head=n_head)

    out = pl.pallas_call(
        kernel,
        out_shape=jax.ShapeDtypeStruct((N, L, D), jnp.float32),
        grid_spec=pltpu.PrefetchScalarGridSpec(
            num_scalar_prefetch=0,
            grid=(N // Bt, layers),
            in_specs=[
                pl.BlockSpec((Bt, L, D), lambda b, l: (b, 0, 0)),  # x (layer-invariant -> no re-DMA)
                lspec((1, 1, D)), lspec((1, 1, D)),                # ln_1 w, b
                lspec((1, D, 3 * D)), lspec((1, 1, 3 * D)),        # fused QKV w, b
                lspec((1, D, D)), lspec((1, 1, D)),                # out_proj w, b
                lspec((1, 1, D)), lspec((1, 1, D)),                # ln_2 w, b
                lspec((1, D, 4 * D)), lspec((1, 1, 4 * D)),        # c_fc w, b
                lspec((1, 4 * D, D)), lspec((1, 1, D)),            # c_proj w, b
            ],
            out_specs=pl.BlockSpec((Bt, L, D), lambda b, l: (b, 0, 0)),
        ),
        compiler_params=pltpu.CompilerParams(
            dimension_semantics=("parallel", "arbitrary"),
            vmem_limit_bytes=vmem_limit_bytes),
    )(x_bld,
      params["ln1_w"], params["ln1_b"],
      qkv_w, params["in_b"],
      out_w, params["out_b"],
      params["ln2_w"], params["ln2_b"],
      fc_w, params["fc_b"],
      pj_w, params["pj_b"])

    return jnp.transpose(out, (1, 0, 2))      # back to (L, N, D)


# -------------------------- plain-JAX reference --------------------------------

def transformer_reference(x_lnd, params, *, n_head):
    L, N, D = x_lnd.shape
    layers = params["ln1_w"].shape[0]
    hd = D // n_head
    hp = jax.lax.Precision.HIGHEST
    x = jnp.transpose(x_lnd, (1, 0, 2)).astype(jnp.float32)  # (B, L, D)

    def ln(t, w, b, eps=1e-5):
        mu = jnp.mean(t, -1, keepdims=True)
        var = jnp.mean((t - mu) ** 2, -1, keepdims=True)
        return (t - mu) / jnp.sqrt(var + eps) * w + b

    for l in range(layers):
        h1 = ln(x, params["ln1_w"][l, 0], params["ln1_b"][l, 0])
        qkv = jnp.einsum("bld,ed->ble", h1, params["in_w"][l], precision=hp) \
            + params["in_b"][l, 0]
        q, k, v = jnp.split(qkv, 3, axis=-1)
        q = q.reshape(N, L, n_head, hd).transpose(0, 2, 1, 3) * hd ** -0.5
        k = k.reshape(N, L, n_head, hd).transpose(0, 2, 1, 3)
        v = v.reshape(N, L, n_head, hd).transpose(0, 2, 1, 3)
        s = jnp.einsum("bhld,bhmd->bhlm", q, k, precision=hp)
        p = jax.nn.softmax(s, axis=-1)
        o = jnp.einsum("bhlm,bhmd->bhld", p, v, precision=hp)
        o = o.transpose(0, 2, 1, 3).reshape(N, L, D)
        o = jnp.einsum("bld,ed->ble", o, params["out_w"][l], precision=hp) \
            + params["out_b"][l, 0]
        x = x + o
        h2 = ln(x, params["ln2_w"][l, 0], params["ln2_b"][l, 0])
        ff = jnp.einsum("bld,ed->ble", h2, params["fc_w"][l], precision=hp) \
            + params["fc_b"][l, 0]
        ff = ff * jax.nn.sigmoid(1.702 * ff)
        ff = jnp.einsum("ble,de->bld", ff, params["pj_w"][l], precision=hp) \
            + params["pj_b"][l, 0]
        x = x + ff
    return jnp.transpose(x, (1, 0, 2))


# --------------------------------- main ----------------------------------------

def init_params(key, layers, width):
    """Parameters in PyTorch layout (weight = (out_features, in_features)), f32."""
    D = width
    ks = jax.random.split(key, 8)
    s = 0.02
    return {
        "ln1_w": jnp.ones((layers, 1, D), jnp.float32),
        "ln1_b": jnp.zeros((layers, 1, D), jnp.float32),
        "in_w":  s * jax.random.normal(ks[0], (layers, 3 * D, D), jnp.float32),
        "in_b":  s * jax.random.normal(ks[1], (layers, 1, 3 * D), jnp.float32),
        "out_w": s * jax.random.normal(ks[2], (layers, D, D), jnp.float32),
        "out_b": s * jax.random.normal(ks[3], (layers, 1, D), jnp.float32),
        "ln2_w": jnp.ones((layers, 1, D), jnp.float32),
        "ln2_b": jnp.zeros((layers, 1, D), jnp.float32),
        "fc_w":  s * jax.random.normal(ks[4], (layers, 4 * D, D), jnp.float32),
        "fc_b":  s * jax.random.normal(ks[5], (layers, 1, 4 * D), jnp.float32),
        "pj_w":  s * jax.random.normal(ks[6], (layers, D, 4 * D), jnp.float32),
        "pj_b":  s * jax.random.normal(ks[7], (layers, 1, D), jnp.float32),
    }


if __name__ == "__main__":
    # small but tile-friendly: D multiple of 128, L multiple of 8, batch tiled by 2
    width, layers, heads = 128, 2, 4
    seq_len, batch = 8, 4

    key = jax.random.PRNGKey(0)
    k_x, k_p = jax.random.split(key)
    x = jax.random.normal(k_x, (seq_len, batch, width), jnp.float32)  # (L, N, D)
    params = init_params(k_p, layers, width)

    out = transformer_forward(x, params, n_head=heads)
    out = jax.block_until_ready(out)

    ref = transformer_reference(x, params, n_head=heads)
    assert out.shape == (seq_len, batch, width)
    # kernel runs bf16 matmul operands with f32 accumulation -> allow small tolerance
    assert jnp.allclose(out, ref, atol=1e-2, rtol=1e-2), "mismatch vs JAX reference"

    print("KERNEL_OK")
</pallas_src>

<mosaic_0001>
module attributes {stable_mosaic.version = 11 : i64} {
  func.func @_transformer_kernel(%arg0: i32, %arg1: i32, %arg2: memref<2x8x128xf32, #tpu.memory_space<vmem>>, %arg3: memref<1x1x128xf32, #tpu.memory_space<vmem>>, %arg4: memref<1x1x128xf32, #tpu.memory_space<vmem>>, %arg5: memref<1x128x384xbf16, #tpu.memory_space<vmem>>, %arg6: memref<1x1x384xf32, #tpu.memory_space<vmem>>, %arg7: memref<1x128x128xbf16, #tpu.memory_space<vmem>>, %arg8: memref<1x1x128xf32, #tpu.memory_space<vmem>>, %arg9: memref<1x1x128xf32, #tpu.memory_space<vmem>>, %arg10: memref<1x1x128xf32, #tpu.memory_space<vmem>>, %arg11: memref<1x128x512xbf16, #tpu.memory_space<vmem>>, %arg12: memref<1x1x512xf32, #tpu.memory_space<vmem>>, %arg13: memref<1x512x128xbf16, #tpu.memory_space<vmem>>, %arg14: memref<1x1x128xf32, #tpu.memory_space<vmem>>, %arg15: memref<2x8x128xf32, #tpu.memory_space<vmem>>) attributes {dimension_semantics = [#tpu.dimension_semantics<parallel>, #tpu.dimension_semantics<arbitrary>], iteration_bounds = array<i64: 2, 2>, scalar_prefetch = 0 : i64, scratch_operands = 0 : i64, tpu.core_type = #tpu.core_type<tc>, window_params = [{transform_indices = @transform_0, window_bounds = array<i64: 2, 8, 128>}, {transform_indices = @transform_1, window_bounds = array<i64: 1, 1, 128>}, {transform_indices = @transform_2, window_bounds = array<i64: 1, 1, 128>}, {transform_indices = @transform_3, window_bounds = array<i64: 1, 128, 384>}, {transform_indices = @transform_4, window_bounds = array<i64: 1, 1, 384>}, {transform_indices = @transform_5, window_bounds = array<i64: 1, 128, 128>}, {transform_indices = @transform_6, window_bounds = array<i64: 1, 1, 128>}, {transform_indices = @transform_7, window_bounds = array<i64: 1, 1, 128>}, {transform_indices = @transform_8, window_bounds = array<i64: 1, 1, 128>}, {transform_indices = @transform_9, window_bounds = array<i64: 1, 128, 512>}, {transform_indices = @transform_10, window_bounds = array<i64: 1, 1, 512>}, {transform_indices = @transform_11, window_bounds = array<i64: 1, 512, 128>}, {transform_indices = @transform_12, window_bounds = array<i64: 1, 1, 128>}, {transform_indices = @transform_13, window_bounds = array<i64: 2, 8, 128>}]} {
    %c0_i32 = arith.constant 0 : i32
    %0 = arith.cmpi eq, %arg1, %c0_i32 : i32
    %1 = arith.extui %0 : i1 to i32
    %c0_i32_0 = arith.constant 0 : i32
    %2 = arith.cmpi ne, %1, %c0_i32_0 : i32
    scf.if %2 {
      %c0_78 = arith.constant 0 : index
      %c0_79 = arith.constant 0 : index
      %c0_80 = arith.constant 0 : index
      %203 = vector.load %arg2[%c0_78, %c0_79, %c0_80] : memref<2x8x128xf32, #tpu.memory_space<vmem>>, vector<2x8x128xf32>
      %c0_81 = arith.constant 0 : index
      %c0_82 = arith.constant 0 : index
      %c0_83 = arith.constant 0 : index
      %204 = vector.load %arg15[%c0_81, %c0_82, %c0_83] : memref<2x8x128xf32, #tpu.memory_space<vmem>>, vector<2x8x128xf32>
      tpu.vector_store %arg15[%c0_81, %c0_82, %c0_83], %203 {strides = array<i32>} : memref<2x8x128xf32, #tpu.memory_space<vmem>>, vector<2x8x128xf32>,
    } else {
    }
    %c0 = arith.constant 0 : index
    %c0_1 = arith.constant 0 : index
    %c0_2 = arith.constant 0 : index
    %3 = vector.load %arg15[%c0, %c0_1, %c0_2] : memref<2x8x128xf32, #tpu.memory_space<vmem>>, vector<2x8x128xf32>
    %4 = vector.shape_cast %3 : vector<2x8x128xf32> to vector<16x128xf32>
    %c0_3 = arith.constant 0 : index
    %c0_4 = arith.constant 0 : index
    %c0_5 = arith.constant 0 : index
    %5 = vector.load %arg3[%c0_3, %c0_4, %c0_5] : memref<1x1x128xf32, #tpu.memory_space<vmem>>, vector<1x1x128xf32>
    %6 = vector.shape_cast %5 : vector<1x1x128xf32> to vector<128xf32>
    %c0_6 = arith.constant 0 : index
    %c0_7 = arith.constant 0 : index
    %c0_8 = arith.constant 0 : index
    %7 = vector.load %arg4[%c0_6, %c0_7, %c0_8] : memref<1x1x128xf32, #tpu.memory_space<vmem>>, vector<1x1x128xf32>
    %8 = vector.shape_cast %7 : vector<1x1x128xf32> to vector<128xf32>
    %cst = arith.constant dense<0.000000e+00> : vector<16xf32>
    %9 = vector.multi_reduction <add>, %4, %cst [1] : vector<16x128xf32> to vector<16xf32>
    %10 = vector.shape_cast %9 : vector<16xf32> to vector<16x1xf32>
    %cst_9 = arith.constant 1.280000e+02 : f32
    %11 = vector.broadcast %cst_9 : f32 to vector<16x1xf32>
    %12 = arith.divf %10, %11 : vector<16x1xf32>
    %13 = vector.broadcast %12 : vector<16x1xf32> to vector<16x128xf32>
    %14 = arith.subf %4, %13 : vector<16x128xf32>
    %15 = arith.mulf %14, %14 : vector<16x128xf32>
    %cst_10 = arith.constant dense<0.000000e+00> : vector<16xf32>
    %16 = vector.multi_reduction <add>, %15, %cst_10 [1] : vector<16x128xf32> to vector<16xf32>
    %17 = vector.shape_cast %16 : vector<16xf32> to vector<16x1xf32>
    %cst_11 = arith.constant 1.280000e+02 : f32
    %18 = vector.broadcast %cst_11 : f32 to vector<16x1xf32>
    %19 = arith.divf %17, %18 : vector<16x1xf32>
    %20 = vector.broadcast %12 : vector<16x1xf32> to vector<16x128xf32>
    %21 = arith.subf %4, %20 : vector<16x128xf32>
    %cst_12 = arith.constant 9.99999974E-6 : f32
    %22 = vector.broadcast %cst_12 : f32 to vector<16x1xf32>
    %23 = arith.addf %19, %22 : vector<16x1xf32>
    %24 = math.rsqrt %23 : vector<16x1xf32>
    %25 = vector.broadcast %24 : vector<16x1xf32> to vector<16x128xf32>
    %26 = arith.mulf %21, %25 : vector<16x128xf32>
    %27 = vector.shape_cast %6 : vector<128xf32> to vector<1x128xf32>
    %28 = vector.broadcast %27 : vector<1x128xf32> to vector<16x128xf32>
    %29 = arith.mulf %26, %28 : vector<16x128xf32>
    %30 = vector.shape_cast %8 : vector<128xf32> to vector<1x128xf32>
    %31 = vector.broadcast %30 : vector<1x128xf32> to vector<16x128xf32>
    %32 = arith.addf %29, %31 : vector<16x128xf32>
    %33 = arith.truncf %32 : vector<16x128xf32> to vector<16x128xbf16>
    %c0_13 = arith.constant 0 : index
    %c0_14 = arith.constant 0 : index
    %c0_15 = arith.constant 0 : index
    %34 = vector.load %arg5[%c0_13, %c0_14, %c0_15] : memref<1x128x384xbf16, #tpu.memory_space<vmem>>, vector<1x128x384xbf16>
    %35 = vector.shape_cast %34 : vector<1x128x384xbf16> to vector<128x384xbf16>
    %cst_16 = arith.constant dense<0.000000e+00> : vector<16x384xf32>
    %36 = tpu.matmul %33, %35, %cst_16 {dimension_numbers = #tpu.dot_dimension_numbers<[1], [0], [0], [1], [0, 0, 1, 1], [], []>} : vector<16x128xbf16>, vector<128x384xbf16>, vector<16x384xf32> -> vector<16x384xf32>
    %c0_17 = arith.constant 0 : index
    %c0_18 = arith.constant 0 : index
    %c0_19 = arith.constant 0 : index
    %37 = vector.load %arg6[%c0_17, %c0_18, %c0_19] : memref<1x1x384xf32, #tpu.memory_space<vmem>>, vector<1x1x384xf32>
    %38 = vector.shape_cast %37 : vector<1x1x384xf32> to vector<384xf32>
    %39 = vector.shape_cast %38 : vector<384xf32> to vector<1x384xf32>
    %40 = vector.broadcast %39 : vector<1x384xf32> to vector<16x384xf32>
    %41 = arith.addf %36, %40 : vector<16x384xf32>
    %42 = vector.extract_strided_slice %41 {offsets = [0, 0], sizes = [16, 128], strides = [1, 1]} : vector<16x384xf32> to vector<16x128xf32>
    %cst_20 = arith.constant 0.176776692 : f32
    %43 = vector.broadcast %cst_20 : f32 to vector<16x128xf32>
    %44 = arith.mulf %42, %43 : vector<16x128xf32>
    %45 = vector.shape_cast %44 : vector<16x128xf32> to vector<2x8x128xf32>
    %46 = arith.truncf %45 : vector<2x8x128xf32> to vector<2x8x128xbf16>
    %47 = vector.extract_strided_slice %41 {offsets = [0, 128], sizes = [16, 128], strides = [1, 1]} : vector<16x384xf32> to vector<16x128xf32>
    %48 = vector.shape_cast %47 : vector<16x128xf32> to vector<2x8x128xf32>
    %49 = arith.truncf %48 : vector<2x8x128xf32> to vector<2x8x128xbf16>
    %50 = vector.extract_strided_slice %41 {offsets = [0, 256], sizes = [16, 128], strides = [1, 1]} : vector<16x384xf32> to vector<16x128xf32>
    %51 = vector.shape_cast %50 : vector<16x128xf32> to vector<2x8x128xf32>
    %52 = arith.truncf %51 : vector<2x8x128xf32> to vector<2x8x128xbf16>
    %c0_21 = arith.constant 0 : index
    %c0_22 = arith.constant 0 : index
    %c0_23 = arith.constant 0 : index
    %53 = vector.load %arg7[%c0_21, %c0_22, %c0_23] : memref<1x128x128xbf16, #tpu.memory_space<vmem>>, vector<1x128x128xbf16>
    %54 = vector.shape_cast %53 : vector<1x128x128xbf16> to vector<128x128xbf16>
    %cst_24 = arith.constant 0.000000e+00 : f32
    %55 = vector.broadcast %cst_24 : f32 to vector<16x128xf32>
    %56 = vector.extract_strided_slice %46 {offsets = [0, 0, 0], sizes = [2, 8, 32], strides = [1, 1, 1]} : vector<2x8x128xbf16> to vector<2x8x32xbf16>
    %57 = vector.extract_strided_slice %49 {offsets = [0, 0, 0], sizes = [2, 8, 32], strides = [1, 1, 1]} : vector<2x8x128xbf16> to vector<2x8x32xbf16>
    "tpu.trace_start"() <{level = 10 : i32, message = "bld,bmd->blm"}> : () -> ()
    %cst_25 = arith.constant dense<0.000000e+00> : vector<2x8x8xf32>
    %58 = tpu.matmul %56, %57, %cst_25 {dimension_numbers = #tpu.dot_dimension_numbers<[2], [2], [1], [1], [0, 0, 0, 1, 1, 1], [0], [0]>} : vector<2x8x32xbf16>, vector<2x8x32xbf16>, vector<2x8x8xf32> -> vector<2x8x8xf32>
    "tpu.trace_stop"() : () -> ()
    %cst_26 = arith.constant dense<0xFF800000> : vector<2x8xf32>
    %59 = vector.multi_reduction <maximumf>, %58, %cst_26 [2] : vector<2x8x8xf32> to vector<2x8xf32>
    %60 = vector.shape_cast %59 : vector<2x8xf32> to vector<2x8x1xf32>
    %61 = vector.broadcast %60 : vector<2x8x1xf32> to vector<2x8x8xf32>
    %62 = arith.subf %58, %61 : vector<2x8x8xf32>
    %63 = math.exp %62 : vector<2x8x8xf32>
    %cst_27 = arith.constant dense<0.000000e+00> : vector<2x8xf32>
    %64 = vector.multi_reduction <add>, %63, %cst_27 [2] : vector<2x8x8xf32> to vector<2x8xf32>
    %65 = vector.shape_cast %64 : vector<2x8xf32> to vector<2x8x1xf32>
    %66 = tpu.reciprocal %65 {approx = true} : vector<2x8x1xf32> -> vector<2x8x1xf32>
    %67 = vector.broadcast %66 : vector<2x8x1xf32> to vector<2x8x8xf32>
    %68 = arith.mulf %63, %67 : vector<2x8x8xf32>
    %69 = arith.truncf %68 : vector<2x8x8xf32> to vector<2x8x8xbf16>
    %70 = vector.extract_strided_slice %52 {offsets = [0, 0, 0], sizes = [2, 8, 32], strides = [1, 1, 1]} : vector<2x8x128xbf16> to vector<2x8x32xbf16>
    "tpu.trace_start"() <{level = 10 : i32, message = "blm,bmd->bld"}> : () -> ()
    %cst_28 = arith.constant dense<0.000000e+00> : vector<2x8x32xf32>
    %71 = tpu.matmul %69, %70, %cst_28 {dimension_numbers = #tpu.dot_dimension_numbers<[2], [1], [1], [2], [0, 0, 0, 1, 1, 2], [0], [0]>} : vector<2x8x8xbf16>, vector<2x8x32xbf16>, vector<2x8x32xf32> -> vector<2x8x32xf32>
    "tpu.trace_stop"() : () -> ()
    %72 = vector.shape_cast %71 : vector<2x8x32xf32> to vector<16x32xf32>
    %73 = arith.truncf %72 : vector<16x32xf32> to vector<16x32xbf16>
    %74 = vector.extract_strided_slice %54 {offsets = [0, 0], sizes = [32, 128], strides = [1, 1]} : vector<128x128xbf16> to vector<32x128xbf16>
    %cst_29 = arith.constant dense<0.000000e+00> : vector<16x128xf32>
    %75 = tpu.matmul %73, %74, %cst_29 {dimension_numbers = #tpu.dot_dimension_numbers<[1], [0], [0], [1], [0, 0, 1, 1], [], []>} : vector<16x32xbf16>, vector<32x128xbf16>, vector<16x128xf32> -> vector<16x128xf32>
    %76 = arith.addf %55, %75 : vector<16x128xf32>
    %77 = vector.extract_strided_slice %46 {offsets = [0, 0, 32], sizes = [2, 8, 32], strides = [1, 1, 1]} : vector<2x8x128xbf16> to vector<2x8x32xbf16>
    %78 = vector.extract_strided_slice %49 {offsets = [0, 0, 32], sizes = [2, 8, 32], strides = [1, 1, 1]} : vector<2x8x128xbf16> to vector<2x8x32xbf16>
    "tpu.trace_start"() <{level = 10 : i32, message = "bld,bmd->blm"}> : () -> ()
    %cst_30 = arith.constant dense<0.000000e+00> : vector<2x8x8xf32>
    %79 = tpu.matmul %77, %78, %cst_30 {dimension_numbers = #tpu.dot_dimension_numbers<[2], [2], [1], [1], [0, 0, 0, 1, 1, 1], [0], [0]>} : vector<2x8x32xbf16>, vector<2x8x32xbf16>, vector<2x8x8xf32> -> vector<2x8x8xf32>
    "tpu.trace_stop"() : () -> ()
    %cst_31 = arith.constant dense<0xFF800000> : vector<2x8xf32>
    %80 = vector.multi_reduction <maximumf>, %79, %cst_31 [2] : vector<2x8x8xf32> to vector<2x8xf32>
    %81 = vector.shape_cast %80 : vector<2x8xf32> to vector<2x8x1xf32>
    %82 = vector.broadcast %81 : vector<2x8x1xf32> to vector<2x8x8xf32>
    %83 = arith.subf %79, %82 : vector<2x8x8xf32>
    %84 = math.exp %83 : vector<2x8x8xf32>
    %cst_32 = arith.constant dense<0.000000e+00> : vector<2x8xf32>
    %85 = vector.multi_reduction <add>, %84, %cst_32 [2] : vector<2x8x8xf32> to vector<2x8xf32>
    %86 = vector.shape_cast %85 : vector<2x8xf32> to vector<2x8x1xf32>
    %87 = tpu.reciprocal %86 {approx = true} : vector<2x8x1xf32> -> vector<2x8x1xf32>
    %88 = vector.broadcast %87 : vector<2x8x1xf32> to vector<2x8x8xf32>
    %89 = arith.mulf %84, %88 : vector<2x8x8xf32>
    %90 = arith.truncf %89 : vector<2x8x8xf32> to vector<2x8x8xbf16>
    %91 = vector.extract_strided_slice %52 {offsets = [0, 0, 32], sizes = [2, 8, 32], strides = [1, 1, 1]} : vector<2x8x128xbf16> to vector<2x8x32xbf16>
    "tpu.trace_start"() <{level = 10 : i32, message = "blm,bmd->bld"}> : () -> ()
    %cst_33 = arith.constant dense<0.000000e+00> : vector<2x8x32xf32>
    %92 = tpu.matmul %90, %91, %cst_33 {dimension_numbers = #tpu.dot_dimension_numbers<[2], [1], [1], [2], [0, 0, 0, 1, 1, 2], [0], [0]>} : vector<2x8x8xbf16>, vector<2x8x32xbf16>, vector<2x8x32xf32> -> vector<2x8x32xf32>
    "tpu.trace_stop"() : () -> ()
    %93 = vector.shape_cast %92 : vector<2x8x32xf32> to vector<16x32xf32>
    %94 = arith.truncf %93 : vector<16x32xf32> to vector<16x32xbf16>
    %95 = vector.extract_strided_slice %54 {offsets = [32, 0], sizes = [32, 128], strides = [1, 1]} : vector<128x128xbf16> to vector<32x128xbf16>
    %cst_34 = arith.constant dense<0.000000e+00> : vector<16x128xf32>
    %96 = tpu.matmul %94, %95, %cst_34 {dimension_numbers = #tpu.dot_dimension_numbers<[1], [0], [0], [1], [0, 0, 1, 1], [], []>} : vector<16x32xbf16>, vector<32x128xbf16>, vector<16x128xf32> -> vector<16x128xf32>
    %97 = arith.addf %76, %96 : vector<16x128xf32>
    %98 = vector.extract_strided_slice %46 {offsets = [0, 0, 64], sizes = [2, 8, 32], strides = [1, 1, 1]} : vector<2x8x128xbf16> to vector<2x8x32xbf16>
    %99 = vector.extract_strided_slice %49 {offsets = [0, 0, 64], sizes = [2, 8, 32], strides = [1, 1, 1]} : vector<2x8x128xbf16> to vector<2x8x32xbf16>
    "tpu.trace_start"() <{level = 10 : i32, message = "bld,bmd->blm"}> : () -> ()
    %cst_35 = arith.constant dense<0.000000e+00> : vector<2x8x8xf32>
    %100 = tpu.matmul %98, %99, %cst_35 {dimension_numbers = #tpu.dot_dimension_numbers<[2], [2], [1], [1], [0, 0, 0, 1, 1, 1], [0], [0]>} : vector<2x8x32xbf16>, vector<2x8x32xbf16>, vector<2x8x8xf32> -> vector<2x8x8xf32>
    "tpu.trace_stop"() : () -> ()
    %cst_36 = arith.constant dense<0xFF800000> : vector<2x8xf32>
    %101 = vector.multi_reduction <maximumf>, %100, %cst_36 [2] : vector<2x8x8xf32> to vector<2x8xf32>
    %102 = vector.shape_cast %101 : vector<2x8xf32> to vector<2x8x1xf32>
    %103 = vector.broadcast %102 : vector<2x8x1xf32> to vector<2x8x8xf32>
    %104 = arith.subf %100, %103 : vector<2x8x8xf32>
    %105 = math.exp %104 : vector<2x8x8xf32>
    %cst_37 = arith.constant dense<0.000000e+00> : vector<2x8xf32>
    %106 = vector.multi_reduction <add>, %105, %cst_37 [2] : vector<2x8x8xf32> to vector<2x8xf32>
    %107 = vector.shape_cast %106 : vector<2x8xf32> to vector<2x8x1xf32>
    %108 = tpu.reciprocal %107 {approx = true} : vector<2x8x1xf32> -> vector<2x8x1xf32>
    %109 = vector.broadcast %108 : vector<2x8x1xf32> to vector<2x8x8xf32>
    %110 = arith.mulf %105, %109 : vector<2x8x8xf32>
    %111 = arith.truncf %110 : vector<2x8x8xf32> to vector<2x8x8xbf16>
    %112 = vector.extract_strided_slice %52 {offsets = [0, 0, 64], sizes = [2, 8, 32], strides = [1, 1, 1]} : vector<2x8x128xbf16> to vector<2x8x32xbf16>
    "tpu.trace_start"() <{level = 10 : i32, message = "blm,bmd->bld"}> : () -> ()
    %cst_38 = arith.constant dense<0.000000e+00> : vector<2x8x32xf32>
    %113 = tpu.matmul %111, %112, %cst_38 {dimension_numbers = #tpu.dot_dimension_numbers<[2], [1], [1], [2], [0, 0, 0, 1, 1, 2], [0], [0]>} : vector<2x8x8xbf16>, vector<2x8x32xbf16>, vector<2x8x32xf32> -> vector<2x8x32xf32>
    "tpu.trace_stop"() : () -> ()
    %114 = vector.shape_cast %113 : vector<2x8x32xf32> to vector<16x32xf32>
    %115 = arith.truncf %114 : vector<16x32xf32> to vector<16x32xbf16>
    %116 = vector.extract_strided_slice %54 {offsets = [64, 0], sizes = [32, 128], strides = [1, 1]} : vector<128x128xbf16> to vector<32x128xbf16>
    %cst_39 = arith.constant dense<0.000000e+00> : vector<16x128xf32>
    %117 = tpu.matmul %115, %116, %cst_39 {dimension_numbers = #tpu.dot_dimension_numbers<[1], [0], [0], [1], [0, 0, 1, 1], [], []>} : vector<16x32xbf16>, vector<32x128xbf16>, vector<16x128xf32> -> vector<16x128xf32>
    %118 = arith.addf %97, %117 : vector<16x128xf32>
    %119 = vector.extract_strided_slice %46 {offsets = [0, 0, 96], sizes = [2, 8, 32], strides = [1, 1, 1]} : vector<2x8x128xbf16> to vector<2x8x32xbf16>
    %120 = vector.extract_strided_slice %49 {offsets = [0, 0, 96], sizes = [2, 8, 32], strides = [1, 1, 1]} : vector<2x8x128xbf16> to vector<2x8x32xbf16>
    "tpu.trace_start"() <{level = 10 : i32, message = "bld,bmd->blm"}> : () -> ()
    %cst_40 = arith.constant dense<0.000000e+00> : vector<2x8x8xf32>
    %121 = tpu.matmul %119, %120, %cst_40 {dimension_numbers = #tpu.dot_dimension_numbers<[2], [2], [1], [1], [0, 0, 0, 1, 1, 1], [0], [0]>} : vector<2x8x32xbf16>, vector<2x8x32xbf16>, vector<2x8x8xf32> -> vector<2x8x8xf32>
    "tpu.trace_stop"() : () -> ()
    %cst_41 = arith.constant dense<0xFF800000> : vector<2x8xf32>
    %122 = vector.multi_reduction <maximumf>, %121, %cst_41 [2] : vector<2x8x8xf32> to vector<2x8xf32>
    %123 = vector.shape_cast %122 : vector<2x8xf32> to vector<2x8x1xf32>
    %124 = vector.broadcast %123 : vector<2x8x1xf32> to vector<2x8x8xf32>
    %125 = arith.subf %121, %124 : vector<2x8x8xf32>
    %126 = math.exp %125 : vector<2x8x8xf32>
    %cst_42 = arith.constant dense<0.000000e+00> : vector<2x8xf32>
    %127 = vector.multi_reduction <add>, %126, %cst_42 [2] : vector<2x8x8xf32> to vector<2x8xf32>
    %128 = vector.shape_cast %127 : vector<2x8xf32> to vector<2x8x1xf32>
    %129 = tpu.reciprocal %128 {approx = true} : vector<2x8x1xf32> -> vector<2x8x1xf32>
    %130 = vector.broadcast %129 : vector<2x8x1xf32> to vector<2x8x8xf32>
    %131 = arith.mulf %126, %130 : vector<2x8x8xf32>
    %132 = arith.truncf %131 : vector<2x8x8xf32> to vector<2x8x8xbf16>
    %133 = vector.extract_strided_slice %52 {offsets = [0, 0, 96], sizes = [2, 8, 32], strides = [1, 1, 1]} : vector<2x8x128xbf16> to vector<2x8x32xbf16>
    "tpu.trace_start"() <{level = 10 : i32, message = "blm,bmd->bld"}> : () -> ()
    %cst_43 = arith.constant dense<0.000000e+00> : vector<2x8x32xf32>
    %134 = tpu.matmul %132, %133, %cst_43 {dimension_numbers = #tpu.dot_dimension_numbers<[2], [1], [1], [2], [0, 0, 0, 1, 1, 2], [0], [0]>} : vector<2x8x8xbf16>, vector<2x8x32xbf16>, vector<2x8x32xf32> -> vector<2x8x32xf32>
    "tpu.trace_stop"() : () -> ()
    %135 = vector.shape_cast %134 : vector<2x8x32xf32> to vector<16x32xf32>
    %136 = arith.truncf %135 : vector<16x32xf32> to vector<16x32xbf16>
    %137 = vector.extract_strided_slice %54 {offsets = [96, 0], sizes = [32, 128], strides = [1, 1]} : vector<128x128xbf16> to vector<32x128xbf16>
    %cst_44 = arith.constant dense<0.000000e+00> : vector<16x128xf32>
    %138 = tpu.matmul %136, %137, %cst_44 {dimension_numbers = #tpu.dot_dimension_numbers<[1], [0], [0], [1], [0, 0, 1, 1], [], []>} : vector<16x32xbf16>, vector<32x128xbf16>, vector<16x128xf32> -> vector<16x128xf32>
    %139 = arith.addf %118, %138 : vector<16x128xf32>
    %140 = arith.addf %4, %139 : vector<16x128xf32>
    %c0_45 = arith.constant 0 : index
    %c0_46 = arith.constant 0 : index
    %c0_47 = arith.constant 0 : index
    %141 = vector.load %arg8[%c0_45, %c0_46, %c0_47] : memref<1x1x128xf32, #tpu.memory_space<vmem>>, vector<1x1x128xf32>
    %142 = vector.shape_cast %141 : vector<1x1x128xf32> to vector<128xf32>
    %143 = vector.shape_cast %142 : vector<128xf32> to vector<1x128xf32>
    %144 = vector.broadcast %143 : vector<1x128xf32> to vector<16x128xf32>
    %145 = arith.addf %140, %144 : vector<16x128xf32>
    %c0_48 = arith.constant 0 : index
    %c0_49 = arith.constant 0 : index
    %c0_50 = arith.constant 0 : index
    %146 = vector.load %arg9[%c0_48, %c0_49, %c0_50] : memref<1x1x128xf32, #tpu.memory_space<vmem>>, vector<1x1x128xf32>
    %147 = vector.shape_cast %146 : vector<1x1x128xf32> to vector<128xf32>
    %c0_51 = arith.constant 0 : index
    %c0_52 = arith.constant 0 : index
    %c0_53 = arith.constant 0 : index
    %148 = vector.load %arg10[%c0_51, %c0_52, %c0_53] : memref<1x1x128xf32, #tpu.memory_space<vmem>>, vector<1x1x128xf32>
    %149 = vector.shape_cast %148 : vector<1x1x128xf32> to vector<128xf32>
    %cst_54 = arith.constant dense<0.000000e+00> : vector<16xf32>
    %150 = vector.multi_reduction <add>, %145, %cst_54 [1] : vector<16x128xf32> to vector<16xf32>
    %151 = vector.shape_cast %150 : vector<16xf32> to vector<16x1xf32>
    %cst_55 = arith.constant 1.280000e+02 : f32
    %152 = vector.broadcast %cst_55 : f32 to vector<16x1xf32>
    %153 = arith.divf %151, %152 : vector<16x1xf32>
    %154 = vector.broadcast %153 : vector<16x1xf32> to vector<16x128xf32>
    %155 = arith.subf %145, %154 : vector<16x128xf32>
    %156 = arith.mulf %155, %155 : vector<16x128xf32>
    %cst_56 = arith.constant dense<0.000000e+00> : vector<16xf32>
    %157 = vector.multi_reduction <add>, %156, %cst_56 [1] : vector<16x128xf32> to vector<16xf32>
    %158 = vector.shape_cast %157 : vector<16xf32> to vector<16x1xf32>
    %cst_57 = arith.constant 1.280000e+02 : f32
    %159 = vector.broadcast %cst_57 : f32 to vector<16x1xf32>
    %160 = arith.divf %158, %159 : vector<16x1xf32>
    %161 = vector.broadcast %153 : vector<16x1xf32> to vector<16x128xf32>
    %162 = arith.subf %145, %161 : vector<16x128xf32>
    %cst_58 = arith.constant 9.99999974E-6 : f32
    %163 = vector.broadcast %cst_58 : f32 to vector<16x1xf32>
    %164 = arith.addf %160, %163 : vector<16x1xf32>
    %165 = math.rsqrt %164 : vector<16x1xf32>
    %166 = vector.broadcast %165 : vector<16x1xf32> to vector<16x128xf32>
    %167 = arith.mulf %162, %166 : vector<16x128xf32>
    %168 = vector.shape_cast %147 : vector<128xf32> to vector<1x128xf32>
    %169 = vector.broadcast %168 : vector<1x128xf32> to vector<16x128xf32>
    %170 = arith.mulf %167, %169 : vector<16x128xf32>
    %171 = vector.shape_cast %149 : vector<128xf32> to vector<1x128xf32>
    %172 = vector.broadcast %171 : vector<1x128xf32> to vector<16x128xf32>
    %173 = arith.addf %170, %172 : vector<16x128xf32>
    %174 = arith.truncf %173 : vector<16x128xf32> to vector<16x128xbf16>
    %c0_59 = arith.constant 0 : index
    %c0_60 = arith.constant 0 : index
    %c0_61 = arith.constant 0 : index
    %175 = vector.load %arg11[%c0_59, %c0_60, %c0_61] : memref<1x128x512xbf16, #tpu.memory_space<vmem>>, vector<1x128x512xbf16>
    %176 = vector.shape_cast %175 : vector<1x128x512xbf16> to vector<128x512xbf16>
    %cst_62 = arith.constant dense<0.000000e+00> : vector<16x512xf32>
    %177 = tpu.matmul %174, %176, %cst_62 {dimension_numbers = #tpu.dot_dimension_numbers<[1], [0], [0], [1], [0, 0, 1, 1], [], []>} : vector<16x128xbf16>, vector<128x512xbf16>, vector<16x512xf32> -> vector<16x512xf32>
    %c0_63 = arith.constant 0 : index
    %c0_64 = arith.constant 0 : index
    %c0_65 = arith.constant 0 : index
    %178 = vector.load %arg12[%c0_63, %c0_64, %c0_65] : memref<1x1x512xf32, #tpu.memory_space<vmem>>, vector<1x1x512xf32>
    %179 = vector.shape_cast %178 : vector<1x1x512xf32> to vector<512xf32>
    %180 = vector.shape_cast %179 : vector<512xf32> to vector<1x512xf32>
    %181 = vector.broadcast %180 : vector<1x512xf32> to vector<16x512xf32>
    %182 = arith.addf %177, %181 : vector<16x512xf32>
    %cst_66 = arith.constant 1.702000e+00 : f32
    %183 = vector.broadcast %cst_66 : f32 to vector<16x512xf32>
    %184 = arith.mulf %183, %182 : vector<16x512xf32>
    %185 = arith.negf %184 : vector<16x512xf32>
    %186 = math.exp %185 : vector<16x512xf32>
    %cst_67 = arith.constant 1.000000e+00 : f32
    %187 = vector.broadcast %cst_67 : f32 to vector<16x512xf32>
    %188 = arith.addf %187, %186 : vector<16x512xf32>
    %189 = arith.divf %187, %188 : vector<16x512xf32>
    %190 = arith.mulf %182, %189 : vector<16x512xf32>
    %191 = arith.truncf %190 : vector<16x512xf32> to vector<16x512xbf16>
    %c0_68 = arith.constant 0 : index
    %c0_69 = arith.constant 0 : index
    %c0_70 = arith.constant 0 : index
    %192 = vector.load %arg13[%c0_68, %c0_69, %c0_70] : memref<1x512x128xbf16, #tpu.memory_space<vmem>>, vector<1x512x128xbf16>
    %193 = vector.shape_cast %192 : vector<1x512x128xbf16> to vector<512x128xbf16>
    %cst_71 = arith.constant dense<0.000000e+00> : vector<16x128xf32>
    %194 = tpu.matmul %191, %193, %cst_71 {dimension_numbers = #tpu.dot_dimension_numbers<[1], [0], [0], [1], [0, 0, 1, 1], [], []>} : vector<16x512xbf16>, vector<512x128xbf16>, vector<16x128xf32> -> vector<16x128xf32>
    %c0_72 = arith.constant 0 : index
    %c0_73 = arith.constant 0 : index
    %c0_74 = arith.constant 0 : index
    %195 = vector.load %arg14[%c0_72, %c0_73, %c0_74] : memref<1x1x128xf32, #tpu.memory_space<vmem>>, vector<1x1x128xf32>
    %196 = vector.shape_cast %195 : vector<1x1x128xf32> to vector<128xf32>
    %197 = vector.shape_cast %196 : vector<128xf32> to vector<1x128xf32>
    %198 = vector.broadcast %197 : vector<1x128xf32> to vector<16x128xf32>
    %199 = arith.addf %194, %198 : vector<16x128xf32>
    %200 = arith.addf %145, %199 : vector<16x128xf32>
    %201 = vector.shape_cast %200 : vector<16x128xf32> to vector<2x8x128xf32>
    %c0_75 = arith.constant 0 : index
    %c0_76 = arith.constant 0 : index
    %c0_77 = arith.constant 0 : index
    %202 = vector.load %arg15[%c0_75, %c0_76, %c0_77] : memref<2x8x128xf32, #tpu.memory_space<vmem>>, vector<2x8x128xf32>
    tpu.vector_store %arg15[%c0_75, %c0_76, %c0_77], %201 {strides = array<i32>} : memref<2x8x128xf32, #tpu.memory_space<vmem>>, vector<2x8x128xf32>,
    return
  }
  func.func @transform_0(%arg0: i32, %arg1: i32) -> (i32, i32, i32) {
    %c0_i32 = arith.constant 0 : i32
    %c0_i32_0 = arith.constant 0 : i32
    %c0_i32_1 = arith.constant 0 : i32
    return %arg0, %c0_i32, %c0_i32_0 : i32, i32, i32
  }
  func.func @transform_1(%arg0: i32, %arg1: i32) -> (i32, i32, i32) {
    %c0_i32 = arith.constant 0 : i32
    %c0_i32_0 = arith.constant 0 : i32
    %c0_i32_1 = arith.constant 0 : i32
    return %arg1, %c0_i32, %c0_i32_0 : i32, i32, i32
  }
  func.func @transform_2(%arg0: i32, %arg1: i32) -> (i32, i32, i32) {
    %c0_i32 = arith.constant 0 : i32
    %c0_i32_0 = arith.constant 0 : i32
    %c0_i32_1 = arith.constant 0 : i32
    return %arg1, %c0_i32, %c0_i32_0 : i32, i32, i32
  }
  func.func @transform_3(%arg0: i32, %arg1: i32) -> (i32, i32, i32) {
    %c0_i32 = arith.constant 0 : i32
    %c0_i32_0 = arith.constant 0 : i32
    %c0_i32_1 = arith.constant 0 : i32
    return %arg1, %c0_i32, %c0_i32_0 : i32, i32, i32
  }
  func.func @transform_4(%arg0: i32, %arg1: i32) -> (i32, i32, i32) {
    %c0_i32 = arith.constant 0 : i32
    %c0_i32_0 = arith.constant 0 : i32
    %c0_i32_1 = arith.constant 0 : i32
    return %arg1, %c0_i32, %c0_i32_0 : i32, i32, i32
  }
  func.func @transform_5(%arg0: i32, %arg1: i32) -> (i32, i32, i32) {
    %c0_i32 = arith.constant 0 : i32
    %c0_i32_0 = arith.constant 0 : i32
    %c0_i32_1 = arith.constant 0 : i32
    return %arg1, %c0_i32, %c0_i32_0 : i32, i32, i32
  }
  func.func @transform_6(%arg0: i32, %arg1: i32) -> (i32, i32, i32) {
    %c0_i32 = arith.constant 0 : i32
    %c0_i32_0 = arith.constant 0 : i32
    %c0_i32_1 = arith.constant 0 : i32
    return %arg1, %c0_i32, %c0_i32_0 : i32, i32, i32
  }
  func.func @transform_7(%arg0: i32, %arg1: i32) -> (i32, i32, i32) {
    %c0_i32 = arith.constant 0 : i32
    %c0_i32_0 = arith.constant 0 : i32
    %c0_i32_1 = arith.constant 0 : i32
    return %arg1, %c0_i32, %c0_i32_0 : i32, i32, i32
  }
  func.func @transform_8(%arg0: i32, %arg1: i32) -> (i32, i32, i32) {
    %c0_i32 = arith.constant 0 : i32
    %c0_i32_0 = arith.constant 0 : i32
    %c0_i32_1 = arith.constant 0 : i32
    return %arg1, %c0_i32, %c0_i32_0 : i32, i32, i32
  }
  func.func @transform_9(%arg0: i32, %arg1: i32) -> (i32, i32, i32) {
    %c0_i32 = arith.constant 0 : i32
    %c0_i32_0 = arith.constant 0 : i32
    %c0_i32_1 = arith.constant 0 : i32
    return %arg1, %c0_i32, %c0_i32_0 : i32, i32, i32
  }
  func.func @transform_10(%arg0: i32, %arg1: i32) -> (i32, i32, i32) {
    %c0_i32 = arith.constant 0 : i32
    %c0_i32_0 = arith.constant 0 : i32
    %c0_i32_1 = arith.constant 0 : i32
    return %arg1, %c0_i32, %c0_i32_0 : i32, i32, i32
  }
  func.func @transform_11(%arg0: i32, %arg1: i32) -> (i32, i32, i32) {
    %c0_i32 = arith.constant 0 : i32
    %c0_i32_0 = arith.constant 0 : i32
    %c0_i32_1 = arith.constant 0 : i32
    return %arg1, %c0_i32, %c0_i32_0 : i32, i32, i32
  }
  func.func @transform_12(%arg0: i32, %arg1: i32) -> (i32, i32, i32) {
    %c0_i32 = arith.constant 0 : i32
    %c0_i32_0 = arith.constant 0 : i32
    %c0_i32_1 = arith.constant 0 : i32
    return %arg1, %c0_i32, %c0_i32_0 : i32, i32, i32
  }
  func.func @transform_13(%arg0: i32, %arg1: i32) -> (i32, i32, i32) {
    %c0_i32 = arith.constant 0 : i32
    %c0_i32_0 = arith.constant 0 : i32
    %c0_i32_1 = arith.constant 0 : i32
    return %arg0, %c0_i32, %c0_i32_0 : i32, i32, i32
  }
}

</mosaic_0001>

<llo_original>
// kernel: tpu_custom_call.1
$region0: #{tpu_custom_call.1}
  #allocation0 [shape = 'u32[]', space=smem, size = 0x4, offset = 0x4, fixed_abs, tag = 'smem constant byte address 0x4 - core index']
  #allocation1 [shape = 'u32[144,128]{1,0:T(1,128)}', space=vmem, size = 0x12000, scoped, tag = 'internal scratch']
  %s0 = inlined_call_operand.hbm [shape: f32[4,8,128], index: 0, kind: input, shape index: {}]
  %s1 = inlined_call_operand.hbm [shape: f32[2,1,128], index: 1, kind: input, shape index: {}]
  %s2 = inlined_call_operand.hbm [shape: f32[2,1,128], index: 2, kind: input, shape index: {}]
  %s3 = inlined_call_operand.hbm [shape: bf16[2,128,384], index: 3, kind: input, shape index: {}]
  %s4 = inlined_call_operand.vmem [shape: f32[2,1,384], index: 4, kind: input, shape index: {}]
  %s5 = inlined_call_operand.hbm [shape: bf16[2,128,128], index: 5, kind: input, shape index: {}]
  %s6 = inlined_call_operand.vmem [shape: f32[2,1,128], index: 6, kind: input, shape index: {}]
  %s7 = inlined_call_operand.hbm [shape: f32[2,1,128], index: 7, kind: input, shape index: {}]
  %s8 = inlined_call_operand.hbm [shape: f32[2,1,128], index: 8, kind: input, shape index: {}]
  %s9 = inlined_call_operand.hbm [shape: bf16[2,128,512], index: 9, kind: input, shape index: {}]
  %s10 = inlined_call_operand.vmem [shape: f32[2,1,512], index: 10, kind: input, shape index: {}]
  %s11 = inlined_call_operand.hbm [shape: bf16[2,512,128], index: 11, kind: input, shape index: {}]
  %s12 = inlined_call_operand.vmem [shape: f32[2,1,128], index: 12, kind: input, shape index: {}]
  %s13 = inlined_call_operand.hbm [shape: f32[4,8,128], index: 13, kind: output, shape index: {}]
  %s14 = sld [smem:[#allocation0]]
  $region125: #{tpu_custom_call.1} parent=0
    _
  %s16 = ssub.s32 1, %s14
  %s17 = scalar_select 0, %s16, %s14
  $region1: #{tpu_custom_call.1} parent=0
    #allocation2 [shape = 'u8[16384]{0}', space=vmem, size = 0x4000, scoped, tag = 'input window, operand 0']
    #allocation3 [shape = 's32[2]{0}', space=sflag, size = 0x8, scoped, tag = 'scoped memory for tpu_custom_call.1']
    #allocation4 [shape = 's32[2]{0}', space=sflag, size = 0x8, scoped, tag = 'scoped memory for tpu_custom_call.1']
    #allocation5 [shape = 'u8[1024]{0}', space=vmem, size = 0x400, scoped, tag = 'input window, operand 1']
    #allocation6 [shape = 's32[2]{0}', space=sflag, size = 0x8, scoped, tag = 'scoped memory for tpu_custom_call.1']
    #allocation7 [shape = 'u8[1024]{0}', space=vmem, size = 0x400, scoped, tag = 'input window, operand 2']
    #allocation8 [shape = 'u8[196608]{0}', space=vmem, size = 0x30000, scoped, tag = 'input window, operand 3']
    #allocation9 [shape = 's32[2]{0}', space=sflag, size = 0x8, scoped, tag = 'scoped memory for tpu_custom_call.1']
    #allocation10 [shape = 'u8[65536]{0}', space=vmem, size = 0x10000, scoped, tag = 'input window, operand 5']
    #allocation11 [shape = 'u8[1024]{0}', space=vmem, size = 0x400, scoped, tag = 'input window, operand 7']
    #allocation12 [shape = 's32[2]{0}', space=sflag, size = 0x8, scoped, tag = 'scoped memory for tpu_custom_call.1']
    #allocation13 [shape = 'u8[1024]{0}', space=vmem, size = 0x400, scoped, tag = 'input window, operand 8']
    #allocation14 [shape = 'u8[262144]{0}', space=vmem, size = 0x40000, scoped, tag = 'input window, operand 9']
    #allocation15 [shape = 's32[2]{0}', space=sflag, size = 0x8, scoped, tag = 'scoped memory for tpu_custom_call.1']
    #allocation16 [shape = 'u8[262144]{0}', space=vmem, size = 0x40000, scoped, tag = 'input window, operand 11']
    #allocation17 [shape = 'u8[16384]{0}', space=vmem, size = 0x4000, scoped, tag = 'output window, operand 0']
    %18 = vsyncpa [#allocation3], 0
    %s19 = scalar_lea.sflag [#allocation3], 1
    %20 = vsyncpa %s19, 0
    %21 = vsyncpa [#allocation6], 0
    %s22 = scalar_lea.sflag [#allocation6], 1
    %23 = vsyncpa %s22, 0
    %24 = vsyncpa [#allocation9], 0
    %s25 = scalar_lea.sflag [#allocation9], 1
    %26 = vsyncpa %s25, 0
    %27 = vsyncpa [#allocation12], 0
    %s28 = scalar_lea.sflag [#allocation12], 1
    %29 = vsyncpa %s28, 0
    %30 = vsyncpa [#allocation15], 0
    %s31 = scalar_lea.sflag [#allocation15], 1
    %32 = vsyncpa %s31, 0
    %33 = vsyncpa [#allocation4], 0
    %s34 = scalar_lea.sflag [#allocation4], 1
    %35 = vsyncpa %s34, 0
    loop: start=0, step=1, limit=6
    $region2: #{tpu_custom_call.1} parent=1 // loop_pre_header
      _
    $region3: #{tpu_custom_call.1} parent=1 // loop_header
      %s37 = sphi 0, %s41
      %p38 = scmp.ge.s32.totalorder %s37, 6
      %s44 = sphi 0, %s56
      %s45 = sphi 0, %s52
      %s46 = sphi 0, %s44
      %s47 = sphi 0, %s45
      %s48 = sphi 0, %s46
      %s49 = sphi 0, %s47
      %s59 = sphi 0, %s61
      %s62 = sphi 0, %s59
      %s63 = sphi 0, %s62
      %s79 = sphi 0, %s63
      %s85 = sphi 0, %s87
      %s88 = sphi 0, %s85
      %s89 = sphi 0, %s88
      %s105 = sphi 0, %s89
      %s111 = sphi 0, %s113
      %s114 = sphi 0, %s111
      %s115 = sphi 0, %s114
      %s131 = sphi 0, %s115
      %s137 = sphi 0, %s139
      %s140 = sphi 0, %s137
      %s141 = sphi 0, %s140
      %s157 = sphi 0, %s141
      %s163 = sphi 0, %s165
      %s166 = sphi 0, %s163
      %s167 = sphi 0, %s166
      %s183 = sphi 0, %s167
      %s189 = sphi 0, %s191
      %s192 = sphi 0, %s189
      %s193 = sphi 0, %s192
      %s209 = sphi 0, %s193
      %s215 = sphi 0, %s217
      %s218 = sphi 0, %s215
      %s219 = sphi 0, %s218
      %s235 = sphi 0, %s219
      %s241 = sphi 0, %s243
      %s244 = sphi 0, %s241
      %s245 = sphi 0, %s244
      %s261 = sphi 0, %s245
      %s267 = sphi 0, %s269
      %s270 = sphi 0, %s267
      %s271 = sphi 0, %s270
      %s287 = sphi 0, %s271
      %s293 = sphi 0, %s295
      %s296 = sphi 0, %s293
      %s297 = sphi 0, %s296
      %s313 = sphi 0, %s297
      %s319 = sphi 0, %s321
      %s322 = sphi 0, %s319
      %s323 = sphi 0, %s322
      %s339 = sphi 0, %s323
      %s345 = sphi 0, %s347
      %s348 = sphi 0, %s345
      %s349 = sphi 0, %s348
      %s365 = sphi 0, %s349
      %s371 = sphi 0, %s373
      %s374 = sphi 0, %s371
      %s375 = sphi 0, %s374
      %s391 = sphi 0, %s375
      %s397 = sphi 0, %s399
      %s400 = sphi 0, %s397
      %s401 = sphi 0, %s400
      %s417 = sphi 0, %s401
    $region4: #{tpu_custom_call.1} parent=1 // loop_header_branch
      %40 = sbr.rel (%p38) target = $region8
    $region5: #{tpu_custom_call.1} parent=1 // loop_body
      %s42 = ssub.s32 %s37, 1
      %s43 = ssub.s32 %s37, 2
      %s50 = sadd.s32 1, %s45
      %p51 = scmp.ge.s32.totalorder %s50, 2
      %s52 = scalar_select %p51, 0, %s50
      %s53 = sadd.s32 1, %s44
      %s54 = scalar_select %p51, %s53, %s44
      %p55 = scmp.ge.s32.totalorder %s54, 2
      %s56 = scalar_select %p55, 0, %s54
      %s57 = ssub.s32 %s44, %s56
      %p58 = scmp.eq.s32.totalorder %s57, 0
      %s60 = sadd.s32 %s59, 1
      %s61 = scalar_select %p58, %s59, %s60
      %p64 = pneg %p58
      %p65 = scmp.eq.s32.totalorder %s37, 3
      %p66 = por %p64, %p65
      %p67 = scmp.ne.s32.totalorder %s59, %s62
      %p68 = scmp.eq.s32.totalorder %s37, 0
      %p69 = por %p67, %p68
      %p70 = scmp.ne.s32.totalorder %s59, %s62
      %p71 = scmp.eq.s32.totalorder %s42, 3
      %p72 = por %p70, %p71
      %p73 = scmp.ne.s32.totalorder %s62, %s63
      %p74 = scmp.eq.s32.totalorder %s42, 0
      %p75 = por %p73, %p74
      %p76 = scmp.ne.s32.totalorder %s62, %s63
      %p77 = scmp.eq.s32.totalorder %s43, 3
      %p78 = por %p76, %p77
      %p80 = scmp.ne.s32.totalorder %s63, %s79
      %p81 = scmp.eq.s32.totalorder %s43, 0
      %p82 = por %p80, %p81
      %s83 = ssub.s32 %s45, %s52
      %p84 = scmp.eq.s32.totalorder %s83, 0
      %s86 = sadd.s32 %s85, 1
      %s87 = scalar_select %p84, %s85, %s86
      %p90 = pneg %p84
      %p91 = scmp.eq.s32.totalorder %s37, 3
      %p92 = por %p90, %p91
      %p93 = scmp.ne.s32.totalorder %s85, %s88
      %p94 = scmp.eq.s32.totalorder %s37, 0
      %p95 = por %p93, %p94
      %p96 = scmp.ne.s32.totalorder %s85, %s88
      %p97 = scmp.eq.s32.totalorder %s42, 3
      %p98 = por %p96, %p97
      %p99 = scmp.ne.s32.totalorder %s88, %s89
      %p100 = scmp.eq.s32.totalorder %s42, 0
      %p101 = por %p99, %p100
      %p102 = scmp.ne.s32.totalorder %s88, %s89
      %p103 = scmp.eq.s32.totalorder %s43, 3
      %p104 = por %p102, %p103
      %p106 = scmp.ne.s32.totalorder %s89, %s105
      %p107 = scmp.eq.s32.totalorder %s43, 0
      %p108 = por %p106, %p107
      %s109 = ssub.s32 %s45, %s52
      %p110 = scmp.eq.s32.totalorder %s109, 0
      %s112 = sadd.s32 %s111, 1
      %s113 = scalar_select %p110, %s111, %s112
      %p116 = pneg %p110
      %p117 = scmp.eq.s32.totalorder %s37, 3
      %p118 = por %p116, %p117
      %p119 = scmp.ne.s32.totalorder %s111, %s114
      %p120 = scmp.eq.s32.totalorder %s37, 0
      %p121 = por %p119, %p120
      %p122 = scmp.ne.s32.totalorder %s111, %s114
      %p123 = scmp.eq.s32.totalorder %s42, 3
      %p124 = por %p122, %p123
      %p125 = scmp.ne.s32.totalorder %s114, %s115
      %p126 = scmp.eq.s32.totalorder %s42, 0
      %p127 = por %p125, %p126
      %p128 = scmp.ne.s32.totalorder %s114, %s115
      %p129 = scmp.eq.s32.totalorder %s43, 3
      %p130 = por %p128, %p129
      %p132 = scmp.ne.s32.totalorder %s115, %s131
      %p133 = scmp.eq.s32.totalorder %s43, 0
      %p134 = por %p132, %p133
      %s135 = ssub.s32 %s45, %s52
      %p136 = scmp.eq.s32.totalorder %s135, 0
      %s138 = sadd.s32 %s137, 1
      %s139 = scalar_select %p136, %s137, %s138
      %p142 = pneg %p136
      %p143 = scmp.eq.s32.totalorder %s37, 3
      %p144 = por %p142, %p143
      %p145 = scmp.ne.s32.totalorder %s137, %s140
      %p146 = scmp.eq.s32.totalorder %s37, 0
      %p147 = por %p145, %p146
      %p148 = scmp.ne.s32.totalorder %s137, %s140
      %p149 = scmp.eq.s32.totalorder %s42, 3
      %p150 = por %p148, %p149
      %p151 = scmp.ne.s32.totalorder %s140, %s141
      %p152 = scmp.eq.s32.totalorder %s42, 0
      %p153 = por %p151, %p152
      %p154 = scmp.ne.s32.totalorder %s140, %s141
      %p155 = scmp.eq.s32.totalorder %s43, 3
      %p156 = por %p154, %p155
      %p158 = scmp.ne.s32.totalorder %s141, %s157
      %p159 = scmp.eq.s32.totalorder %s43, 0
      %p160 = por %p158, %p159
      %s161 = ssub.s32 %s45, %s52
      %p162 = scmp.eq.s32.totalorder %s161, 0
      %s164 = sadd.s32 %s163, 1
      %s165 = scalar_select %p162, %s163, %s164
      %p168 = pneg %p162
      %p169 = scmp.eq.s32.totalorder %s37, 3
      %p170 = por %p168, %p169
      %p171 = scmp.ne.s32.totalorder %s163, %s166
      %p172 = scmp.eq.s32.totalorder %s37, 0
      %p173 = por %p171, %p172
      %p174 = scmp.ne.s32.totalorder %s163, %s166
      %p175 = scmp.eq.s32.totalorder %s42, 3
      %p176 = por %p174, %p175
      %p177 = scmp.ne.s32.totalorder %s166, %s167
      %p178 = scmp.eq.s32.totalorder %s42, 0
      %p179 = por %p177, %p178
      %p180 = scmp.ne.s32.totalorder %s166, %s167
      %p181 = scmp.eq.s32.totalorder %s43, 3
      %p182 = por %p180, %p181
      %p184 = scmp.ne.s32.totalorder %s167, %s183
      %p185 = scmp.eq.s32.totalorder %s43, 0
      %p186 = por %p184, %p185
      %s187 = ssub.s32 %s45, %s52
      %p188 = scmp.eq.s32.totalorder %s187, 0
      %s190 = sadd.s32 %s189, 1
      %s191 = scalar_select %p188, %s189, %s190
      %p194 = pneg %p188
      %p195 = scmp.eq.s32.totalorder %s37, 3
      %p196 = por %p194, %p195
      %p197 = scmp.ne.s32.totalorder %s189, %s192
      %p198 = scmp.eq.s32.totalorder %s37, 0
      %p199 = por %p197, %p198
      %p200 = scmp.ne.s32.totalorder %s189, %s192
      %p201 = scmp.eq.s32.totalorder %s42, 3
      %p202 = por %p200, %p201
      %p203 = scmp.ne.s32.totalorder %s192, %s193
      %p204 = scmp.eq.s32.totalorder %s42, 0
      %p205 = por %p203, %p204
      %p206 = scmp.ne.s32.totalorder %s192, %s193
      %p207 = scmp.eq.s32.totalorder %s43, 3
      %p208 = por %p206, %p207
      %p210 = scmp.ne.s32.totalorder %s193, %s209
      %p211 = scmp.eq.s32.totalorder %s43, 0
      %p212 = por %p210, %p211
      %s213 = ssub.s32 %s45, %s52
      %p214 = scmp.eq.s32.totalorder %s213, 0
      %s216 = sadd.s32 %s215, 1
      %s217 = scalar_select %p214, %s215, %s216
      %p220 = pneg %p214
      %p221 = scmp.eq.s32.totalorder %s37, 3
      %p222 = por %p220, %p221
      %p223 = scmp.ne.s32.totalorder %s215, %s218
      %p224 = scmp.eq.s32.totalorder %s37, 0
      %p225 = por %p223, %p224
      %p226 = scmp.ne.s32.totalorder %s215, %s218
      %p227 = scmp.eq.s32.totalorder %s42, 3
      %p228 = por %p226, %p227
      %p229 = scmp.ne.s32.totalorder %s218, %s219
      %p230 = scmp.eq.s32.totalorder %s42, 0
      %p231 = por %p229, %p230
      %p232 = scmp.ne.s32.totalorder %s218, %s219
      %p233 = scmp.eq.s32.totalorder %s43, 3
      %p234 = por %p232, %p233
      %p236 = scmp.ne.s32.totalorder %s219, %s235
      %p237 = scmp.eq.s32.totalorder %s43, 0
      %p238 = por %p236, %p237
      %s239 = ssub.s32 %s45, %s52
      %p240 = scmp.eq.s32.totalorder %s239, 0
      %s242 = sadd.s32 %s241, 1
      %s243 = scalar_select %p240, %s241, %s242
      %p246 = pneg %p240
      %p247 = scmp.eq.s32.totalorder %s37, 3
      %p248 = por %p246, %p247
      %p249 = scmp.ne.s32.totalorder %s241, %s244
      %p250 = scmp.eq.s32.totalorder %s37, 0
      %p251 = por %p249, %p250
      %p252 = scmp.ne.s32.totalorder %s241, %s244
      %p253 = scmp.eq.s32.totalorder %s42, 3
      %p254 = por %p252, %p253
      %p255 = scmp.ne.s32.totalorder %s244, %s245
      %p256 = scmp.eq.s32.totalorder %s42, 0
      %p257 = por %p255, %p256
      %p258 = scmp.ne.s32.totalorder %s244, %s245
      %p259 = scmp.eq.s32.totalorder %s43, 3
      %p260 = por %p258, %p259
      %p262 = scmp.ne.s32.totalorder %s245, %s261
      %p263 = scmp.eq.s32.totalorder %s43, 0
      %p264 = por %p262, %p263
      %s265 = ssub.s32 %s45, %s52
      %p266 = scmp.eq.s32.totalorder %s265, 0
      %s268 = sadd.s32 %s267, 1
      %s269 = scalar_select %p266, %s267, %s268
      %p272 = pneg %p266
      %p273 = scmp.eq.s32.totalorder %s37, 3
      %p274 = por %p272, %p273
      %p275 = scmp.ne.s32.totalorder %s267, %s270
      %p276 = scmp.eq.s32.totalorder %s37, 0
      %p277 = por %p275, %p276
      %p278 = scmp.ne.s32.totalorder %s267, %s270
      %p279 = scmp.eq.s32.totalorder %s42, 3
      %p280 = por %p278, %p279
      %p281 = scmp.ne.s32.totalorder %s270, %s271
      %p282 = scmp.eq.s32.totalorder %s42, 0
      %p283 = por %p281, %p282
      %p284 = scmp.ne.s32.totalorder %s270, %s271
      %p285 = scmp.eq.s32.totalorder %s43, 3
      %p286 = por %p284, %p285
      %p288 = scmp.ne.s32.totalorder %s271, %s287
      %p289 = scmp.eq.s32.totalorder %s43, 0
      %p290 = por %p288, %p289
      %s291 = ssub.s32 %s45, %s52
      %p292 = scmp.eq.s32.totalorder %s291, 0
      %s294 = sadd.s32 %s293, 1
      %s295 = scalar_select %p292, %s293, %s294
      %p298 = pneg %p292
      %p299 = scmp.eq.s32.totalorder %s37, 3
      %p300 = por %p298, %p299
      %p301 = scmp.ne.s32.totalorder %s293, %s296
      %p302 = scmp.eq.s32.totalorder %s37, 0
      %p303 = por %p301, %p302
      %p304 = scmp.ne.s32.totalorder %s293, %s296
      %p305 = scmp.eq.s32.totalorder %s42, 3
      %p306 = por %p304, %p305
      %p307 = scmp.ne.s32.totalorder %s296, %s297
      %p308 = scmp.eq.s32.totalorder %s42, 0
      %p309 = por %p307, %p308
      %p310 = scmp.ne.s32.totalorder %s296, %s297
      %p311 = scmp.eq.s32.totalorder %s43, 3
      %p312 = por %p310, %p311
      %p314 = scmp.ne.s32.totalorder %s297, %s313
      %p315 = scmp.eq.s32.totalorder %s43, 0
      %p316 = por %p314, %p315
      %s317 = ssub.s32 %s45, %s52
      %p318 = scmp.eq.s32.totalorder %s317, 0
      %s320 = sadd.s32 %s319, 1
      %s321 = scalar_select %p318, %s319, %s320
      %p324 = pneg %p318
      %p325 = scmp.eq.s32.totalorder %s37, 3
      %p326 = por %p324, %p325
      %p327 = scmp.ne.s32.totalorder %s319, %s322
      %p328 = scmp.eq.s32.totalorder %s37, 0
      %p329 = por %p327, %p328
      %p330 = scmp.ne.s32.totalorder %s319, %s322
      %p331 = scmp.eq.s32.totalorder %s42, 3
      %p332 = por %p330, %p331
      %p333 = scmp.ne.s32.totalorder %s322, %s323
      %p334 = scmp.eq.s32.totalorder %s42, 0
      %p335 = por %p333, %p334
      %p336 = scmp.ne.s32.totalorder %s322, %s323
      %p337 = scmp.eq.s32.totalorder %s43, 3
      %p338 = por %p336, %p337
      %p340 = scmp.ne.s32.totalorder %s323, %s339
      %p341 = scmp.eq.s32.totalorder %s43, 0
      %p342 = por %p340, %p341
      %s343 = ssub.s32 %s45, %s52
      %p344 = scmp.eq.s32.totalorder %s343, 0
      %s346 = sadd.s32 %s345, 1
      %s347 = scalar_select %p344, %s345, %s346
      %p350 = pneg %p344
      %p351 = scmp.eq.s32.totalorder %s37, 3
      %p352 = por %p350, %p351
      %p353 = scmp.ne.s32.totalorder %s345, %s348
      %p354 = scmp.eq.s32.totalorder %s37, 0
      %p355 = por %p353, %p354
      %p356 = scmp.ne.s32.totalorder %s345, %s348
      %p357 = scmp.eq.s32.totalorder %s42, 3
      %p358 = por %p356, %p357
      %p359 = scmp.ne.s32.totalorder %s348, %s349
      %p360 = scmp.eq.s32.totalorder %s42, 0
      %p361 = por %p359, %p360
      %p362 = scmp.ne.s32.totalorder %s348, %s349
      %p363 = scmp.eq.s32.totalorder %s43, 3
      %p364 = por %p362, %p363
      %p366 = scmp.ne.s32.totalorder %s349, %s365
      %p367 = scmp.eq.s32.totalorder %s43, 0
      %p368 = por %p366, %p367
      %s369 = ssub.s32 %s45, %s52
      %p370 = scmp.eq.s32.totalorder %s369, 0
      %s372 = sadd.s32 %s371, 1
      %s373 = scalar_select %p370, %s371, %s372
      %p376 = pneg %p370
      %p377 = scmp.eq.s32.totalorder %s37, 3
      %p378 = por %p376, %p377
      %p379 = scmp.ne.s32.totalorder %s371, %s374
      %p380 = scmp.eq.s32.totalorder %s37, 0
      %p381 = por %p379, %p380
      %p382 = scmp.ne.s32.totalorder %s371, %s374
      %p383 = scmp.eq.s32.totalorder %s42, 3
      %p384 = por %p382, %p383
      %p385 = scmp.ne.s32.totalorder %s374, %s375
      %p386 = scmp.eq.s32.totalorder %s42, 0
      %p387 = por %p385, %p386
      %p388 = scmp.ne.s32.totalorder %s374, %s375
      %p389 = scmp.eq.s32.totalorder %s43, 3
      %p390 = por %p388, %p389
      %p392 = scmp.ne.s32.totalorder %s375, %s391
      %p393 = scmp.eq.s32.totalorder %s43, 0
      %p394 = por %p392, %p393
      %s395 = ssub.s32 %s44, %s56
      %p396 = scmp.eq.s32.totalorder %s395, 0
      %s398 = sadd.s32 %s397, 1
      %s399 = scalar_select %p396, %s397, %s398
      %p402 = pneg %p396
      %p403 = scmp.eq.s32.totalorder %s37, 3
      %p404 = por %p402, %p403
      %p405 = scmp.ne.s32.totalorder %s397, %s400
      %p406 = scmp.eq.s32.totalorder %s37, 0
      %p407 = por %p405, %p406
      %p408 = scmp.ne.s32.totalorder %s397, %s400
      %p409 = scmp.eq.s32.totalorder %s42, 3
      %p410 = por %p408, %p409
      %p411 = scmp.ne.s32.totalorder %s400, %s401
      %p412 = scmp.eq.s32.totalorder %s42, 0
      %p413 = por %p411, %p412
      %p414 = scmp.ne.s32.totalorder %s400, %s401
      %p415 = scmp.eq.s32.totalorder %s43, 3
      %p416 = por %p414, %p415
      %p418 = scmp.ne.s32.totalorder %s401, %s417
      %p419 = scmp.eq.s32.totalorder %s43, 0
      %p420 = por %p418, %p419
      %p421 = scmp.le.s32.totalorder 1, %s37
      %p422 = scmp.lt.s32.totalorder %s37, 5
      %p423 = pnand %p421, %p422
      %p424 = pneg %p423
      // Predicated region
      $region9: #{tpu_custom_call.1} parent=5 // pred_check
        _
      $region10: #{tpu_custom_call.1} parent=5 // pred_check_branch
        %426 = sbr.rel (%p423) target = $region12
      $region11: #{tpu_custom_call.1} parent=5 // pred_region
        %s427 = ssub.s32 %s37, 1
      $region12: #{tpu_custom_call.1} parent=5 // pred_fallthru
        _
      %p428 = scmp.lt.s32.totalorder %s37, 4
      // Predicated region
      $region13: #{tpu_custom_call.1} parent=5 // pred_check
        %p429 = pneg %p428
      $region14: #{tpu_custom_call.1} parent=5 // pred_check_branch
        %431 = sbr.rel (%p429) target = $region16
      $region15: #{tpu_custom_call.1} parent=5 // pred_region
        // Predicated region
        $region17: #{tpu_custom_call.1} parent=15 // pred_check
          %p432 = pneg %p69
        $region18: #{tpu_custom_call.1} parent=15 // pred_check_branch
          %434 = sbr.rel (%p432) target = $region20
        $region19: #{tpu_custom_call.1} parent=15 // pred_region
          %s435 = sand.u32 %s59, 1
          %s436 = scalar_lea.sflag [#allocation3], %s435
          %s437 = sand.u32 %s59, 1
          %s438 = smul.addr %s437, 16
          %s439 = scalar_lea.vmem [#allocation2], %s438
          %s440 = smul.u32 2, %s44
          %s442 = ssub.s32 256, 256
          %443 = vsyncadd %s436, %s442
          %s444 = smul.addr %s440, 128
          %s445 = scalar_lea.hbm %s0, %s444
          %s446 = sshll.u32 %s439, 4
          %s447 = int_to_ptr.vmem [resolvable:$true] %s446
          %452 = dma.hbm_to_vmem [thread:$0]  %s445, 256, %s447, %s436, 128, 128, 8
        $region20: #{tpu_custom_call.1} parent=15 // pred_fallthru
          _
        // Predicated region
        $region21: #{tpu_custom_call.1} parent=15 // pred_check
          %p453 = pneg %p95
        $region22: #{tpu_custom_call.1} parent=15 // pred_check_branch
          %455 = sbr.rel (%p453) target = $region24
        $region23: #{tpu_custom_call.1} parent=15 // pred_region
          %s456 = sand.u32 %s37, 1
          %s457 = scalar_lea.sflag [#allocation6], %s456
          %s458 = sand.u32 %s85, 1
          %s459 = scalar_lea.vmem [#allocation5], %s458
          %s461 = ssub.s32 16, 16
          %462 = vsyncadd %s457, %s461
          %s463 = smul.addr %s45, 16
          %s464 = scalar_lea.hbm %s1, %s463
          %s466 = sshll.u32 %s459, 4
          %s467 = int_to_ptr.vmem [resolvable:$true] %s466
          %469 = dma.hbm_to_vmem [thread:$0]  %s464, 16, %s467, %s457
        $region24: #{tpu_custom_call.1} parent=15 // pred_fallthru
          _
        // Predicated region
        $region25: #{tpu_custom_call.1} parent=15 // pred_check
          %p470 = pneg %p121
        $region26: #{tpu_custom_call.1} parent=15 // pred_check_branch
          %472 = sbr.rel (%p470) target = $region28
        $region27: #{tpu_custom_call.1} parent=15 // pred_region
          %s473 = sand.u32 %s37, 1
          %s474 = scalar_lea.sflag [#allocation6], %s473
          %s475 = sand.u32 %s111, 1
          %s476 = scalar_lea.vmem [#allocation7], %s475
          %s478 = ssub.s32 16, 16
          %479 = vsyncadd %s474, %s478
          %s480 = smul.addr %s45, 16
          %s481 = scalar_lea.hbm %s2, %s480
          %s483 = sshll.u32 %s476, 4
          %s484 = int_to_ptr.vmem [resolvable:$true] %s483
          %486 = dma.hbm_to_vmem [thread:$0]  %s481, 16, %s484, %s474
        $region28: #{tpu_custom_call.1} parent=15 // pred_fallthru
          _
        // Predicated region
        $region29: #{tpu_custom_call.1} parent=15 // pred_check
          %p487 = pneg %p147
        $region30: #{tpu_custom_call.1} parent=15 // pred_check_branch
          %489 = sbr.rel (%p487) target = $region32
        $region31: #{tpu_custom_call.1} parent=15 // pred_region
          %s490 = sand.u32 %s37, 1
          %s491 = scalar_lea.sflag [#allocation9], %s490
          %s492 = sand.u32 %s137, 1
          %s493 = smul.addr %s492, 192
          %s494 = scalar_lea.vmem [#allocation8], %s493
          %s496 = ssub.s32 3072, 3072
          %497 = vsyncadd %s491, %s496
          %s498 = smul.addr %s45, 48
          %s499 = smul.addr %s498, 64
          %s500 = scalar_lea.hbm %s3, %s499
          %s501 = sshll.u32 %s494, 4
          %s502 = int_to_ptr.vmem [resolvable:$true] %s501
          %507 = dma.hbm_to_vmem [thread:$0]  %s500, 3072, %s502, %s491, 192, 192, 12
        $region32: #{tpu_custom_call.1} parent=15 // pred_fallthru
          _
        // Predicated region
        $region33: #{tpu_custom_call.1} parent=15 // pred_check
          %p508 = pneg %p173
        $region34: #{tpu_custom_call.1} parent=15 // pred_check_branch
          %510 = sbr.rel (%p508) target = $region36
        $region35: #{tpu_custom_call.1} parent=15 // pred_region
          %p511 = scmp.lt.s32.totalorder %s45, 1
          %s512 = scalar_select %p511, %s45, 1
          %s513 = smul.addr %s512, 3
          %s514 = scalar_lea.vmem %s4, %s513
        $region36: #{tpu_custom_call.1} parent=15 // pred_fallthru
          _
        // Predicated region
        $region37: #{tpu_custom_call.1} parent=15 // pred_check
          %p515 = pneg %p199
        $region38: #{tpu_custom_call.1} parent=15 // pred_check_branch
          %517 = sbr.rel (%p515) target = $region40
        $region39: #{tpu_custom_call.1} parent=15 // pred_region
          %s518 = sand.u32 %s37, 1
          %s519 = scalar_lea.sflag [#allocation9], %s518
          %s520 = sand.u32 %s189, 1
          %s521 = smul.addr %s520, 64
          %s522 = scalar_lea.vmem [#allocation10], %s521
          %s524 = ssub.s32 1024, 1024
          %525 = vsyncadd %s519, %s524
          %s526 = smul.addr %s45, 16
          %s527 = smul.addr %s526, 64
          %s528 = scalar_lea.hbm %s5, %s527
          %s529 = sshll.u32 %s522, 4
          %s530 = int_to_ptr.vmem [resolvable:$true] %s529
          %535 = dma.hbm_to_vmem [thread:$0]  %s528, 1024, %s530, %s519, 64, 64, 4
        $region40: #{tpu_custom_call.1} parent=15 // pred_fallthru
          _
        // Predicated region
        $region41: #{tpu_custom_call.1} parent=15 // pred_check
          %p536 = pneg %p225
        $region42: #{tpu_custom_call.1} parent=15 // pred_check_branch
          %538 = sbr.rel (%p536) target = $region44
        $region43: #{tpu_custom_call.1} parent=15 // pred_region
          %p539 = scmp.lt.s32.totalorder %s45, 1
          %s540 = scalar_select %p539, %s45, 1
          %s541 = scalar_lea.vmem %s6, %s540
        $region44: #{tpu_custom_call.1} parent=15 // pred_fallthru
          _
        // Predicated region
        $region45: #{tpu_custom_call.1} parent=15 // pred_check
          %p542 = pneg %p251
        $region46: #{tpu_custom_call.1} parent=15 // pred_check_branch
          %544 = sbr.rel (%p542) target = $region48
        $region47: #{tpu_custom_call.1} parent=15 // pred_region
          %s545 = sand.u32 %s37, 1
          %s546 = scalar_lea.sflag [#allocation12], %s545
          %s547 = sand.u32 %s241, 1
          %s548 = scalar_lea.vmem [#allocation11], %s547
          %s550 = ssub.s32 16, 16
          %551 = vsyncadd %s546, %s550
          %s552 = smul.addr %s45, 16
          %s553 = scalar_lea.hbm %s7, %s552
          %s555 = sshll.u32 %s548, 4
          %s556 = int_to_ptr.vmem [resolvable:$true] %s555
          %558 = dma.hbm_to_vmem [thread:$0]  %s553, 16, %s556, %s546
        $region48: #{tpu_custom_call.1} parent=15 // pred_fallthru
          _
        // Predicated region
        $region49: #{tpu_custom_call.1} parent=15 // pred_check
          %p559 = pneg %p277
        $region50: #{tpu_custom_call.1} parent=15 // pred_check_branch
          %561 = sbr.rel (%p559) target = $region52
        $region51: #{tpu_custom_call.1} parent=15 // pred_region
          %s562 = sand.u32 %s37, 1
          %s563 = scalar_lea.sflag [#allocation12], %s562
          %s564 = sand.u32 %s267, 1
          %s565 = scalar_lea.vmem [#allocation13], %s564
          %s567 = ssub.s32 16, 16
          %568 = vsyncadd %s563, %s567
          %s569 = smul.addr %s45, 16
          %s570 = scalar_lea.hbm %s8, %s569
          %s572 = sshll.u32 %s565, 4
          %s573 = int_to_ptr.vmem [resolvable:$true] %s572
          %575 = dma.hbm_to_vmem [thread:$0]  %s570, 16, %s573, %s563
        $region52: #{tpu_custom_call.1} parent=15 // pred_fallthru
          _
        // Predicated region
        $region53: #{tpu_custom_call.1} parent=15 // pred_check
          %p576 = pneg %p303
        $region54: #{tpu_custom_call.1} parent=15 // pred_check_branch
          %578 = sbr.rel (%p576) target = $region56
        $region55: #{tpu_custom_call.1} parent=15 // pred_region
          %s579 = sand.u32 %s37, 1
          %s580 = scalar_lea.sflag [#allocation15], %s579
          %s581 = sand.u32 %s293, 1
          %s582 = smul.addr %s581, 256
          %s583 = scalar_lea.vmem [#allocation14], %s582
          %s585 = ssub.s32 4096, 4096
          %586 = vsyncadd %s580, %s585
          %s587 = smul.addr %s45, 64
          %s588 = smul.addr %s587, 64
          %s589 = scalar_lea.hbm %s9, %s588
          %s590 = sshll.u32 %s583, 4
          %s591 = int_to_ptr.vmem [resolvable:$true] %s590
          %596 = dma.hbm_to_vmem [thread:$0]  %s589, 4096, %s591, %s580, 256, 256, 16
        $region56: #{tpu_custom_call.1} parent=15 // pred_fallthru
          _
        // Predicated region
        $region57: #{tpu_custom_call.1} parent=15 // pred_check
          %p597 = pneg %p329
        $region58: #{tpu_custom_call.1} parent=15 // pred_check_branch
          %599 = sbr.rel (%p597) target = $region60
        $region59: #{tpu_custom_call.1} parent=15 // pred_region
          %p600 = scmp.lt.s32.totalorder %s45, 1
          %s601 = scalar_select %p600, %s45, 1
          %s602 = smul.addr %s601, 4
          %s603 = scalar_lea.vmem %s10, %s602
        $region60: #{tpu_custom_call.1} parent=15 // pred_fallthru
          _
        // Predicated region
        $region61: #{tpu_custom_call.1} parent=15 // pred_check
          %p604 = pneg %p355
        $region62: #{tpu_custom_call.1} parent=15 // pred_check_branch
          %606 = sbr.rel (%p604) target = $region64
        $region63: #{tpu_custom_call.1} parent=15 // pred_region
          %s607 = sand.u32 %s37, 1
          %s608 = scalar_lea.sflag [#allocation15], %s607
          %s609 = sand.u32 %s345, 1
          %s610 = smul.addr %s609, 256
          %s611 = scalar_lea.vmem [#allocation16], %s610
          %s613 = ssub.s32 4096, 4096
          %614 = vsyncadd %s608, %s613
          %s615 = smul.addr %s45, 64
          %s616 = smul.addr %s615, 64
          %s617 = scalar_lea.hbm %s11, %s616
          %s618 = sshll.u32 %s611, 4
          %s619 = int_to_ptr.vmem [resolvable:$true] %s618
          %624 = dma.hbm_to_vmem [thread:$0]  %s617, 4096, %s619, %s608, 64, 64, 4
        $region64: #{tpu_custom_call.1} parent=15 // pred_fallthru
          _
        // Predicated region
        $region65: #{tpu_custom_call.1} parent=15 // pred_check
          %p625 = pneg %p381
        $region66: #{tpu_custom_call.1} parent=15 // pred_check_branch
          %627 = sbr.rel (%p625) target = $region68
        $region67: #{tpu_custom_call.1} parent=15 // pred_region
          %p628 = scmp.lt.s32.totalorder %s45, 1
          %s629 = scalar_select %p628, %s45, 1
          %s630 = scalar_lea.vmem %s12, %s629
        $region68: #{tpu_custom_call.1} parent=15 // pred_fallthru
          _
      $region16: #{tpu_custom_call.1} parent=5 // pred_fallthru
        _
      %p631 = scmp.le.s32.totalorder 1, %s37
      %p632 = scmp.lt.s32.totalorder %s37, 5
      %p633 = pnand %p631, %p632
      %p634 = pneg %p633
      // Predicated region
      $region69: #{tpu_custom_call.1} parent=5 // pred_check
        _
      $region70: #{tpu_custom_call.1} parent=5 // pred_check_branch
        %636 = sbr.rel (%p633) target = $region72
      $region71: #{tpu_custom_call.1} parent=5 // pred_region
        %s637 = ssub.s32 %s37, 1
        %s638 = sand.u32 %s62, 1
        %s639 = scalar_lea.sflag [#allocation3], %s638
        %s640 = sand.u32 %s62, 1
        %s641 = smul.addr %s640, 16
        %s642 = scalar_lea.vmem [#allocation2], %s641
        // Predicated region
        $region73: #{tpu_custom_call.1} parent=71 // pred_check
          %p643 = pneg %p75
        $region74: #{tpu_custom_call.1} parent=71 // pred_check_branch
          %645 = sbr.rel (%p643) target = $region76
        $region75: #{tpu_custom_call.1} parent=71 // pred_region
          %646 = dma.done %s639, 256
        $region76: #{tpu_custom_call.1} parent=71 // pred_fallthru
          _
        %s647 = sand.u32 %s42, 1
        %s648 = scalar_lea.sflag [#allocation6], %s647
        %s649 = sand.u32 %s88, 1
        %s650 = scalar_lea.vmem [#allocation5], %s649
        // Predicated region
        $region77: #{tpu_custom_call.1} parent=71 // pred_check
          %p651 = pneg %p101
        $region78: #{tpu_custom_call.1} parent=71 // pred_check_branch
          %653 = sbr.rel (%p651) target = $region80
        $region79: #{tpu_custom_call.1} parent=71 // pred_region
          %654 = dma.done %s648, 16
        $region80: #{tpu_custom_call.1} parent=71 // pred_fallthru
          _
        %s655 = sand.u32 %s42, 1
        %s656 = scalar_lea.sflag [#allocation6], %s655
        %s657 = sand.u32 %s114, 1
        %s658 = scalar_lea.vmem [#allocation7], %s657
        // Predicated region
        $region81: #{tpu_custom_call.1} parent=71 // pred_check
          %p659 = pneg %p127
        $region82: #{tpu_custom_call.1} parent=71 // pred_check_branch
          %661 = sbr.rel (%p659) target = $region84
        $region83: #{tpu_custom_call.1} parent=71 // pred_region
          %662 = dma.done %s656, 16
        $region84: #{tpu_custom_call.1} parent=71 // pred_fallthru
          _
        %s663 = sand.u32 %s42, 1
        %s664 = scalar_lea.sflag [#allocation9], %s663
        %s665 = sand.u32 %s140, 1
        %s666 = smul.addr %s665, 192
        %s667 = scalar_lea.vmem [#allocation8], %s666
        // Predicated region
        $region85: #{tpu_custom_call.1} parent=71 // pred_check
          %p668 = pneg %p153
        $region86: #{tpu_custom_call.1} parent=71 // pred_check_branch
          %670 = sbr.rel (%p668) target = $region88
        $region87: #{tpu_custom_call.1} parent=71 // pred_region
          %671 = dma.done %s664, 3072
        $region88: #{tpu_custom_call.1} parent=71 // pred_fallthru
          _
        %s672 = sand.u32 %s42, 1
        %s673 = scalar_lea.sflag [#allocation9], %s672
        %s674 = sand.u32 %s192, 1
        %s675 = smul.addr %s674, 64
        %s676 = scalar_lea.vmem [#allocation10], %s675
        // Predicated region
        $region89: #{tpu_custom_call.1} parent=71 // pred_check
          %p677 = pneg %p205
        $region90: #{tpu_custom_call.1} parent=71 // pred_check_branch
          %679 = sbr.rel (%p677) target = $region92
        $region91: #{tpu_custom_call.1} parent=71 // pred_region
          %680 = dma.done %s673, 1024
        $region92: #{tpu_custom_call.1} parent=71 // pred_fallthru
          _
        %s681 = sand.u32 %s42, 1
        %s682 = scalar_lea.sflag [#allocation12], %s681
        %s683 = sand.u32 %s244, 1
        %s684 = scalar_lea.vmem [#allocation11], %s683
        // Predicated region
        $region93: #{tpu_custom_call.1} parent=71 // pred_check
          %p685 = pneg %p257
        $region94: #{tpu_custom_call.1} parent=71 // pred_check_branch
          %687 = sbr.rel (%p685) target = $region96
        $region95: #{tpu_custom_call.1} parent=71 // pred_region
          %688 = dma.done %s682, 16
        $region96: #{tpu_custom_call.1} parent=71 // pred_fallthru
          _
        %s689 = sand.u32 %s42, 1
        %s690 = scalar_lea.sflag [#allocation12], %s689
        %s691 = sand.u32 %s270, 1
        %s692 = scalar_lea.vmem [#allocation13], %s691
        // Predicated region
        $region97: #{tpu_custom_call.1} parent=71 // pred_check
          %p693 = pneg %p283
        $region98: #{tpu_custom_call.1} parent=71 // pred_check_branch
          %695 = sbr.rel (%p693) target = $region100
        $region99: #{tpu_custom_call.1} parent=71 // pred_region
          %696 = dma.done %s690, 16
        $region100: #{tpu_custom_call.1} parent=71 // pred_fallthru
          _
        %s697 = sand.u32 %s42, 1
        %s698 = scalar_lea.sflag [#allocation15], %s697
        %s699 = sand.u32 %s296, 1
        %s700 = smul.addr %s699, 256
        %s701 = scalar_lea.vmem [#allocation14], %s700
        // Predicated region
        $region101: #{tpu_custom_call.1} parent=71 // pred_check
          %p702 = pneg %p309
        $region102: #{tpu_custom_call.1} parent=71 // pred_check_branch
          %704 = sbr.rel (%p702) target = $region104
        $region103: #{tpu_custom_call.1} parent=71 // pred_region
          %705 = dma.done %s698, 4096
        $region104: #{tpu_custom_call.1} parent=71 // pred_fallthru
          _
        %s706 = sand.u32 %s42, 1
        %s707 = scalar_lea.sflag [#allocation15], %s706
        %s708 = sand.u32 %s348, 1
        %s709 = smul.addr %s708, 256
        %s710 = scalar_lea.vmem [#allocation16], %s709
        // Predicated region
        $region105: #{tpu_custom_call.1} parent=71 // pred_check
          %p711 = pneg %p361
        $region106: #{tpu_custom_call.1} parent=71 // pred_check_branch
          %713 = sbr.rel (%p711) target = $region108
        $region107: #{tpu_custom_call.1} parent=71 // pred_region
          %714 = dma.done %s707, 4096
        $region108: #{tpu_custom_call.1} parent=71 // pred_fallthru
          _
        %s715 = sand.u32 %s62, 1
        %s716 = scalar_lea.sflag [#allocation3], %s715
        %s717 = sand.u32 %s62, 1
        %s718 = smul.addr %s717, 16
        %s719 = scalar_lea.vmem [#allocation2], %s718
        %p720 = pneg %p75
        %p721 = pneg %p72
        %s722 = sand.u32 %s42, 1
        %s723 = scalar_lea.sflag [#allocation6], %s722
        %s724 = sand.u32 %s88, 1
        %s725 = scalar_lea.vmem [#allocation5], %s724
        %p726 = pneg %p101
        %p727 = pneg %p98
        %s728 = sand.u32 %s42, 1
        %s729 = scalar_lea.sflag [#allocation6], %s728
        %s730 = sand.u32 %s114, 1
        %s731 = scalar_lea.vmem [#allocation7], %s730
        %p732 = pneg %p127
        %p733 = pneg %p124
        %s734 = sand.u32 %s42, 1
        %s735 = scalar_lea.sflag [#allocation9], %s734
        %s736 = sand.u32 %s140, 1
        %s737 = smul.addr %s736, 192
        %s738 = scalar_lea.vmem [#allocation8], %s737
        %p739 = pneg %p153
        %p740 = pneg %p150
        %p741 = scmp.lt.s32.totalorder %s47, 1
        %s742 = scalar_select %p741, %s47, 1
        %s743 = smul.addr %s742, 3
        %s744 = scalar_lea.vmem %s4, %s743
        %p745 = pneg %p179
        %p746 = pneg %p176
        %s747 = sand.u32 %s42, 1
        %s748 = scalar_lea.sflag [#allocation9], %s747
        %s749 = sand.u32 %s192, 1
        %s750 = smul.addr %s749, 64
        %s751 = scalar_lea.vmem [#allocation10], %s750
        %p752 = pneg %p205
        %p753 = pneg %p202
        %p754 = scmp.lt.s32.totalorder %s47, 1
        %s755 = scalar_select %p754, %s47, 1
        %s756 = scalar_lea.vmem %s6, %s755
        %p757 = pneg %p231
        %p758 = pneg %p228
        %s759 = sand.u32 %s42, 1
        %s760 = scalar_lea.sflag [#allocation12], %s759
        %s761 = sand.u32 %s244, 1
        %s762 = scalar_lea.vmem [#allocation11], %s761
        %p763 = pneg %p257
        %p764 = pneg %p254
        %s765 = sand.u32 %s42, 1
        %s766 = scalar_lea.sflag [#allocation12], %s765
        %s767 = sand.u32 %s270, 1
        %s768 = scalar_lea.vmem [#allocation13], %s767
        %p769 = pneg %p283
        %p770 = pneg %p280
        %s771 = sand.u32 %s42, 1
        %s772 = scalar_lea.sflag [#allocation15], %s771
        %s773 = sand.u32 %s296, 1
        %s774 = smul.addr %s773, 256
        %s775 = scalar_lea.vmem [#allocation14], %s774
        %p776 = pneg %p309
        %p777 = pneg %p306
        %p778 = scmp.lt.s32.totalorder %s47, 1
        %s779 = scalar_select %p778, %s47, 1
        %s780 = smul.addr %s779, 4
        %s781 = scalar_lea.vmem %s10, %s780
        %p782 = pneg %p335
        %p783 = pneg %p332
        %s784 = sand.u32 %s42, 1
        %s785 = scalar_lea.sflag [#allocation15], %s784
        %s786 = sand.u32 %s348, 1
        %s787 = smul.addr %s786, 256
        %s788 = scalar_lea.vmem [#allocation16], %s787
        %p789 = pneg %p361
        %p790 = pneg %p358
        %p791 = scmp.lt.s32.totalorder %s47, 1
        %s792 = scalar_select %p791, %s47, 1
        %s793 = scalar_lea.vmem %s12, %s792
        %p794 = pneg %p387
        %p795 = pneg %p384
        %p796 = pneg %p413
        %p797 = pneg %p410
        %s798 = sand.u32 %s400, 1
        %s799 = scalar_lea.sflag [#allocation4], %s798
        %s800 = sand.u32 %s400, 1
        %s801 = smul.addr %s800, 16
        %s802 = scalar_lea.vmem [#allocation17], %s801
        %s803 = smul.u32 2, %s46
        %p804 = scmp.lt.s32.totalorder %s47, 1
        %s805 = scalar_select %p804, %s47, 1
        %s806 = smul.addr %s805, 3
        %s807 = scalar_lea.vmem %s4, %s806
        %p808 = scmp.lt.s32.totalorder %s47, 1
        %s809 = scalar_select %p808, %s47, 1
        %s810 = scalar_lea.vmem %s6, %s809
        %p811 = scmp.lt.s32.totalorder %s47, 1
        %s812 = scalar_select %p811, %s47, 1
        %s813 = smul.addr %s812, 4
        %s814 = scalar_lea.vmem %s10, %s813
        %p815 = scmp.lt.s32.totalorder %s47, 1
        %s816 = scalar_select %p815, %s47, 1
        %s817 = scalar_lea.vmem %s12, %s816
        %s818 = smul.u32 2, %s46
        %p820 = scmp.eq.s32.totalorder %s47, 0
        // Predicated region
        $region109: #{tpu_custom_call.1} parent=71 // pred_check
          %p821 = pneg %p820
        $region110: #{tpu_custom_call.1} parent=71 // pred_check_branch
          %823 = sbr.rel (%p821) target = $region112
        $region111: #{tpu_custom_call.1} parent=71 // pred_region
          %v824 = vld [vmem:[%s642] sm:$0xff]
          %v825 = vld [vmem:[%s642 + $0x8] sm:$0xff]
          %826 = vst [vmem:[%s802] sm:$0xff] %v824
          %827 = vst [vmem:[%s802 + $0x8] sm:$0xff] %v825
        $region112: #{tpu_custom_call.1} parent=71 // pred_fallthru
          _
        %v828 = vld [vmem:[%s802] sm:$0xff]
        %v829 = vld [vmem:[%s802 + $0x8] sm:$0xff]
        %v830 = vld [vmem:[%s650] sm:$0x1]
        %v831 = vld [vmem:[%s658] sm:$0x1]
        %832 = vadd.xlane.f32.xlu0 %v828
        %v833 = vpop.xlane.xlu0 %832
        %834 = vadd.xlane.f32.xlu0 %v829
        %v835 = vpop.xlane.xlu0 %834
        %v836 = vrcp.pop 128.0
        %v837 = vmul.f32 %v833, %v836
        %v838 = vmul.f32 %v835, %v836
        %v839 = vsub.f32 %v828, %v837
        %v840 = vsub.f32 %v829, %v838
        %v841 = vmul.f32 %v839, %v839
        %v842 = vmul.f32 %v840, %v840
        %843 = vadd.xlane.f32.xlu0 %v841
        %v844 = vpop.xlane.xlu0 %843
        %845 = vadd.xlane.f32.xlu0 %v842
        %v846 = vpop.xlane.xlu0 %845
        %v847 = vmul.f32 %v844, %v836
        %v848 = vmul.f32 %v846, %v836
        %v849 = vadd.f32 %v847, 1e-05
        %v850 = vadd.f32 %v848, 1e-05
        %v851 = vrsqrt.pop %v849
        %v852 = vrsqrt.pop %v850
        %v853 = vmul.f32 %v839, %v851
        %v854 = vmul.f32 %v840, %v852
        %v856 = vlaneseq
        %v857 = vshrl.u32 %v856, 7
        %v858 = vsub.s32 0, %v857
        %v859 = vrot.slane %v830, %v858
        %v861 = vmul.f32 %v853, %v859
        %v862 = vmul.f32 %v854, %v859
        %v864 = vlaneseq
        %v865 = vshrl.u32 %v864, 7
        %v866 = vsub.s32 0, %v865
        %v867 = vrot.slane %v831, %v866
        %v869 = vadd.f32 %v861, %v867
        %v870 = vadd.f32 %v862, %v867
        %v871 = vpack.c.bf16 %v870, %v869
        %v872 = vld [vmem:[%s667] sm:$0xff]
        %v873 = vld [vmem:[%s667 + $0x8] sm:$0xf]
        %v874 = vld [vmem:[%s667 + $0xc] sm:$0xff]
        %v875 = vld [vmem:[%s667 + $0x14] sm:$0xf]
        %v876 = vld [vmem:[%s667 + $0x18] sm:$0xff]
        %v877 = vld [vmem:[%s667 + $0x20] sm:$0xf]
        %v878 = vld [vmem:[%s667 + $0x24] sm:$0xff]
        %v879 = vld [vmem:[%s667 + $0x2c] sm:$0xf]
        %v880 = vld [vmem:[%s667 + $0x30] sm:$0xff]
        %v881 = vld [vmem:[%s667 + $0x38] sm:$0xf]
        %v882 = vld [vmem:[%s667 + $0x3c] sm:$0xff]
        %v883 = vld [vmem:[%s667 + $0x44] sm:$0xf]
        %v884 = vld [vmem:[%s667 + $0x48] sm:$0xff]
        %v885 = vld [vmem:[%s667 + $0x50] sm:$0xf]
        %v886 = vld [vmem:[%s667 + $0x54] sm:$0xff]
        %v887 = vld [vmem:[%s667 + $0x5c] sm:$0xf]
        %v888 = vld [vmem:[%s667 + $0x60] sm:$0xff]
        %v889 = vld [vmem:[%s667 + $0x68] sm:$0xf]
        %v890 = vld [vmem:[%s667 + $0x6c] sm:$0xff]
        %v891 = vld [vmem:[%s667 + $0x74] sm:$0xf]
        %v892 = vld [vmem:[%s667 + $0x78] sm:$0xff]
        %v893 = vld [vmem:[%s667 + $0x80] sm:$0xf]
        %v894 = vld [vmem:[%s667 + $0x84] sm:$0xff]
        %v895 = vld [vmem:[%s667 + $0x8c] sm:$0xf]
        %v896 = vld [vmem:[%s667 + $0x90] sm:$0xff]
        %v897 = vld [vmem:[%s667 + $0x98] sm:$0xf]
        %v898 = vld [vmem:[%s667 + $0x9c] sm:$0xff]
        %v899 = vld [vmem:[%s667 + $0xa4] sm:$0xf]
        %v900 = vld [vmem:[%s667 + $0xa8] sm:$0xff]
        %v901 = vld [vmem:[%s667 + $0xb0] sm:$0xf]
        %v902 = vld [vmem:[%s667 + $0xb4] sm:$0xff]
        %v903 = vld [vmem:[%s667 + $0xbc] sm:$0xf]
        %v904 = vld [vmem:[%s807] sm:$0x7]
        %v906 = vlaneseq
        %v907 = vshrl.u32 %v906, 7
        %v908 = vsub.s32 0, %v907
        %v909 = vrot.slane %v904, %v908
        %v910 = vlaneseq
        %v911 = vshrl.u32 %v910, 7
        %v912 = vsub.s32 1, %v911
        %v913 = vrot.slane %v904, %v912
        %v914 = vlaneseq
        %v915 = vshrl.u32 %v914, 7
        %v916 = vsub.s32 2, %v915
        %v917 = vrot.slane %v904, %v916
        %v953 = vunpack.c.l.b16 %v872
        %v954 = vunpack.c.h.b16 %v872
        %v955 = vunpack.c.l.b16 %v873
        %v956 = vunpack.c.l.b16 %v874
        %v957 = vunpack.c.h.b16 %v874
        %v958 = vunpack.c.l.b16 %v875
        %v959 = vunpack.c.l.b16 %v876
        %v960 = vunpack.c.h.b16 %v876
        %v961 = vunpack.c.l.b16 %v877
        %v962 = vunpack.c.l.b16 %v878
        %v963 = vunpack.c.h.b16 %v878
        %v964 = vunpack.c.l.b16 %v879
        %v965 = vunpack.c.l.b16 %v880
        %v966 = vunpack.c.h.b16 %v880
        %v967 = vunpack.c.l.b16 %v881
        %v968 = vunpack.c.l.b16 %v882
        %v969 = vunpack.c.h.b16 %v882
        %v970 = vunpack.c.l.b16 %v883
        %v971 = vunpack.c.l.b16 %v884
        %v972 = vunpack.c.h.b16 %v884
        %v973 = vunpack.c.l.b16 %v885
        %v974 = vunpack.c.l.b16 %v886
        %v975 = vunpack.c.h.b16 %v886
        %v976 = vunpack.c.l.b16 %v887
        %v977 = vunpack.c.l.b16 %v888
        %v978 = vunpack.c.h.b16 %v888
        %v979 = vunpack.c.l.b16 %v889
        %v980 = vunpack.c.l.b16 %v890
        %v981 = vunpack.c.h.b16 %v890
        %v982 = vunpack.c.l.b16 %v891
        %v983 = vunpack.c.l.b16 %v892
        %v984 = vunpack.c.h.b16 %v892
        %v985 = vunpack.c.l.b16 %v893
        %v986 = vunpack.c.l.b16 %v894
        %v987 = vunpack.c.h.b16 %v894
        %v988 = vunpack.c.l.b16 %v895
        %v989 = vunpack.c.l.b16 %v896
        %v990 = vunpack.c.h.b16 %v896
        %v991 = vunpack.c.l.b16 %v897
        %v992 = vunpack.c.l.b16 %v898
        %v993 = vunpack.c.h.b16 %v898
        %v994 = vunpack.c.l.b16 %v899
        %v995 = vunpack.c.l.b16 %v900
        %v996 = vunpack.c.h.b16 %v900
        %v997 = vunpack.c.l.b16 %v901
        %v998 = vunpack.c.l.b16 %v902
        %v999 = vunpack.c.h.b16 %v902
        %v1000 = vunpack.c.l.b16 %v903
        %v1001 = vpack.c.b16 %v956, %v953
        %v1002 = vpack.c.b16 %v957, %v954
        %v1003 = vpack.c.b16 %v958, %v955
        %v1004 = vpack.c.b16 %v962, %v959
        %v1005 = vpack.c.b16 %v963, %v960
        %v1006 = vpack.c.b16 %v964, %v961
        %v1007 = vpack.c.b16 %v968, %v965
        %v1008 = vpack.c.b16 %v969, %v966
        %v1009 = vpack.c.b16 %v970, %v967
        %v1010 = vpack.c.b16 %v974, %v971
        %v1011 = vpack.c.b16 %v975, %v972
        %v1012 = vpack.c.b16 %v976, %v973
        %v1013 = vpack.c.b16 %v980, %v977
        %v1014 = vpack.c.b16 %v981, %v978
        %v1015 = vpack.c.b16 %v982, %v979
        %v1016 = vpack.c.b16 %v986, %v983
        %v1017 = vpack.c.b16 %v987, %v984
        %v1018 = vpack.c.b16 %v988, %v985
        %v1019 = vpack.c.b16 %v992, %v989
        %v1020 = vpack.c.b16 %v993, %v990
        %v1021 = vpack.c.b16 %v994, %v991
        %v1022 = vpack.c.b16 %v998, %v995
        %v1023 = vpack.c.b16 %v999, %v996
        %v1024 = vpack.c.b16 %v1000, %v997
        %1049 = vmatprep.subr.bf16.mxu0 %v1023
        %1050 = vmatpush1.bf16.msra.mxu0 %v1022
        %1051 = vmatprep.subr.bf16.mxu0 %v1020
        %1052 = vmatpush1.bf16.msra.mxu0 %v1019
        %1053 = vmatprep.subr.bf16.mxu0 %v1017
        %1054 = vmatpush1.bf16.msra.mxu0 %v1016
        %1055 = vmatprep.subr.bf16.mxu0 %v1014
        %1056 = vmatpush1.bf16.msra.mxu0 %v1013
        %1057 = vmatprep.subr.bf16.mxu0 %v1011
        %1058 = vmatpush1.bf16.msra.mxu0 %v1010
        %1059 = vmatprep.subr.bf16.mxu0 %v1008
        %1060 = vmatpush1.bf16.msra.mxu0 %v1007
        %1061 = vmatprep.subr.bf16.mxu0 %v1005
        %1062 = vmatpush1.bf16.msra.mxu0 %v1004
        %1063 = vmatprep.subr.bf16.mxu0 %v1002
        %1064 = vmatpush1.bf16.msra.mxu0 %v1001
        %1065 = vmatprep.subr.bf16.mxu0 0
        %1066 = vmatpush2.bf16.msra.mxu0 0
        %1067 = vmatprep.subr.bf16.mxu0 0
        %1068 = vmatpush2.bf16.msra.mxu0 0
        %1069 = vmatprep.subr.bf16.mxu0 0
        %1070 = vmatpush2.bf16.msra.mxu0 0
        %1071 = vmatprep.subr.bf16.mxu0 0
        %1072 = vmatpush2.bf16.msra.mxu0 0
        %1073 = vmatprep.subr.bf16.mxu0 0
        %1074 = vmatpush2.bf16.msra.mxu0 0
        %1075 = vmatprep.subr.bf16.mxu0 0
        %1076 = vmatpush2.bf16.msra.mxu0 0
        %1077 = vmatprep.subr.bf16.mxu0 0
        %1078 = vmatpush2.bf16.msra.mxu0 0
        %1079 = vmatprep.subr.bf16.mxu0 0
        %1080 = vmatpush2.bf16.msra.mxu0 0
        %1081 = vmatprep.mubr.bf16.mxu0 0
        %1082 = vmatmul.mubr.bf16.gmra.mxu0 %v871
        %v1083 = vpop.f32.mrf.mxu0
        %v1084 = vadd.f32 %v909, %v1083
        %v1085 = vpop.f32.mrf.mxu0
        %v1086 = vadd.f32 %v913, %v1085
        %v1087 = vpop.f32.mrf.mxu0
        %v1088 = vadd.f32 %v909, %v1087
        %v1089 = vpop.f32.mrf.mxu0
        %v1090 = vadd.f32 %v913, %v1089
        %1091 = vdwg.mxu0
        %1092 = vmatprep.subr.bf16.mxu0 0
        %1093 = vmatpush1.bf16.msra.mxu0 %v1024
        %1094 = vmatprep.subr.bf16.mxu0 0
        %1095 = vmatpush1.bf16.msra.mxu0 %v1021
        %1096 = vmatprep.subr.bf16.mxu0 0
        %1097 = vmatpush1.bf16.msra.mxu0 %v1018
        %1098 = vmatprep.subr.bf16.mxu0 0
        %1099 = vmatpush1.bf16.msra.mxu0 %v1015
        %1100 = vmatprep.subr.bf16.mxu0 0
        %1101 = vmatpush1.bf16.msra.mxu0 %v1012
        %1102 = vmatprep.subr.bf16.mxu0 0
        %1103 = vmatpush1.bf16.msra.mxu0 %v1009
        %1104 = vmatprep.subr.bf16.mxu0 0
        %1105 = vmatpush1.bf16.msra.mxu0 %v1006
        %1106 = vmatprep.subr.bf16.mxu0 0
        %1107 = vmatpush1.bf16.msra.mxu0 %v1003
        %1108 = vmatprep.subr.bf16.mxu0 0
        %1109 = vmatpush2.bf16.msra.mxu0 0
        %1110 = vmatprep.subr.bf16.mxu0 0
        %1111 = vmatpush2.bf16.msra.mxu0 0
        %1112 = vmatprep.subr.bf16.mxu0 0
        %1113 = vmatpush2.bf16.msra.mxu0 0
        %1114 = vmatprep.subr.bf16.mxu0 0
        %1115 = vmatpush2.bf16.msra.mxu0 0
        %1116 = vmatprep.subr.bf16.mxu0 0
        %1117 = vmatpush2.bf16.msra.mxu0 0
        %1118 = vmatprep.subr.bf16.mxu0 0
        %1119 = vmatpush2.bf16.msra.mxu0 0
        %1120 = vmatprep.subr.bf16.mxu0 0
        %1121 = vmatpush2.bf16.msra.mxu0 0
        %1122 = vmatprep.subr.bf16.mxu0 0
        %1123 = vmatpush2.bf16.msra.mxu0 0
        %1124 = vmatprep.mubr.bf16.mxu0 0
        %1125 = vmatmul.mubr.bf16.gmra.mxu0 %v871
        %v1126 = vpop.f32.mrf.mxu0
        %v1127 = vadd.f32 %v917, %v1126
        %v1128 = vpop.f32.mrf.mxu0
        %v1129 = vpop.f32.mrf.mxu0
        %v1130 = vadd.f32 %v917, %v1129
        %v1131 = vpop.f32.mrf.mxu0
        %1132 = vdwg.mxu0
        %v1133 = vmul.f32 %v1084, 0.17677669
        %v1134 = vmul.f32 %v1088, 0.17677669
        %v1135 = vpack.c.bf16 %v1133, %v1133
        %v1136 = vpack.c.bf16 %v1134, %v1134
        %v1137 = vpack.c.bf16 %v1086, %v1086
        %v1138 = vpack.c.bf16 %v1090, %v1090
        %v1139 = vpack.c.bf16 %v1127, %v1127
        %v1140 = vpack.c.bf16 %v1130, %v1130
        %v1141 = vld [vmem:[%s676] sm:$0xf]
        %v1142 = vld [vmem:[%s676 + $0x4] sm:$0xf]
        %v1143 = vld [vmem:[%s676 + $0x8] sm:$0xf]
        %v1144 = vld [vmem:[%s676 + $0xc] sm:$0xf]
        %v1145 = vld [vmem:[%s676 + $0x10] sm:$0xf]
        %v1146 = vld [vmem:[%s676 + $0x14] sm:$0xf]
        %v1147 = vld [vmem:[%s676 + $0x18] sm:$0xf]
        %v1148 = vld [vmem:[%s676 + $0x1c] sm:$0xf]
        %v1149 = vld [vmem:[%s676 + $0x20] sm:$0xf]
        %v1150 = vld [vmem:[%s676 + $0x24] sm:$0xf]
        %v1151 = vld [vmem:[%s676 + $0x28] sm:$0xf]
        %v1152 = vld [vmem:[%s676 + $0x2c] sm:$0xf]
        %v1153 = vld [vmem:[%s676 + $0x30] sm:$0xf]
        %v1154 = vld [vmem:[%s676 + $0x34] sm:$0xf]
        %v1155 = vld [vmem:[%s676 + $0x38] sm:$0xf]
        %v1156 = vld [vmem:[%s676 + $0x3c] sm:$0xf]
        %vm1157 = vcmask 261120
        %v1159 = vsel %vm1157, %v1135, 0
        %v1162 = vsel %vm1157, %v1137, 0
        %1164 = vmatprep.subr.bf16.mxu0 0
        %1165 = vmatpush1.bf16.xpose.msra.mxu0 0
        %1166 = vmatprep.subr.bf16.mxu0 0
        %1167 = vmatpush1.bf16.xpose.msra.mxu0 0
        %1168 = vmatprep.subr.bf16.mxu0 0
        %1169 = vmatpush1.bf16.xpose.msra.mxu0 0
        %1170 = vmatprep.subr.bf16.mxu0 0
        %1171 = vmatpush1.bf16.xpose.msra.mxu0 0
        %1172 = vmatprep.subr.bf16.mxu0 0
        %1173 = vmatpush1.bf16.xpose.msra.mxu0 0
        %1174 = vmatprep.subr.bf16.mxu0 0
        %1175 = vmatpush1.bf16.xpose.msra.mxu0 0
        %1176 = vmatprep.subr.bf16.mxu0 0
        %1177 = vmatpush1.bf16.xpose.msra.mxu0 0
        %1178 = vmatprep.subr.bf16.mxu0 0
        %1179 = vmatpush1.bf16.xpose.msra.mxu0 %v1162
        %1180 = vmatprep.subr.bf16.mxu0 0
        %1181 = vmatpush2.bf16.xpose.msra.mxu0 0
        %1182 = vmatprep.subr.bf16.mxu0 0
        %1183 = vmatpush2.bf16.xpose.msra.mxu0 0
        %1184 = vmatprep.subr.bf16.mxu0 0
        %1185 = vmatpush2.bf16.xpose.msra.mxu0 0
        %1186 = vmatprep.subr.bf16.mxu0 0
        %1187 = vmatpush2.bf16.xpose.msra.mxu0 0
        %1188 = vmatprep.subr.bf16.mxu0 0
        %1189 = vmatpush2.bf16.xpose.msra.mxu0 0
        %1190 = vmatprep.subr.bf16.mxu0 0
        %1191 = vmatpush2.bf16.xpose.msra.mxu0 0
        %1192 = vmatprep.subr.bf16.mxu0 0
        %1193 = vmatpush2.bf16.xpose.msra.mxu0 0
        %1194 = vmatprep.subr.bf16.mxu0 0
        %1195 = vmatpush2.bf16.xpose.msra.mxu0 0
        %1196 = vmatprep.mubr.bf16.mxu0 0
        %1197 = vmatmul.mubr.bf16.gmra.mxu0 %v1159
        %v1198 = vpop.f32.mrf.mxu0
        %v1199 = vadd.f32 0.0, %v1198
        %v1200 = vpop.f32.mrf.mxu0
        %v1201 = vpop.f32.mrf.mxu0
        %v1202 = vpop.f32.mrf.mxu0
        %1203 = vdwg.mxu0
        %v1205 = vsel %vm1157, %v1136, 0
        %v1208 = vsel %vm1157, %v1138, 0
        %1210 = vmatprep.subr.bf16.mxu0 0
        %1211 = vmatpush1.bf16.xpose.msra.mxu0 0
        %1212 = vmatprep.subr.bf16.mxu0 0
        %1213 = vmatpush1.bf16.xpose.msra.mxu0 0
        %1214 = vmatprep.subr.bf16.mxu0 0
        %1215 = vmatpush1.bf16.xpose.msra.mxu0 0
        %1216 = vmatprep.subr.bf16.mxu0 0
        %1217 = vmatpush1.bf16.xpose.msra.mxu0 0
        %1218 = vmatprep.subr.bf16.mxu0 0
        %1219 = vmatpush1.bf16.xpose.msra.mxu0 0
        %1220 = vmatprep.subr.bf16.mxu0 0
        %1221 = vmatpush1.bf16.xpose.msra.mxu0 0
        %1222 = vmatprep.subr.bf16.mxu0 0
        %1223 = vmatpush1.bf16.xpose.msra.mxu0 0
        %1224 = vmatprep.subr.bf16.mxu0 0
        %1225 = vmatpush1.bf16.xpose.msra.mxu0 %v1208
        %1226 = vmatprep.subr.bf16.mxu0 0
        %1227 = vmatpush2.bf16.xpose.msra.mxu0 0
        %1228 = vmatprep.subr.bf16.mxu0 0
        %1229 = vmatpush2.bf16.xpose.msra.mxu0 0
        %1230 = vmatprep.subr.bf16.mxu0 0
        %1231 = vmatpush2.bf16.xpose.msra.mxu0 0
        %1232 = vmatprep.subr.bf16.mxu0 0
        %1233 = vmatpush2.bf16.xpose.msra.mxu0 0
        %1234 = vmatprep.subr.bf16.mxu0 0
        %1235 = vmatpush2.bf16.xpose.msra.mxu0 0
        %1236 = vmatprep.subr.bf16.mxu0 0
        %1237 = vmatpush2.bf16.xpose.msra.mxu0 0
        %1238 = vmatprep.subr.bf16.mxu0 0
        %1239 = vmatpush2.bf16.xpose.msra.mxu0 0
        %1240 = vmatprep.subr.bf16.mxu0 0
        %1241 = vmatpush2.bf16.xpose.msra.mxu0 0
        %1242 = vmatprep.mubr.bf16.mxu0 0
        %1243 = vmatmul.mubr.bf16.gmra.mxu0 %v1205
        %v1244 = vpop.f32.mrf.mxu0
        %v1245 = vadd.f32 0.0, %v1244
        %v1246 = vpop.f32.mrf.mxu0
        %v1247 = vpop.f32.mrf.mxu0
        %v1248 = vpop.f32.mrf.mxu0
        %1249 = vdwg.mxu0
        %vm1250 = vcmask 64512
        %v1251 = vsel %vm1250, %v1199, -inf
        %1252 = vmax.xlane.f32.xlu0 %v1251
        %v1253 = vpop.xlane.xlu0 %1252
        %v1254 = vsel %vm1250, %v1245, -inf
        %1255 = vmax.xlane.f32.xlu0 %v1254
        %v1256 = vpop.xlane.xlu0 %1255
        %v1257 = vsub.f32 %v1199, %v1253
        %v1258 = vsub.f32 %v1245, %v1256
        %v1259 = vmul.f32 %v1257, 1.442695
        %v1260 = vpow.pop %v1259
        %v1261 = vmul.f32 %v1258, 1.442695
        %v1262 = vpow.pop %v1261
        %v1263 = vsel %vm1250, %v1260, 0.0
        %1264 = vadd.xlane.f32.xlu0 %v1263
        %v1265 = vpop.xlane.xlu0 %1264
        %v1266 = vsel %vm1250, %v1262, 0.0
        %1267 = vadd.xlane.f32.xlu0 %v1266
        %v1268 = vpop.xlane.xlu0 %1267
        %v1269 = vrcp.pop %v1265
        %v1270 = vrcp.pop %v1268
        %v1271 = vmul.f32 %v1260, %v1269
        %v1272 = vmul.f32 %v1262, %v1270
        %v1273 = vpack.c.bf16 %v1271, %v1271
        %v1274 = vpack.c.bf16 %v1272, %v1272
        %v1276 = vsel %vm1250, %v1273, 0
        %vm1278 = vcmask 1043456
        %v1280 = vsel %vm1278, %v1139, 0
        %1282 = vmatprep.subr.bf16.mxu0 0
        %1283 = vmatpush1.bf16.msra.mxu0 0
        %1284 = vmatprep.subr.bf16.mxu0 0
        %1285 = vmatpush1.bf16.msra.mxu0 0
        %1286 = vmatprep.subr.bf16.mxu0 0
        %1287 = vmatpush1.bf16.msra.mxu0 0
        %1288 = vmatprep.subr.bf16.mxu0 0
        %1289 = vmatpush1.bf16.msra.mxu0 0
        %1290 = vmatprep.subr.bf16.mxu0 0
        %1291 = vmatpush1.bf16.msra.mxu0 0
        %1292 = vmatprep.subr.bf16.mxu0 0
        %1293 = vmatpush1.bf16.msra.mxu0 0
        %1294 = vmatprep.subr.bf16.mxu0 0
        %1295 = vmatpush1.bf16.msra.mxu0 0
        %1296 = vmatprep.subr.bf16.mxu0 0
        %1297 = vmatpush1.bf16.msra.mxu0 %v1280
        %1298 = vmatprep.subr.bf16.mxu0 0
        %1299 = vmatpush2.bf16.msra.mxu0 0
        %1300 = vmatprep.subr.bf16.mxu0 0
        %1301 = vmatpush2.bf16.msra.mxu0 0
        %1302 = vmatprep.subr.bf16.mxu0 0
        %1303 = vmatpush2.bf16.msra.mxu0 0
        %1304 = vmatprep.subr.bf16.mxu0 0
        %1305 = vmatpush2.bf16.msra.mxu0 0
        %1306 = vmatprep.subr.bf16.mxu0 0
        %1307 = vmatpush2.bf16.msra.mxu0 0
        %1308 = vmatprep.subr.bf16.mxu0 0
        %1309 = vmatpush2.bf16.msra.mxu0 0
        %1310 = vmatprep.subr.bf16.mxu0 0
        %1311 = vmatpush2.bf16.msra.mxu0 0
        %1312 = vmatprep.subr.bf16.mxu0 0
        %1313 = vmatpush2.bf16.msra.mxu0 0
        %1314 = vmatprep.mubr.bf16.mxu0 0
        %1315 = vmatmul.mubr.bf16.gmra.mxu0 %v1276
        %v1316 = vpop.f32.mrf.mxu0
        %v1317 = vadd.f32 0.0, %v1316
        %v1318 = vpop.f32.mrf.mxu0
        %v1319 = vpop.f32.mrf.mxu0
        %v1320 = vpop.f32.mrf.mxu0
        %1321 = vdwg.mxu0
        %v1323 = vsel %vm1250, %v1274, 0
        %v1326 = vsel %vm1278, %v1140, 0
        %1328 = vmatprep.subr.bf16.mxu0 0
        %1329 = vmatpush1.bf16.msra.mxu0 0
        %1330 = vmatprep.subr.bf16.mxu0 0
        %1331 = vmatpush1.bf16.msra.mxu0 0
        %1332 = vmatprep.subr.bf16.mxu0 0
        %1333 = vmatpush1.bf16.msra.mxu0 0
        %1334 = vmatprep.subr.bf16.mxu0 0
        %1335 = vmatpush1.bf16.msra.mxu0 0
        %1336 = vmatprep.subr.bf16.mxu0 0
        %1337 = vmatpush1.bf16.msra.mxu0 0
        %1338 = vmatprep.subr.bf16.mxu0 0
        %1339 = vmatpush1.bf16.msra.mxu0 0
        %1340 = vmatprep.subr.bf16.mxu0 0
        %1341 = vmatpush1.bf16.msra.mxu0 0
        %1342 = vmatprep.subr.bf16.mxu0 0
        %1343 = vmatpush1.bf16.msra.mxu0 %v1326
        %1344 = vmatprep.subr.bf16.mxu0 0
        %1345 = vmatpush2.bf16.msra.mxu0 0
        %1346 = vmatprep.subr.bf16.mxu0 0
        %1347 = vmatpush2.bf16.msra.mxu0 0
        %1348 = vmatprep.subr.bf16.mxu0 0
        %1349 = vmatpush2.bf16.msra.mxu0 0
        %1350 = vmatprep.subr.bf16.mxu0 0
        %1351 = vmatpush2.bf16.msra.mxu0 0
        %1352 = vmatprep.subr.bf16.mxu0 0
        %1353 = vmatpush2.bf16.msra.mxu0 0
        %1354 = vmatprep.subr.bf16.mxu0 0
        %1355 = vmatpush2.bf16.msra.mxu0 0
        %1356 = vmatprep.subr.bf16.mxu0 0
        %1357 = vmatpush2.bf16.msra.mxu0 0
        %1358 = vmatprep.subr.bf16.mxu0 0
        %1359 = vmatpush2.bf16.msra.mxu0 0
        %1360 = vmatprep.mubr.bf16.mxu0 0
        %1361 = vmatmul.mubr.bf16.gmra.mxu0 %v1323
        %v1362 = vpop.f32.mrf.mxu0
        %v1363 = vadd.f32 0.0, %v1362
        %v1364 = vpop.f32.mrf.mxu0
        %v1365 = vpop.f32.mrf.mxu0
        %v1366 = vpop.f32.mrf.mxu0
        %1367 = vdwg.mxu0
        %v1368 = vpack.c.bf16 %v1363, %v1317
        %1370 = vrot.lane.b32.xlu0 %v1135, 96
        %v1371 = vpop.permute.xlu0 %1370
        %1373 = vrot.lane.b32.xlu0 %v1137, 96
        %v1374 = vpop.permute.xlu0 %1373
        %v1376 = vsel %vm1157, %v1371, 0
        %v1379 = vsel %vm1157, %v1374, 0
        %1381 = vmatprep.subr.bf16.mxu0 0
        %1382 = vmatpush1.bf16.xpose.msra.mxu0 0
        %1383 = vmatprep.subr.bf16.mxu0 0
        %1384 = vmatpush1.bf16.xpose.msra.mxu0 0
        %1385 = vmatprep.subr.bf16.mxu0 0
        %1386 = vmatpush1.bf16.xpose.msra.mxu0 0
        %1387 = vmatprep.subr.bf16.mxu0 0
        %1388 = vmatpush1.bf16.xpose.msra.mxu0 0
        %1389 = vmatprep.subr.bf16.mxu0 0
        %1390 = vmatpush1.bf16.xpose.msra.mxu0 0
        %1391 = vmatprep.subr.bf16.mxu0 0
        %1392 = vmatpush1.bf16.xpose.msra.mxu0 0
        %1393 = vmatprep.subr.bf16.mxu0 0
        %1394 = vmatpush1.bf16.xpose.msra.mxu0 0
        %1395 = vmatprep.subr.bf16.mxu0 0
        %1396 = vmatpush1.bf16.xpose.msra.mxu0 %v1379
        %1397 = vmatprep.subr.bf16.mxu0 0
        %1398 = vmatpush2.bf16.xpose.msra.mxu0 0
        %1399 = vmatprep.subr.bf16.mxu0 0
        %1400 = vmatpush2.bf16.xpose.msra.mxu0 0
        %1401 = vmatprep.subr.bf16.mxu0 0
        %1402 = vmatpush2.bf16.xpose.msra.mxu0 0
        %1403 = vmatprep.subr.bf16.mxu0 0
        %1404 = vmatpush2.bf16.xpose.msra.mxu0 0
        %1405 = vmatprep.subr.bf16.mxu0 0
        %1406 = vmatpush2.bf16.xpose.msra.mxu0 0
        %1407 = vmatprep.subr.bf16.mxu0 0
        %1408 = vmatpush2.bf16.xpose.msra.mxu0 0
        %1409 = vmatprep.subr.bf16.mxu0 0
        %1410 = vmatpush2.bf16.xpose.msra.mxu0 0
        %1411 = vmatprep.subr.bf16.mxu0 0
        %1412 = vmatpush2.bf16.xpose.msra.mxu0 0
        %1413 = vmatprep.mubr.bf16.mxu0 0
        %1414 = vmatmul.mubr.bf16.gmra.mxu0 %v1376
        %v1415 = vpop.f32.mrf.mxu0
        %v1416 = vadd.f32 0.0, %v1415
        %v1417 = vpop.f32.mrf.mxu0
        %v1418 = vpop.f32.mrf.mxu0
        %v1419 = vpop.f32.mrf.mxu0
        %1420 = vdwg.mxu0
        %1422 = vrot.lane.b32.xlu0 %v1136, 96
        %v1423 = vpop.permute.xlu0 %1422
        %1425 = vrot.lane.b32.xlu0 %v1138, 96
        %v1426 = vpop.permute.xlu0 %1425
        %v1428 = vsel %vm1157, %v1423, 0
        %v1431 = vsel %vm1157, %v1426, 0
        %1433 = vmatprep.subr.bf16.mxu0 0
        %1434 = vmatpush1.bf16.xpose.msra.mxu0 0
        %1435 = vmatprep.subr.bf16.mxu0 0
        %1436 = vmatpush1.bf16.xpose.msra.mxu0 0
        %1437 = vmatprep.subr.bf16.mxu0 0
        %1438 = vmatpush1.bf16.xpose.msra.mxu0 0
        %1439 = vmatprep.subr.bf16.mxu0 0
        %1440 = vmatpush1.bf16.xpose.msra.mxu0 0
        %1441 = vmatprep.subr.bf16.mxu0 0
        %1442 = vmatpush1.bf16.xpose.msra.mxu0 0
        %1443 = vmatprep.subr.bf16.mxu0 0
        %1444 = vmatpush1.bf16.xpose.msra.mxu0 0
        %1445 = vmatprep.subr.bf16.mxu0 0
        %1446 = vmatpush1.bf16.xpose.msra.mxu0 0
        %1447 = vmatprep.subr.bf16.mxu0 0
        %1448 = vmatpush1.bf16.xpose.msra.mxu0 %v1431
        %1449 = vmatprep.subr.bf16.mxu0 0
        %1450 = vmatpush2.bf16.xpose.msra.mxu0 0
        %1451 = vmatprep.subr.bf16.mxu0 0
        %1452 = vmatpush2.bf16.xpose.msra.mxu0 0
        %1453 = vmatprep.subr.bf16.mxu0 0
        %1454 = vmatpush2.bf16.xpose.msra.mxu0 0
        %1455 = vmatprep.subr.bf16.mxu0 0
        %1456 = vmatpush2.bf16.xpose.msra.mxu0 0
        %1457 = vmatprep.subr.bf16.mxu0 0
        %1458 = vmatpush2.bf16.xpose.msra.mxu0 0
        %1459 = vmatprep.subr.bf16.mxu0 0
        %1460 = vmatpush2.bf16.xpose.msra.mxu0 0
        %1461 = vmatprep.subr.bf16.mxu0 0
        %1462 = vmatpush2.bf16.xpose.msra.mxu0 0
        %1463 = vmatprep.subr.bf16.mxu0 0
        %1464 = vmatpush2.bf16.xpose.msra.mxu0 0
        %1465 = vmatprep.mubr.bf16.mxu0 0
        %1466 = vmatmul.mubr.bf16.gmra.mxu0 %v1428
        %v1467 = vpop.f32.mrf.mxu0
        %v1468 = vadd.f32 0.0, %v1467
        %v1469 = vpop.f32.mrf.mxu0
        %v1470 = vpop.f32.mrf.mxu0
        %v1471 = vpop.f32.mrf.mxu0
        %1472 = vdwg.mxu0
        %v1473 = vsel %vm1250, %v1416, -inf
        %1474 = vmax.xlane.f32.xlu0 %v1473
        %v1475 = vpop.xlane.xlu0 %1474
        %v1476 = vsel %vm1250, %v1468, -inf
        %1477 = vmax.xlane.f32.xlu0 %v1476
        %v1478 = vpop.xlane.xlu0 %1477
        %v1479 = vsub.f32 %v1416, %v1475
        %v1480 = vsub.f32 %v1468, %v1478
        %v1481 = vmul.f32 %v1479, 1.442695
        %v1482 = vpow.pop %v1481
        %v1483 = vmul.f32 %v1480, 1.442695
        %v1484 = vpow.pop %v1483
        %v1485 = vsel %vm1250, %v1482, 0.0
        %1486 = vadd.xlane.f32.xlu0 %v1485
        %v1487 = vpop.xlane.xlu0 %1486
        %v1488 = vsel %vm1250, %v1484, 0.0
        %1489 = vadd.xlane.f32.xlu0 %v1488
        %v1490 = vpop.xlane.xlu0 %1489
        %v1491 = vrcp.pop %v1487
        %v1492 = vrcp.pop %v1490
        %v1493 = vmul.f32 %v1482, %v1491
        %v1494 = vmul.f32 %v1484, %v1492
        %v1495 = vpack.c.bf16 %v1493, %v1493
        %v1496 = vpack.c.bf16 %v1494, %v1494
        %1498 = vrot.lane.b32.xlu0 %v1139, 96
        %v1499 = vpop.permute.xlu0 %1498
        %v1501 = vsel %vm1250, %v1495, 0
        %v1504 = vsel %vm1278, %v1499, 0
        %1506 = vmatprep.subr.bf16.mxu0 0
        %1507 = vmatpush1.bf16.msra.mxu0 0
        %1508 = vmatprep.subr.bf16.mxu0 0
        %1509 = vmatpush1.bf16.msra.mxu0 0
        %1510 = vmatprep.subr.bf16.mxu0 0
        %1511 = vmatpush1.bf16.msra.mxu0 0
        %1512 = vmatprep.subr.bf16.mxu0 0
        %1513 = vmatpush1.bf16.msra.mxu0 0
        %1514 = vmatprep.subr.bf16.mxu0 0
        %1515 = vmatpush1.bf16.msra.mxu0 0
        %1516 = vmatprep.subr.bf16.mxu0 0
        %1517 = vmatpush1.bf16.msra.mxu0 0
        %1518 = vmatprep.subr.bf16.mxu0 0
        %1519 = vmatpush1.bf16.msra.mxu0 0
        %1520 = vmatprep.subr.bf16.mxu0 0
        %1521 = vmatpush1.bf16.msra.mxu0 %v1504
        %1522 = vmatprep.subr.bf16.mxu0 0
        %1523 = vmatpush2.bf16.msra.mxu0 0
        %1524 = vmatprep.subr.bf16.mxu0 0
        %1525 = vmatpush2.bf16.msra.mxu0 0
        %1526 = vmatprep.subr.bf16.mxu0 0
        %1527 = vmatpush2.bf16.msra.mxu0 0
        %1528 = vmatprep.subr.bf16.mxu0 0
        %1529 = vmatpush2.bf16.msra.mxu0 0
        %1530 = vmatprep.subr.bf16.mxu0 0
        %1531 = vmatpush2.bf16.msra.mxu0 0
        %1532 = vmatprep.subr.bf16.mxu0 0
        %1533 = vmatpush2.bf16.msra.mxu0 0
        %1534 = vmatprep.subr.bf16.mxu0 0
        %1535 = vmatpush2.bf16.msra.mxu0 0
        %1536 = vmatprep.subr.bf16.mxu0 0
        %1537 = vmatpush2.bf16.msra.mxu0 0
        %1538 = vmatprep.mubr.bf16.mxu0 0
        %1539 = vmatmul.mubr.bf16.gmra.mxu0 %v1501
        %v1540 = vpop.f32.mrf.mxu0
        %v1541 = vadd.f32 0.0, %v1540
        %v1542 = vpop.f32.mrf.mxu0
        %v1543 = vpop.f32.mrf.mxu0
        %v1544 = vpop.f32.mrf.mxu0
        %1545 = vdwg.mxu0
        %1547 = vrot.lane.b32.xlu0 %v1140, 96
        %v1548 = vpop.permute.xlu0 %1547
        %v1550 = vsel %vm1250, %v1496, 0
        %v1553 = vsel %vm1278, %v1548, 0
        %1555 = vmatprep.subr.bf16.mxu0 0
        %1556 = vmatpush1.bf16.msra.mxu0 0
        %1557 = vmatprep.subr.bf16.mxu0 0
        %1558 = vmatpush1.bf16.msra.mxu0 0
        %1559 = vmatprep.subr.bf16.mxu0 0
        %1560 = vmatpush1.bf16.msra.mxu0 0
        %1561 = vmatprep.subr.bf16.mxu0 0
        %1562 = vmatpush1.bf16.msra.mxu0 0
        %1563 = vmatprep.subr.bf16.mxu0 0
        %1564 = vmatpush1.bf16.msra.mxu0 0
        %1565 = vmatprep.subr.bf16.mxu0 0
        %1566 = vmatpush1.bf16.msra.mxu0 0
        %1567 = vmatprep.subr.bf16.mxu0 0
        %1568 = vmatpush1.bf16.msra.mxu0 0
        %1569 = vmatprep.subr.bf16.mxu0 0
        %1570 = vmatpush1.bf16.msra.mxu0 %v1553
        %1571 = vmatprep.subr.bf16.mxu0 0
        %1572 = vmatpush2.bf16.msra.mxu0 0
        %1573 = vmatprep.subr.bf16.mxu0 0
        %1574 = vmatpush2.bf16.msra.mxu0 0
        %1575 = vmatprep.subr.bf16.mxu0 0
        %1576 = vmatpush2.bf16.msra.mxu0 0
        %1577 = vmatprep.subr.bf16.mxu0 0
        %1578 = vmatpush2.bf16.msra.mxu0 0
        %1579 = vmatprep.subr.bf16.mxu0 0
        %1580 = vmatpush2.bf16.msra.mxu0 0
        %1581 = vmatprep.subr.bf16.mxu0 0
        %1582 = vmatpush2.bf16.msra.mxu0 0
        %1583 = vmatprep.subr.bf16.mxu0 0
        %1584 = vmatpush2.bf16.msra.mxu0 0
        %1585 = vmatprep.subr.bf16.mxu0 0
        %1586 = vmatpush2.bf16.msra.mxu0 0
        %1587 = vmatprep.mubr.bf16.mxu0 0
        %1588 = vmatmul.mubr.bf16.gmra.mxu0 %v1550
        %v1589 = vpop.f32.mrf.mxu0
        %v1590 = vadd.f32 0.0, %v1589
        %v1591 = vpop.f32.mrf.mxu0
        %v1592 = vpop.f32.mrf.mxu0
        %v1593 = vpop.f32.mrf.mxu0
        %1594 = vdwg.mxu0
        %v1595 = vpack.c.bf16 %v1590, %v1541
        %v1600 = vunpack.c.l.b16 %v1145
        %v1601 = vunpack.c.l.b16 %v1146
        %v1602 = vunpack.c.l.b16 %v1147
        %v1603 = vunpack.c.l.b16 %v1148
        %v1604 = vpack.c.b16 %v1601, %v1600
        %v1605 = vpack.c.b16 %v1603, %v1602
        %v1609 = vsel %vm1157, %v1595, 0
        %1611 = vmatprep.subr.bf16.mxu0 0
        %1612 = vmatpush1.bf16.msra.mxu0 0
        %1613 = vmatprep.subr.bf16.mxu0 0
        %1614 = vmatpush1.bf16.msra.mxu0 0
        %1615 = vmatprep.subr.bf16.mxu0 0
        %1616 = vmatpush1.bf16.msra.mxu0 0
        %1617 = vmatprep.subr.bf16.mxu0 0
        %1618 = vmatpush1.bf16.msra.mxu0 0
        %1619 = vmatprep.subr.bf16.mxu0 0
        %1620 = vmatpush1.bf16.msra.mxu0 0
        %1621 = vmatprep.subr.bf16.mxu0 0
        %1622 = vmatpush1.bf16.msra.mxu0 0
        %1623 = vmatprep.subr.bf16.mxu0 0
        %1624 = vmatpush1.bf16.msra.mxu0 %v1605
        %1625 = vmatprep.subr.bf16.mxu0 0
        %1626 = vmatpush1.bf16.msra.mxu0 %v1604
        %1627 = vmatprep.subr.bf16.mxu0 0
        %1628 = vmatpush2.bf16.msra.mxu0 0
        %1629 = vmatprep.subr.bf16.mxu0 0
        %1630 = vmatpush2.bf16.msra.mxu0 0
        %1631 = vmatprep.subr.bf16.mxu0 0
        %1632 = vmatpush2.bf16.msra.mxu0 0
        %1633 = vmatprep.subr.bf16.mxu0 0
        %1634 = vmatpush2.bf16.msra.mxu0 0
        %1635 = vmatprep.subr.bf16.mxu0 0
        %1636 = vmatpush2.bf16.msra.mxu0 0
        %1637 = vmatprep.subr.bf16.mxu0 0
        %1638 = vmatpush2.bf16.msra.mxu0 0
        %1639 = vmatprep.subr.bf16.mxu0 0
        %1640 = vmatpush2.bf16.msra.mxu0 0
        %1641 = vmatprep.subr.bf16.mxu0 0
        %1642 = vmatpush2.bf16.msra.mxu0 0
        %1643 = vmatprep.mubr.bf16.mxu0 0
        %1644 = vmatmul.mubr.bf16.gmra.mxu0 %v1609
        %v1645 = vpop.f32.mrf.mxu0
        %v1646 = vadd.f32 0.0, %v1645
        %v1647 = vpop.f32.mrf.mxu0
        %v1648 = vpop.f32.mrf.mxu0
        %v1649 = vadd.f32 0.0, %v1648
        %v1650 = vpop.f32.mrf.mxu0
        %1651 = vdwg.mxu0
        %v1656 = vunpack.c.l.b16 %v1141
        %v1657 = vunpack.c.l.b16 %v1142
        %v1658 = vunpack.c.l.b16 %v1143
        %v1659 = vunpack.c.l.b16 %v1144
        %v1660 = vpack.c.b16 %v1657, %v1656
        %v1661 = vpack.c.b16 %v1659, %v1658
        %v1665 = vsel %vm1157, %v1368, 0
        %1667 = vmatprep.subr.bf16.mxu0 0
        %1668 = vmatpush1.bf16.msra.mxu0 0
        %1669 = vmatprep.subr.bf16.mxu0 0
        %1670 = vmatpush1.bf16.msra.mxu0 0
        %1671 = vmatprep.subr.bf16.mxu0 0
        %1672 = vmatpush1.bf16.msra.mxu0 0
        %1673 = vmatprep.subr.bf16.mxu0 0
        %1674 = vmatpush1.bf16.msra.mxu0 0
        %1675 = vmatprep.subr.bf16.mxu0 0
        %1676 = vmatpush1.bf16.msra.mxu0 0
        %1677 = vmatprep.subr.bf16.mxu0 0
        %1678 = vmatpush1.bf16.msra.mxu0 0
        %1679 = vmatprep.subr.bf16.mxu0 0
        %1680 = vmatpush1.bf16.msra.mxu0 %v1661
        %1681 = vmatprep.subr.bf16.mxu0 0
        %1682 = vmatpush1.bf16.msra.mxu0 %v1660
        %1683 = vmatprep.subr.bf16.mxu0 0
        %1684 = vmatpush2.bf16.msra.mxu0 0
        %1685 = vmatprep.subr.bf16.mxu0 0
        %1686 = vmatpush2.bf16.msra.mxu0 0
        %1687 = vmatprep.subr.bf16.mxu0 0
        %1688 = vmatpush2.bf16.msra.mxu0 0
        %1689 = vmatprep.subr.bf16.mxu0 0
        %1690 = vmatpush2.bf16.msra.mxu0 0
        %1691 = vmatprep.subr.bf16.mxu0 0
        %1692 = vmatpush2.bf16.msra.mxu0 0
        %1693 = vmatprep.subr.bf16.mxu0 0
        %1694 = vmatpush2.bf16.msra.mxu0 0
        %1695 = vmatprep.subr.bf16.mxu0 0
        %1696 = vmatpush2.bf16.msra.mxu0 0
        %1697 = vmatprep.subr.bf16.mxu0 0
        %1698 = vmatpush2.bf16.msra.mxu0 0
        %1699 = vmatprep.mubr.bf16.mxu0 0
        %1700 = vmatmul.mubr.bf16.gmra.mxu0 %v1665
        %v1701 = vpop.f32.mrf.mxu0
        %v1702 = vadd.f32 %v1646, %v1701
        %v1703 = vpop.f32.mrf.mxu0
        %v1704 = vpop.f32.mrf.mxu0
        %v1705 = vadd.f32 %v1649, %v1704
        %v1706 = vpop.f32.mrf.mxu0
        %1707 = vdwg.mxu0
        %1708 = vrot.lane.b32.xlu0 %v1135, 64
        %v1709 = vpop.permute.xlu0 %1708
        %1710 = vrot.lane.b32.xlu0 %v1137, 64
        %v1711 = vpop.permute.xlu0 %1710
        %v1713 = vsel %vm1157, %v1709, 0
        %v1716 = vsel %vm1157, %v1711, 0
        %1718 = vmatprep.subr.bf16.mxu0 0
        %1719 = vmatpush1.bf16.xpose.msra.mxu0 0
        %1720 = vmatprep.subr.bf16.mxu0 0
        %1721 = vmatpush1.bf16.xpose.msra.mxu0 0
        %1722 = vmatprep.subr.bf16.mxu0 0
        %1723 = vmatpush1.bf16.xpose.msra.mxu0 0
        %1724 = vmatprep.subr.bf16.mxu0 0
        %1725 = vmatpush1.bf16.xpose.msra.mxu0 0
        %1726 = vmatprep.subr.bf16.mxu0 0
        %1727 = vmatpush1.bf16.xpose.msra.mxu0 0
        %1728 = vmatprep.subr.bf16.mxu0 0
        %1729 = vmatpush1.bf16.xpose.msra.mxu0 0
        %1730 = vmatprep.subr.bf16.mxu0 0
        %1731 = vmatpush1.bf16.xpose.msra.mxu0 0
        %1732 = vmatprep.subr.bf16.mxu0 0
        %1733 = vmatpush1.bf16.xpose.msra.mxu0 %v1716
        %1734 = vmatprep.subr.bf16.mxu0 0
        %1735 = vmatpush2.bf16.xpose.msra.mxu0 0
        %1736 = vmatprep.subr.bf16.mxu0 0
        %1737 = vmatpush2.bf16.xpose.msra.mxu0 0
        %1738 = vmatprep.subr.bf16.mxu0 0
        %1739 = vmatpush2.bf16.xpose.msra.mxu0 0
        %1740 = vmatprep.subr.bf16.mxu0 0
        %1741 = vmatpush2.bf16.xpose.msra.mxu0 0
        %1742 = vmatprep.subr.bf16.mxu0 0
        %1743 = vmatpush2.bf16.xpose.msra.mxu0 0
        %1744 = vmatprep.subr.bf16.mxu0 0
        %1745 = vmatpush2.bf16.xpose.msra.mxu0 0
        %1746 = vmatprep.subr.bf16.mxu0 0
        %1747 = vmatpush2.bf16.xpose.msra.mxu0 0
        %1748 = vmatprep.subr.bf16.mxu0 0
        %1749 = vmatpush2.bf16.xpose.msra.mxu0 0
        %1750 = vmatprep.mubr.bf16.mxu0 0
        %1751 = vmatmul.mubr.bf16.gmra.mxu0 %v1713
        %v1752 = vpop.f32.mrf.mxu0
        %v1753 = vadd.f32 0.0, %v1752
        %v1754 = vpop.f32.mrf.mxu0
        %v1755 = vpop.f32.mrf.mxu0
        %v1756 = vpop.f32.mrf.mxu0
        %1757 = vdwg.mxu0
        %1758 = vrot.lane.b32.xlu0 %v1136, 64
        %v1759 = vpop.permute.xlu0 %1758
        %1760 = vrot.lane.b32.xlu0 %v1138, 64
        %v1761 = vpop.permute.xlu0 %1760
        %v1763 = vsel %vm1157, %v1759, 0
        %v1766 = vsel %vm1157, %v1761, 0
        %1768 = vmatprep.subr.bf16.mxu0 0
        %1769 = vmatpush1.bf16.xpose.msra.mxu0 0
        %1770 = vmatprep.subr.bf16.mxu0 0
        %1771 = vmatpush1.bf16.xpose.msra.mxu0 0
        %1772 = vmatprep.subr.bf16.mxu0 0
        %1773 = vmatpush1.bf16.xpose.msra.mxu0 0
        %1774 = vmatprep.subr.bf16.mxu0 0
        %1775 = vmatpush1.bf16.xpose.msra.mxu0 0
        %1776 = vmatprep.subr.bf16.mxu0 0
        %1777 = vmatpush1.bf16.xpose.msra.mxu0 0
        %1778 = vmatprep.subr.bf16.mxu0 0
        %1779 = vmatpush1.bf16.xpose.msra.mxu0 0
        %1780 = vmatprep.subr.bf16.mxu0 0
        %1781 = vmatpush1.bf16.xpose.msra.mxu0 0
        %1782 = vmatprep.subr.bf16.mxu0 0
        %1783 = vmatpush1.bf16.xpose.msra.mxu0 %v1766
        %1784 = vmatprep.subr.bf16.mxu0 0
        %1785 = vmatpush2.bf16.xpose.msra.mxu0 0
        %1786 = vmatprep.subr.bf16.mxu0 0
        %1787 = vmatpush2.bf16.xpose.msra.mxu0 0
        %1788 = vmatprep.subr.bf16.mxu0 0
        %1789 = vmatpush2.bf16.xpose.msra.mxu0 0
        %1790 = vmatprep.subr.bf16.mxu0 0
        %1791 = vmatpush2.bf16.xpose.msra.mxu0 0
        %1792 = vmatprep.subr.bf16.mxu0 0
        %1793 = vmatpush2.bf16.xpose.msra.mxu0 0
        %1794 = vmatprep.subr.bf16.mxu0 0
        %1795 = vmatpush2.bf16.xpose.msra.mxu0 0
        %1796 = vmatprep.subr.bf16.mxu0 0
        %1797 = vmatpush2.bf16.xpose.msra.mxu0 0
        %1798 = vmatprep.subr.bf16.mxu0 0
        %1799 = vmatpush2.bf16.xpose.msra.mxu0 0
        %1800 = vmatprep.mubr.bf16.mxu0 0
        %1801 = vmatmul.mubr.bf16.gmra.mxu0 %v1763
        %v1802 = vpop.f32.mrf.mxu0
        %v1803 = vadd.f32 0.0, %v1802
        %v1804 = vpop.f32.mrf.mxu0
        %v1805 = vpop.f32.mrf.mxu0
        %v1806 = vpop.f32.mrf.mxu0
        %1807 = vdwg.mxu0
        %v1808 = vsel %vm1250, %v1753, -inf
        %1809 = vmax.xlane.f32.xlu0 %v1808
        %v1810 = vpop.xlane.xlu0 %1809
        %v1811 = vsel %vm1250, %v1803, -inf
        %1812 = vmax.xlane.f32.xlu0 %v1811
        %v1813 = vpop.xlane.xlu0 %1812
        %v1814 = vsub.f32 %v1753, %v1810
        %v1815 = vsub.f32 %v1803, %v1813
        %v1816 = vmul.f32 %v1814, 1.442695
        %v1817 = vpow.pop %v1816
        %v1818 = vmul.f32 %v1815, 1.442695
        %v1819 = vpow.pop %v1818
        %v1820 = vsel %vm1250, %v1817, 0.0
        %1821 = vadd.xlane.f32.xlu0 %v1820
        %v1822 = vpop.xlane.xlu0 %1821
        %v1823 = vsel %vm1250, %v1819, 0.0
        %1824 = vadd.xlane.f32.xlu0 %v1823
        %v1825 = vpop.xlane.xlu0 %1824
        %v1826 = vrcp.pop %v1822
        %v1827 = vrcp.pop %v1825
        %v1828 = vmul.f32 %v1817, %v1826
        %v1829 = vmul.f32 %v1819, %v1827
        %v1830 = vpack.c.bf16 %v1828, %v1828
        %v1831 = vpack.c.bf16 %v1829, %v1829
        %1832 = vrot.lane.b32.xlu0 %v1139, 64
        %v1833 = vpop.permute.xlu0 %1832
        %v1835 = vsel %vm1250, %v1830, 0
        %v1838 = vsel %vm1278, %v1833, 0
        %1840 = vmatprep.subr.bf16.mxu0 0
        %1841 = vmatpush1.bf16.msra.mxu0 0
        %1842 = vmatprep.subr.bf16.mxu0 0
        %1843 = vmatpush1.bf16.msra.mxu0 0
        %1844 = vmatprep.subr.bf16.mxu0 0
        %1845 = vmatpush1.bf16.msra.mxu0 0
        %1846 = vmatprep.subr.bf16.mxu0 0
        %1847 = vmatpush1.bf16.msra.mxu0 0
        %1848 = vmatprep.subr.bf16.mxu0 0
        %1849 = vmatpush1.bf16.msra.mxu0 0
        %1850 = vmatprep.subr.bf16.mxu0 0
        %1851 = vmatpush1.bf16.msra.mxu0 0
        %1852 = vmatprep.subr.bf16.mxu0 0
        %1853 = vmatpush1.bf16.msra.mxu0 0
        %1854 = vmatprep.subr.bf16.mxu0 0
        %1855 = vmatpush1.bf16.msra.mxu0 %v1838
        %1856 = vmatprep.subr.bf16.mxu0 0
        %1857 = vmatpush2.bf16.msra.mxu0 0
        %1858 = vmatprep.subr.bf16.mxu0 0
        %1859 = vmatpush2.bf16.msra.mxu0 0
        %1860 = vmatprep.subr.bf16.mxu0 0
        %1861 = vmatpush2.bf16.msra.mxu0 0
        %1862 = vmatprep.subr.bf16.mxu0 0
        %1863 = vmatpush2.bf16.msra.mxu0 0
        %1864 = vmatprep.subr.bf16.mxu0 0
        %1865 = vmatpush2.bf16.msra.mxu0 0
        %1866 = vmatprep.subr.bf16.mxu0 0
        %1867 = vmatpush2.bf16.msra.mxu0 0
        %1868 = vmatprep.subr.bf16.mxu0 0
        %1869 = vmatpush2.bf16.msra.mxu0 0
        %1870 = vmatprep.subr.bf16.mxu0 0
        %1871 = vmatpush2.bf16.msra.mxu0 0
        %1872 = vmatprep.mubr.bf16.mxu0 0
        %1873 = vmatmul.mubr.bf16.gmra.mxu0 %v1835
        %v1874 = vpop.f32.mrf.mxu0
        %v1875 = vadd.f32 0.0, %v1874
        %v1876 = vpop.f32.mrf.mxu0
        %v1877 = vpop.f32.mrf.mxu0
        %v1878 = vpop.f32.mrf.mxu0
        %1879 = vdwg.mxu0
        %1880 = vrot.lane.b32.xlu0 %v1140, 64
        %v1881 = vpop.permute.xlu0 %1880
        %v1883 = vsel %vm1250, %v1831, 0
        %v1886 = vsel %vm1278, %v1881, 0
        %1888 = vmatprep.subr.bf16.mxu0 0
        %1889 = vmatpush1.bf16.msra.mxu0 0
        %1890 = vmatprep.subr.bf16.mxu0 0
        %1891 = vmatpush1.bf16.msra.mxu0 0
        %1892 = vmatprep.subr.bf16.mxu0 0
        %1893 = vmatpush1.bf16.msra.mxu0 0
        %1894 = vmatprep.subr.bf16.mxu0 0
        %1895 = vmatpush1.bf16.msra.mxu0 0
        %1896 = vmatprep.subr.bf16.mxu0 0
        %1897 = vmatpush1.bf16.msra.mxu0 0
        %1898 = vmatprep.subr.bf16.mxu0 0
        %1899 = vmatpush1.bf16.msra.mxu0 0
        %1900 = vmatprep.subr.bf16.mxu0 0
        %1901 = vmatpush1.bf16.msra.mxu0 0
        %1902 = vmatprep.subr.bf16.mxu0 0
        %1903 = vmatpush1.bf16.msra.mxu0 %v1886
        %1904 = vmatprep.subr.bf16.mxu0 0
        %1905 = vmatpush2.bf16.msra.mxu0 0
        %1906 = vmatprep.subr.bf16.mxu0 0
        %1907 = vmatpush2.bf16.msra.mxu0 0
        %1908 = vmatprep.subr.bf16.mxu0 0
        %1909 = vmatpush2.bf16.msra.mxu0 0
        %1910 = vmatprep.subr.bf16.mxu0 0
        %1911 = vmatpush2.bf16.msra.mxu0 0
        %1912 = vmatprep.subr.bf16.mxu0 0
        %1913 = vmatpush2.bf16.msra.mxu0 0
        %1914 = vmatprep.subr.bf16.mxu0 0
        %1915 = vmatpush2.bf16.msra.mxu0 0
        %1916 = vmatprep.subr.bf16.mxu0 0
        %1917 = vmatpush2.bf16.msra.mxu0 0
        %1918 = vmatprep.subr.bf16.mxu0 0
        %1919 = vmatpush2.bf16.msra.mxu0 0
        %1920 = vmatprep.mubr.bf16.mxu0 0
        %1921 = vmatmul.mubr.bf16.gmra.mxu0 %v1883
        %v1922 = vpop.f32.mrf.mxu0
        %v1923 = vadd.f32 0.0, %v1922
        %v1924 = vpop.f32.mrf.mxu0
        %v1925 = vpop.f32.mrf.mxu0
        %v1926 = vpop.f32.mrf.mxu0
        %1927 = vdwg.mxu0
        %v1928 = vpack.c.bf16 %v1923, %v1875
        %v1933 = vunpack.c.l.b16 %v1149
        %v1934 = vunpack.c.l.b16 %v1150
        %v1935 = vunpack.c.l.b16 %v1151
        %v1936 = vunpack.c.l.b16 %v1152
        %v1937 = vpack.c.b16 %v1934, %v1933
        %v1938 = vpack.c.b16 %v1936, %v1935
        %v1942 = vsel %vm1157, %v1928, 0
        %1944 = vmatprep.subr.bf16.mxu0 0
        %1945 = vmatpush1.bf16.msra.mxu0 0
        %1946 = vmatprep.subr.bf16.mxu0 0
        %1947 = vmatpush1.bf16.msra.mxu0 0
        %1948 = vmatprep.subr.bf16.mxu0 0
        %1949 = vmatpush1.bf16.msra.mxu0 0
        %1950 = vmatprep.subr.bf16.mxu0 0
        %1951 = vmatpush1.bf16.msra.mxu0 0
        %1952 = vmatprep.subr.bf16.mxu0 0
        %1953 = vmatpush1.bf16.msra.mxu0 0
        %1954 = vmatprep.subr.bf16.mxu0 0
        %1955 = vmatpush1.bf16.msra.mxu0 0
        %1956 = vmatprep.subr.bf16.mxu0 0
        %1957 = vmatpush1.bf16.msra.mxu0 %v1938
        %1958 = vmatprep.subr.bf16.mxu0 0
        %1959 = vmatpush1.bf16.msra.mxu0 %v1937
        %1960 = vmatprep.subr.bf16.mxu0 0
        %1961 = vmatpush2.bf16.msra.mxu0 0
        %1962 = vmatprep.subr.bf16.mxu0 0
        %1963 = vmatpush2.bf16.msra.mxu0 0
        %1964 = vmatprep.subr.bf16.mxu0 0
        %1965 = vmatpush2.bf16.msra.mxu0 0
        %1966 = vmatprep.subr.bf16.mxu0 0
        %1967 = vmatpush2.bf16.msra.mxu0 0
        %1968 = vmatprep.subr.bf16.mxu0 0
        %1969 = vmatpush2.bf16.msra.mxu0 0
        %1970 = vmatprep.subr.bf16.mxu0 0
        %1971 = vmatpush2.bf16.msra.mxu0 0
        %1972 = vmatprep.subr.bf16.mxu0 0
        %1973 = vmatpush2.bf16.msra.mxu0 0
        %1974 = vmatprep.subr.bf16.mxu0 0
        %1975 = vmatpush2.bf16.msra.mxu0 0
        %1976 = vmatprep.mubr.bf16.mxu0 0
        %1977 = vmatmul.mubr.bf16.gmra.mxu0 %v1942
        %v1978 = vpop.f32.mrf.mxu0
        %v1979 = vadd.f32 0.0, %v1978
        %v1980 = vpop.f32.mrf.mxu0
        %v1981 = vpop.f32.mrf.mxu0
        %v1982 = vadd.f32 0.0, %v1981
        %v1983 = vpop.f32.mrf.mxu0
        %1984 = vdwg.mxu0
        %v1985 = vadd.f32 %v1702, %v1979
        %v1986 = vadd.f32 %v1705, %v1982
        %1987 = vrot.lane.b32.xlu0 %v1135, 32
        %v1988 = vpop.permute.xlu0 %1987
        %1989 = vrot.lane.b32.xlu0 %v1137, 32
        %v1990 = vpop.permute.xlu0 %1989
        %v1992 = vsel %vm1157, %v1988, 0
        %v1995 = vsel %vm1157, %v1990, 0
        %1997 = vmatprep.subr.bf16.mxu0 0
        %1998 = vmatpush1.bf16.xpose.msra.mxu0 0
        %1999 = vmatprep.subr.bf16.mxu0 0
        %2000 = vmatpush1.bf16.xpose.msra.mxu0 0
        %2001 = vmatprep.subr.bf16.mxu0 0
        %2002 = vmatpush1.bf16.xpose.msra.mxu0 0
        %2003 = vmatprep.subr.bf16.mxu0 0
        %2004 = vmatpush1.bf16.xpose.msra.mxu0 0
        %2005 = vmatprep.subr.bf16.mxu0 0
        %2006 = vmatpush1.bf16.xpose.msra.mxu0 0
        %2007 = vmatprep.subr.bf16.mxu0 0
        %2008 = vmatpush1.bf16.xpose.msra.mxu0 0
        %2009 = vmatprep.subr.bf16.mxu0 0
        %2010 = vmatpush1.bf16.xpose.msra.mxu0 0
        %2011 = vmatprep.subr.bf16.mxu0 0
        %2012 = vmatpush1.bf16.xpose.msra.mxu0 %v1995
        %2013 = vmatprep.subr.bf16.mxu0 0
        %2014 = vmatpush2.bf16.xpose.msra.mxu0 0
        %2015 = vmatprep.subr.bf16.mxu0 0
        %2016 = vmatpush2.bf16.xpose.msra.mxu0 0
        %2017 = vmatprep.subr.bf16.mxu0 0
        %2018 = vmatpush2.bf16.xpose.msra.mxu0 0
        %2019 = vmatprep.subr.bf16.mxu0 0
        %2020 = vmatpush2.bf16.xpose.msra.mxu0 0
        %2021 = vmatprep.subr.bf16.mxu0 0
        %2022 = vmatpush2.bf16.xpose.msra.mxu0 0
        %2023 = vmatprep.subr.bf16.mxu0 0
        %2024 = vmatpush2.bf16.xpose.msra.mxu0 0
        %2025 = vmatprep.subr.bf16.mxu0 0
        %2026 = vmatpush2.bf16.xpose.msra.mxu0 0
        %2027 = vmatprep.subr.bf16.mxu0 0
        %2028 = vmatpush2.bf16.xpose.msra.mxu0 0
        %2029 = vmatprep.mubr.bf16.mxu0 0
        %2030 = vmatmul.mubr.bf16.gmra.mxu0 %v1992
        %v2031 = vpop.f32.mrf.mxu0
        %v2032 = vadd.f32 0.0, %v2031
        %v2033 = vpop.f32.mrf.mxu0
        %v2034 = vpop.f32.mrf.mxu0
        %v2035 = vpop.f32.mrf.mxu0
        %2036 = vdwg.mxu0
        %2037 = vrot.lane.b32.xlu0 %v1136, 32
        %v2038 = vpop.permute.xlu0 %2037
        %2039 = vrot.lane.b32.xlu0 %v1138, 32
        %v2040 = vpop.permute.xlu0 %2039
        %v2042 = vsel %vm1157, %v2038, 0
        %v2045 = vsel %vm1157, %v2040, 0
        %2047 = vmatprep.subr.bf16.mxu0 0
        %2048 = vmatpush1.bf16.xpose.msra.mxu0 0
        %2049 = vmatprep.subr.bf16.mxu0 0
        %2050 = vmatpush1.bf16.xpose.msra.mxu0 0
        %2051 = vmatprep.subr.bf16.mxu0 0
        %2052 = vmatpush1.bf16.xpose.msra.mxu0 0
        %2053 = vmatprep.subr.bf16.mxu0 0
        %2054 = vmatpush1.bf16.xpose.msra.mxu0 0
        %2055 = vmatprep.subr.bf16.mxu0 0
        %2056 = vmatpush1.bf16.xpose.msra.mxu0 0
        %2057 = vmatprep.subr.bf16.mxu0 0
        %2058 = vmatpush1.bf16.xpose.msra.mxu0 0
        %2059 = vmatprep.subr.bf16.mxu0 0
        %2060 = vmatpush1.bf16.xpose.msra.mxu0 0
        %2061 = vmatprep.subr.bf16.mxu0 0
        %2062 = vmatpush1.bf16.xpose.msra.mxu0 %v2045
        %2063 = vmatprep.subr.bf16.mxu0 0
        %2064 = vmatpush2.bf16.xpose.msra.mxu0 0
        %2065 = vmatprep.subr.bf16.mxu0 0
        %2066 = vmatpush2.bf16.xpose.msra.mxu0 0
        %2067 = vmatprep.subr.bf16.mxu0 0
        %2068 = vmatpush2.bf16.xpose.msra.mxu0 0
        %2069 = vmatprep.subr.bf16.mxu0 0
        %2070 = vmatpush2.bf16.xpose.msra.mxu0 0
        %2071 = vmatprep.subr.bf16.mxu0 0
        %2072 = vmatpush2.bf16.xpose.msra.mxu0 0
        %2073 = vmatprep.subr.bf16.mxu0 0
        %2074 = vmatpush2.bf16.xpose.msra.mxu0 0
        %2075 = vmatprep.subr.bf16.mxu0 0
        %2076 = vmatpush2.bf16.xpose.msra.mxu0 0
        %2077 = vmatprep.subr.bf16.mxu0 0
        %2078 = vmatpush2.bf16.xpose.msra.mxu0 0
        %2079 = vmatprep.mubr.bf16.mxu0 0
        %2080 = vmatmul.mubr.bf16.gmra.mxu0 %v2042
        %v2081 = vpop.f32.mrf.mxu0
        %v2082 = vadd.f32 0.0, %v2081
        %v2083 = vpop.f32.mrf.mxu0
        %v2084 = vpop.f32.mrf.mxu0
        %v2085 = vpop.f32.mrf.mxu0
        %2086 = vdwg.mxu0
        %v2087 = vsel %vm1250, %v2032, -inf
        %2088 = vmax.xlane.f32.xlu0 %v2087
        %v2089 = vpop.xlane.xlu0 %2088
        %v2090 = vsel %vm1250, %v2082, -inf
        %2091 = vmax.xlane.f32.xlu0 %v2090
        %v2092 = vpop.xlane.xlu0 %2091
        %v2093 = vsub.f32 %v2032, %v2089
        %v2094 = vsub.f32 %v2082, %v2092
        %v2095 = vmul.f32 %v2093, 1.442695
        %v2096 = vpow.pop %v2095
        %v2097 = vmul.f32 %v2094, 1.442695
        %v2098 = vpow.pop %v2097
        %v2099 = vsel %vm1250, %v2096, 0.0
        %2100 = vadd.xlane.f32.xlu0 %v2099
        %v2101 = vpop.xlane.xlu0 %2100
        %v2102 = vsel %vm1250, %v2098, 0.0
        %2103 = vadd.xlane.f32.xlu0 %v2102
        %v2104 = vpop.xlane.xlu0 %2103
        %v2105 = vrcp.pop %v2101
        %v2106 = vrcp.pop %v2104
        %v2107 = vmul.f32 %v2096, %v2105
        %v2108 = vmul.f32 %v2098, %v2106
        %v2109 = vpack.c.bf16 %v2107, %v2107
        %v2110 = vpack.c.bf16 %v2108, %v2108
        %2111 = vrot.lane.b32.xlu0 %v1139, 32
        %v2112 = vpop.permute.xlu0 %2111
        %v2114 = vsel %vm1250, %v2109, 0
        %v2117 = vsel %vm1278, %v2112, 0
        %2119 = vmatprep.subr.bf16.mxu0 0
        %2120 = vmatpush1.bf16.msra.mxu0 0
        %2121 = vmatprep.subr.bf16.mxu0 0
        %2122 = vmatpush1.bf16.msra.mxu0 0
        %2123 = vmatprep.subr.bf16.mxu0 0
        %2124 = vmatpush1.bf16.msra.mxu0 0
        %2125 = vmatprep.subr.bf16.mxu0 0
        %2126 = vmatpush1.bf16.msra.mxu0 0
        %2127 = vmatprep.subr.bf16.mxu0 0
        %2128 = vmatpush1.bf16.msra.mxu0 0
        %2129 = vmatprep.subr.bf16.mxu0 0
        %2130 = vmatpush1.bf16.msra.mxu0 0
        %2131 = vmatprep.subr.bf16.mxu0 0
        %2132 = vmatpush1.bf16.msra.mxu0 0
        %2133 = vmatprep.subr.bf16.mxu0 0
        %2134 = vmatpush1.bf16.msra.mxu0 %v2117
        %2135 = vmatprep.subr.bf16.mxu0 0
        %2136 = vmatpush2.bf16.msra.mxu0 0
        %2137 = vmatprep.subr.bf16.mxu0 0
        %2138 = vmatpush2.bf16.msra.mxu0 0
        %2139 = vmatprep.subr.bf16.mxu0 0
        %2140 = vmatpush2.bf16.msra.mxu0 0
        %2141 = vmatprep.subr.bf16.mxu0 0
        %2142 = vmatpush2.bf16.msra.mxu0 0
        %2143 = vmatprep.subr.bf16.mxu0 0
        %2144 = vmatpush2.bf16.msra.mxu0 0
        %2145 = vmatprep.subr.bf16.mxu0 0
        %2146 = vmatpush2.bf16.msra.mxu0 0
        %2147 = vmatprep.subr.bf16.mxu0 0
        %2148 = vmatpush2.bf16.msra.mxu0 0
        %2149 = vmatprep.subr.bf16.mxu0 0
        %2150 = vmatpush2.bf16.msra.mxu0 0
        %2151 = vmatprep.mubr.bf16.mxu0 0
        %2152 = vmatmul.mubr.bf16.gmra.mxu0 %v2114
        %v2153 = vpop.f32.mrf.mxu0
        %v2154 = vadd.f32 0.0, %v2153
        %v2155 = vpop.f32.mrf.mxu0
        %v2156 = vpop.f32.mrf.mxu0
        %v2157 = vpop.f32.mrf.mxu0
        %2158 = vdwg.mxu0
        %2159 = vrot.lane.b32.xlu0 %v1140, 32
        %v2160 = vpop.permute.xlu0 %2159
        %v2162 = vsel %vm1250, %v2110, 0
        %v2165 = vsel %vm1278, %v2160, 0
        %2167 = vmatprep.subr.bf16.mxu0 0
        %2168 = vmatpush1.bf16.msra.mxu0 0
        %2169 = vmatprep.subr.bf16.mxu0 0
        %2170 = vmatpush1.bf16.msra.mxu0 0
        %2171 = vmatprep.subr.bf16.mxu0 0
        %2172 = vmatpush1.bf16.msra.mxu0 0
        %2173 = vmatprep.subr.bf16.mxu0 0
        %2174 = vmatpush1.bf16.msra.mxu0 0
        %2175 = vmatprep.subr.bf16.mxu0 0
        %2176 = vmatpush1.bf16.msra.mxu0 0
        %2177 = vmatprep.subr.bf16.mxu0 0
        %2178 = vmatpush1.bf16.msra.mxu0 0
        %2179 = vmatprep.subr.bf16.mxu0 0
        %2180 = vmatpush1.bf16.msra.mxu0 0
        %2181 = vmatprep.subr.bf16.mxu0 0
        %2182 = vmatpush1.bf16.msra.mxu0 %v2165
        %2183 = vmatprep.subr.bf16.mxu0 0
        %2184 = vmatpush2.bf16.msra.mxu0 0
        %2185 = vmatprep.subr.bf16.mxu0 0
        %2186 = vmatpush2.bf16.msra.mxu0 0
        %2187 = vmatprep.subr.bf16.mxu0 0
        %2188 = vmatpush2.bf16.msra.mxu0 0
        %2189 = vmatprep.subr.bf16.mxu0 0
        %2190 = vmatpush2.bf16.msra.mxu0 0
        %2191 = vmatprep.subr.bf16.mxu0 0
        %2192 = vmatpush2.bf16.msra.mxu0 0
        %2193 = vmatprep.subr.bf16.mxu0 0
        %2194 = vmatpush2.bf16.msra.mxu0 0
        %2195 = vmatprep.subr.bf16.mxu0 0
        %2196 = vmatpush2.bf16.msra.mxu0 0
        %2197 = vmatprep.subr.bf16.mxu0 0
        %2198 = vmatpush2.bf16.msra.mxu0 0
        %2199 = vmatprep.mubr.bf16.mxu0 0
        %2200 = vmatmul.mubr.bf16.gmra.mxu0 %v2162
        %v2201 = vpop.f32.mrf.mxu0
        %v2202 = vadd.f32 0.0, %v2201
        %v2203 = vpop.f32.mrf.mxu0
        %v2204 = vpop.f32.mrf.mxu0
        %v2205 = vpop.f32.mrf.mxu0
        %2206 = vdwg.mxu0
        %v2207 = vpack.c.bf16 %v2202, %v2154
        %v2212 = vunpack.c.l.b16 %v1153
        %v2213 = vunpack.c.l.b16 %v1154
        %v2214 = vunpack.c.l.b16 %v1155
        %v2215 = vunpack.c.l.b16 %v1156
        %v2216 = vpack.c.b16 %v2213, %v2212
        %v2217 = vpack.c.b16 %v2215, %v2214
        %v2221 = vsel %vm1157, %v2207, 0
        %2223 = vmatprep.subr.bf16.mxu0 0
        %2224 = vmatpush1.bf16.msra.mxu0 0
        %2225 = vmatprep.subr.bf16.mxu0 0
        %2226 = vmatpush1.bf16.msra.mxu0 0
        %2227 = vmatprep.subr.bf16.mxu0 0
        %2228 = vmatpush1.bf16.msra.mxu0 0
        %2229 = vmatprep.subr.bf16.mxu0 0
        %2230 = vmatpush1.bf16.msra.mxu0 0
        %2231 = vmatprep.subr.bf16.mxu0 0
        %2232 = vmatpush1.bf16.msra.mxu0 0
        %2233 = vmatprep.subr.bf16.mxu0 0
        %2234 = vmatpush1.bf16.msra.mxu0 0
        %2235 = vmatprep.subr.bf16.mxu0 0
        %2236 = vmatpush1.bf16.msra.mxu0 %v2217
        %2237 = vmatprep.subr.bf16.mxu0 0
        %2238 = vmatpush1.bf16.msra.mxu0 %v2216
        %2239 = vmatprep.subr.bf16.mxu0 0
        %2240 = vmatpush2.bf16.msra.mxu0 0
        %2241 = vmatprep.subr.bf16.mxu0 0
        %2242 = vmatpush2.bf16.msra.mxu0 0
        %2243 = vmatprep.subr.bf16.mxu0 0
        %2244 = vmatpush2.bf16.msra.mxu0 0
        %2245 = vmatprep.subr.bf16.mxu0 0
        %2246 = vmatpush2.bf16.msra.mxu0 0
        %2247 = vmatprep.subr.bf16.mxu0 0
        %2248 = vmatpush2.bf16.msra.mxu0 0
        %2249 = vmatprep.subr.bf16.mxu0 0
        %2250 = vmatpush2.bf16.msra.mxu0 0
        %2251 = vmatprep.subr.bf16.mxu0 0
        %2252 = vmatpush2.bf16.msra.mxu0 0
        %2253 = vmatprep.subr.bf16.mxu0 0
        %2254 = vmatpush2.bf16.msra.mxu0 0
        %2255 = vmatprep.mubr.bf16.mxu0 0
        %2256 = vmatmul.mubr.bf16.gmra.mxu0 %v2221
        %v2257 = vpop.f32.mrf.mxu0
        %v2258 = vadd.f32 0.0, %v2257
        %v2259 = vpop.f32.mrf.mxu0
        %v2260 = vpop.f32.mrf.mxu0
        %v2261 = vadd.f32 0.0, %v2260
        %v2262 = vpop.f32.mrf.mxu0
        %2263 = vdwg.mxu0
        %v2264 = vadd.f32 %v1985, %v2258
        %v2265 = vadd.f32 %v1986, %v2261
        %v2266 = vadd.f32 %v828, %v2264
        %v2267 = vadd.f32 %v829, %v2265
        %v2268 = vld [vmem:[%s810] sm:$0x1]
        %v2270 = vlaneseq
        %v2271 = vshrl.u32 %v2270, 7
        %v2272 = vsub.s32 0, %v2271
        %v2273 = vrot.slane %v2268, %v2272
        %v2275 = vadd.f32 %v2266, %v2273
        %v2276 = vadd.f32 %v2267, %v2273
        %v2277 = vld [vmem:[%s684] sm:$0x1]
        %v2278 = vld [vmem:[%s692] sm:$0x1]
        %2279 = vadd.xlane.f32.xlu0 %v2275
        %v2280 = vpop.xlane.xlu0 %2279
        %2281 = vadd.xlane.f32.xlu0 %v2276
        %v2282 = vpop.xlane.xlu0 %2281
        %v2283 = vmul.f32 %v2280, %v836
        %v2284 = vmul.f32 %v2282, %v836
        %v2285 = vsub.f32 %v2275, %v2283
        %v2286 = vsub.f32 %v2276, %v2284
        %v2287 = vmul.f32 %v2285, %v2285
        %v2288 = vmul.f32 %v2286, %v2286
        %2289 = vadd.xlane.f32.xlu0 %v2287
        %v2290 = vpop.xlane.xlu0 %2289
        %2291 = vadd.xlane.f32.xlu0 %v2288
        %v2292 = vpop.xlane.xlu0 %2291
        %v2293 = vmul.f32 %v2290, %v836
        %v2294 = vmul.f32 %v2292, %v836
        %v2295 = vadd.f32 %v2293, 1e-05
        %v2296 = vadd.f32 %v2294, 1e-05
        %v2297 = vrsqrt.pop %v2295
        %v2298 = vrsqrt.pop %v2296
        %v2299 = vmul.f32 %v2285, %v2297
        %v2300 = vmul.f32 %v2286, %v2298
        %v2302 = vlaneseq
        %v2303 = vshrl.u32 %v2302, 7
        %v2304 = vsub.s32 0, %v2303
        %v2305 = vrot.slane %v2277, %v2304
        %v2307 = vmul.f32 %v2299, %v2305
        %v2308 = vmul.f32 %v2300, %v2305
        %v2310 = vlaneseq
        %v2311 = vshrl.u32 %v2310, 7
        %v2312 = vsub.s32 0, %v2311
        %v2313 = vrot.slane %v2278, %v2312
        %v2315 = vadd.f32 %v2307, %v2313
        %v2316 = vadd.f32 %v2308, %v2313
        %v2317 = vpack.c.bf16 %v2316, %v2315
        %v2318 = vld [vmem:[%s701] sm:$0xff]
        %v2319 = vld [vmem:[%s701 + $0x8] sm:$0xff]
        %v2320 = vld [vmem:[%s701 + $0x10] sm:$0xff]
        %v2321 = vld [vmem:[%s701 + $0x18] sm:$0xff]
        %v2322 = vld [vmem:[%s701 + $0x20] sm:$0xff]
        %v2323 = vld [vmem:[%s701 + $0x28] sm:$0xff]
        %v2324 = vld [vmem:[%s701 + $0x30] sm:$0xff]
        %v2325 = vld [vmem:[%s701 + $0x38] sm:$0xff]
        %v2326 = vld [vmem:[%s701 + $0x40] sm:$0xff]
        %v2327 = vld [vmem:[%s701 + $0x48] sm:$0xff]
        %v2328 = vld [vmem:[%s701 + $0x50] sm:$0xff]
        %v2329 = vld [vmem:[%s701 + $0x58] sm:$0xff]
        %v2330 = vld [vmem:[%s701 + $0x60] sm:$0xff]
        %v2331 = vld [vmem:[%s701 + $0x68] sm:$0xff]
        %v2332 = vld [vmem:[%s701 + $0x70] sm:$0xff]
        %v2333 = vld [vmem:[%s701 + $0x78] sm:$0xff]
        %v2334 = vld [vmem:[%s701 + $0x80] sm:$0xff]
        %v2335 = vld [vmem:[%s701 + $0x88] sm:$0xff]
        %v2336 = vld [vmem:[%s701 + $0x90] sm:$0xff]
        %v2337 = vld [vmem:[%s701 + $0x98] sm:$0xff]
        %v2338 = vld [vmem:[%s701 + $0xa0] sm:$0xff]
        %v2339 = vld [vmem:[%s701 + $0xa8] sm:$0xff]
        %v2340 = vld [vmem:[%s701 + $0xb0] sm:$0xff]
        %v2341 = vld [vmem:[%s701 + $0xb8] sm:$0xff]
        %v2342 = vld [vmem:[%s701 + $0xc0] sm:$0xff]
        %v2343 = vld [vmem:[%s701 + $0xc8] sm:$0xff]
        %v2344 = vld [vmem:[%s701 + $0xd0] sm:$0xff]
        %v2345 = vld [vmem:[%s701 + $0xd8] sm:$0xff]
        %v2346 = vld [vmem:[%s701 + $0xe0] sm:$0xff]
        %v2347 = vld [vmem:[%s701 + $0xe8] sm:$0xff]
        %v2348 = vld [vmem:[%s701 + $0xf0] sm:$0xff]
        %v2349 = vld [vmem:[%s701 + $0xf8] sm:$0xff]
        %v2350 = vld [vmem:[%s814] sm:$0xf]
        %v2352 = vlaneseq
        %v2353 = vshrl.u32 %v2352, 7
        %v2354 = vsub.s32 0, %v2353
        %v2355 = vrot.slane %v2350, %v2354
        %v2356 = vlaneseq
        %v2357 = vshrl.u32 %v2356, 7
        %v2358 = vsub.s32 1, %v2357
        %v2359 = vrot.slane %v2350, %v2358
        %v2360 = vlaneseq
        %v2361 = vshrl.u32 %v2360, 7
        %v2362 = vsub.s32 2, %v2361
        %v2363 = vrot.slane %v2350, %v2362
        %v2364 = vlaneseq
        %v2365 = vshrl.u32 %v2364, 7
        %v2366 = vsub.s32 3, %v2365
        %v2367 = vrot.slane %v2350, %v2366
        %v2404 = vunpack.c.l.b16 %v2318
        %v2405 = vunpack.c.h.b16 %v2318
        %v2406 = vunpack.c.l.b16 %v2319
        %v2407 = vunpack.c.h.b16 %v2319
        %v2408 = vunpack.c.l.b16 %v2320
        %v2409 = vunpack.c.h.b16 %v2320
        %v2410 = vunpack.c.l.b16 %v2321
        %v2411 = vunpack.c.h.b16 %v2321
        %v2412 = vunpack.c.l.b16 %v2322
        %v2413 = vunpack.c.h.b16 %v2322
        %v2414 = vunpack.c.l.b16 %v2323
        %v2415 = vunpack.c.h.b16 %v2323
        %v2416 = vunpack.c.l.b16 %v2324
        %v2417 = vunpack.c.h.b16 %v2324
        %v2418 = vunpack.c.l.b16 %v2325
        %v2419 = vunpack.c.h.b16 %v2325
        %v2420 = vunpack.c.l.b16 %v2326
        %v2421 = vunpack.c.h.b16 %v2326
        %v2422 = vunpack.c.l.b16 %v2327
        %v2423 = vunpack.c.h.b16 %v2327
        %v2424 = vunpack.c.l.b16 %v2328
        %v2425 = vunpack.c.h.b16 %v2328
        %v2426 = vunpack.c.l.b16 %v2329
        %v2427 = vunpack.c.h.b16 %v2329
        %v2428 = vunpack.c.l.b16 %v2330
        %v2429 = vunpack.c.h.b16 %v2330
        %v2430 = vunpack.c.l.b16 %v2331
        %v2431 = vunpack.c.h.b16 %v2331
        %v2432 = vunpack.c.l.b16 %v2332
        %v2433 = vunpack.c.h.b16 %v2332
        %v2434 = vunpack.c.l.b16 %v2333
        %v2435 = vunpack.c.h.b16 %v2333
        %v2436 = vunpack.c.l.b16 %v2334
        %v2437 = vunpack.c.h.b16 %v2334
        %v2438 = vunpack.c.l.b16 %v2335
        %v2439 = vunpack.c.h.b16 %v2335
        %v2440 = vunpack.c.l.b16 %v2336
        %v2441 = vunpack.c.h.b16 %v2336
        %v2442 = vunpack.c.l.b16 %v2337
        %v2443 = vunpack.c.h.b16 %v2337
        %v2444 = vunpack.c.l.b16 %v2338
        %v2445 = vunpack.c.h.b16 %v2338
        %v2446 = vunpack.c.l.b16 %v2339
        %v2447 = vunpack.c.h.b16 %v2339
        %v2448 = vunpack.c.l.b16 %v2340
        %v2449 = vunpack.c.h.b16 %v2340
        %v2450 = vunpack.c.l.b16 %v2341
        %v2451 = vunpack.c.h.b16 %v2341
        %v2452 = vunpack.c.l.b16 %v2342
        %v2453 = vunpack.c.h.b16 %v2342
        %v2454 = vunpack.c.l.b16 %v2343
        %v2455 = vunpack.c.h.b16 %v2343
        %v2456 = vunpack.c.l.b16 %v2344
        %v2457 = vunpack.c.h.b16 %v2344
        %v2458 = vunpack.c.l.b16 %v2345
        %v2459 = vunpack.c.h.b16 %v2345
        %v2460 = vunpack.c.l.b16 %v2346
        %v2461 = vunpack.c.h.b16 %v2346
        %v2462 = vunpack.c.l.b16 %v2347
        %v2463 = vunpack.c.h.b16 %v2347
        %v2464 = vunpack.c.l.b16 %v2348
        %v2465 = vunpack.c.h.b16 %v2348
        %v2466 = vunpack.c.l.b16 %v2349
        %v2467 = vunpack.c.h.b16 %v2349
        %v2468 = vpack.c.b16 %v2408, %v2404
        %v2469 = vpack.c.b16 %v2409, %v2405
        %v2470 = vpack.c.b16 %v2410, %v2406
        %v2471 = vpack.c.b16 %v2411, %v2407
        %v2472 = vpack.c.b16 %v2416, %v2412
        %v2473 = vpack.c.b16 %v2417, %v2413
        %v2474 = vpack.c.b16 %v2418, %v2414
        %v2475 = vpack.c.b16 %v2419, %v2415
        %v2476 = vpack.c.b16 %v2424, %v2420
        %v2477 = vpack.c.b16 %v2425, %v2421
        %v2478 = vpack.c.b16 %v2426, %v2422
        %v2479 = vpack.c.b16 %v2427, %v2423
        %v2480 = vpack.c.b16 %v2432, %v2428
        %v2481 = vpack.c.b16 %v2433, %v2429
        %v2482 = vpack.c.b16 %v2434, %v2430
        %v2483 = vpack.c.b16 %v2435, %v2431
        %v2484 = vpack.c.b16 %v2440, %v2436
        %v2485 = vpack.c.b16 %v2441, %v2437
        %v2486 = vpack.c.b16 %v2442, %v2438
        %v2487 = vpack.c.b16 %v2443, %v2439
        %v2488 = vpack.c.b16 %v2448, %v2444
        %v2489 = vpack.c.b16 %v2449, %v2445
        %v2490 = vpack.c.b16 %v2450, %v2446
        %v2491 = vpack.c.b16 %v2451, %v2447
        %v2492 = vpack.c.b16 %v2456, %v2452
        %v2493 = vpack.c.b16 %v2457, %v2453
        %v2494 = vpack.c.b16 %v2458, %v2454
        %v2495 = vpack.c.b16 %v2459, %v2455
        %v2496 = vpack.c.b16 %v2464, %v2460
        %v2497 = vpack.c.b16 %v2465, %v2461
        %v2498 = vpack.c.b16 %v2466, %v2462
        %v2499 = vpack.c.b16 %v2467, %v2463
        %2532 = vmatprep.subr.bf16.mxu0 %v2497
        %2533 = vmatpush1.bf16.msra.mxu0 %v2496
        %2534 = vmatprep.subr.bf16.mxu0 %v2493
        %2535 = vmatpush1.bf16.msra.mxu0 %v2492
        %2536 = vmatprep.subr.bf16.mxu0 %v2489
        %2537 = vmatpush1.bf16.msra.mxu0 %v2488
        %2538 = vmatprep.subr.bf16.mxu0 %v2485
        %2539 = vmatpush1.bf16.msra.mxu0 %v2484
        %2540 = vmatprep.subr.bf16.mxu0 %v2481
        %2541 = vmatpush1.bf16.msra.mxu0 %v2480
        %2542 = vmatprep.subr.bf16.mxu0 %v2477
        %2543 = vmatpush1.bf16.msra.mxu0 %v2476
        %2544 = vmatprep.subr.bf16.mxu0 %v2473
        %2545 = vmatpush1.bf16.msra.mxu0 %v2472
        %2546 = vmatprep.subr.bf16.mxu0 %v2469
        %2547 = vmatpush1.bf16.msra.mxu0 %v2468
        %2548 = vmatprep.subr.bf16.mxu0 0
        %2549 = vmatpush2.bf16.msra.mxu0 0
        %2550 = vmatprep.subr.bf16.mxu0 0
        %2551 = vmatpush2.bf16.msra.mxu0 0
        %2552 = vmatprep.subr.bf16.mxu0 0
        %2553 = vmatpush2.bf16.msra.mxu0 0
        %2554 = vmatprep.subr.bf16.mxu0 0
        %2555 = vmatpush2.bf16.msra.mxu0 0
        %2556 = vmatprep.subr.bf16.mxu0 0
        %2557 = vmatpush2.bf16.msra.mxu0 0
        %2558 = vmatprep.subr.bf16.mxu0 0
        %2559 = vmatpush2.bf16.msra.mxu0 0
        %2560 = vmatprep.subr.bf16.mxu0 0
        %2561 = vmatpush2.bf16.msra.mxu0 0
        %2562 = vmatprep.subr.bf16.mxu0 0
        %2563 = vmatpush2.bf16.msra.mxu0 0
        %2564 = vmatprep.mubr.bf16.mxu0 0
        %2565 = vmatmul.mubr.bf16.gmra.mxu0 %v2317
        %v2566 = vpop.f32.mrf.mxu0
        %v2567 = vadd.f32 %v2355, %v2566
        %v2568 = vpop.f32.mrf.mxu0
        %v2569 = vadd.f32 %v2359, %v2568
        %v2570 = vpop.f32.mrf.mxu0
        %v2571 = vadd.f32 %v2355, %v2570
        %v2572 = vpop.f32.mrf.mxu0
        %v2573 = vadd.f32 %v2359, %v2572
        %2574 = vdwg.mxu0
        %2575 = vmatprep.subr.bf16.mxu0 %v2499
        %2576 = vmatpush1.bf16.msra.mxu0 %v2498
        %2577 = vmatprep.subr.bf16.mxu0 %v2495
        %2578 = vmatpush1.bf16.msra.mxu0 %v2494
        %2579 = vmatprep.subr.bf16.mxu0 %v2491
        %2580 = vmatpush1.bf16.msra.mxu0 %v2490
        %2581 = vmatprep.subr.bf16.mxu0 %v2487
        %2582 = vmatpush1.bf16.msra.mxu0 %v2486
        %2583 = vmatprep.subr.bf16.mxu0 %v2483
        %2584 = vmatpush1.bf16.msra.mxu0 %v2482
        %2585 = vmatprep.subr.bf16.mxu0 %v2479
        %2586 = vmatpush1.bf16.msra.mxu0 %v2478
        %2587 = vmatprep.subr.bf16.mxu0 %v2475
        %2588 = vmatpush1.bf16.msra.mxu0 %v2474
        %2589 = vmatprep.subr.bf16.mxu0 %v2471
        %2590 = vmatpush1.bf16.msra.mxu0 %v2470
        %2591 = vmatprep.subr.bf16.mxu0 0
        %2592 = vmatpush2.bf16.msra.mxu0 0
        %2593 = vmatprep.subr.bf16.mxu0 0
        %2594 = vmatpush2.bf16.msra.mxu0 0
        %2595 = vmatprep.subr.bf16.mxu0 0
        %2596 = vmatpush2.bf16.msra.mxu0 0
        %2597 = vmatprep.subr.bf16.mxu0 0
        %2598 = vmatpush2.bf16.msra.mxu0 0
        %2599 = vmatprep.subr.bf16.mxu0 0
        %2600 = vmatpush2.bf16.msra.mxu0 0
        %2601 = vmatprep.subr.bf16.mxu0 0
        %2602 = vmatpush2.bf16.msra.mxu0 0
        %2603 = vmatprep.subr.bf16.mxu0 0
        %2604 = vmatpush2.bf16.msra.mxu0 0
        %2605 = vmatprep.subr.bf16.mxu0 0
        %2606 = vmatpush2.bf16.msra.mxu0 0
        %2607 = vmatprep.mubr.bf16.mxu0 0
        %2608 = vmatmul.mubr.bf16.gmra.mxu0 %v2317
        %v2609 = vpop.f32.mrf.mxu0
        %v2610 = vadd.f32 %v2363, %v2609
        %v2611 = vpop.f32.mrf.mxu0
        %v2612 = vadd.f32 %v2367, %v2611
        %v2613 = vpop.f32.mrf.mxu0
        %v2614 = vadd.f32 %v2363, %v2613
        %v2615 = vpop.f32.mrf.mxu0
        %v2616 = vadd.f32 %v2367, %v2615
        %2617 = vdwg.mxu0
        %v2618 = vmul.f32 %v2567, 1.702
        %v2619 = vmul.f32 %v2569, 1.702
        %v2620 = vmul.f32 %v2610, 1.702
        %v2621 = vmul.f32 %v2612, 1.702
        %v2622 = vmul.f32 %v2571, 1.702
        %v2623 = vmul.f32 %v2573, 1.702
        %v2624 = vmul.f32 %v2614, 1.702
        %v2625 = vmul.f32 %v2616, 1.702
        %v2626 = vxor.u32 %v2618, 2147483648
        %v2627 = vxor.u32 %v2619, 2147483648
        %v2628 = vxor.u32 %v2620, 2147483648
        %v2629 = vxor.u32 %v2621, 2147483648
        %v2630 = vxor.u32 %v2622, 2147483648
        %v2631 = vxor.u32 %v2623, 2147483648
        %v2632 = vxor.u32 %v2624, 2147483648
        %v2633 = vxor.u32 %v2625, 2147483648
        %v2634 = vmul.f32 %v2626, 1.442695
        %v2635 = vpow.pop %v2634
        %v2636 = vmul.f32 %v2627, 1.442695
        %v2637 = vpow.pop %v2636
        %v2638 = vmul.f32 %v2628, 1.442695
        %v2639 = vpow.pop %v2638
        %v2640 = vmul.f32 %v2629, 1.442695
        %v2641 = vpow.pop %v2640
        %v2642 = vmul.f32 %v2630, 1.442695
        %v2643 = vpow.pop %v2642
        %v2644 = vmul.f32 %v2631, 1.442695
        %v2645 = vpow.pop %v2644
        %v2646 = vmul.f32 %v2632, 1.442695
        %v2647 = vpow.pop %v2646
        %v2648 = vmul.f32 %v2633, 1.442695
        %v2649 = vpow.pop %v2648
        %v2650 = vadd.f32 %v2635, 1.0
        %v2651 = vadd.f32 %v2637, 1.0
        %v2652 = vadd.f32 %v2639, 1.0
        %v2653 = vadd.f32 %v2641, 1.0
        %v2654 = vadd.f32 %v2643, 1.0
        %v2655 = vadd.f32 %v2645, 1.0
        %v2656 = vadd.f32 %v2647, 1.0
        %v2657 = vadd.f32 %v2649, 1.0
        %v2658 = vrcp.pop %v2650
        %v2659 = vmul.f32 1.0, %v2658
        %v2660 = vrcp.pop %v2651
        %v2661 = vmul.f32 1.0, %v2660
        %v2662 = vrcp.pop %v2652
        %v2663 = vmul.f32 1.0, %v2662
        %v2664 = vrcp.pop %v2653
        %v2665 = vmul.f32 1.0, %v2664
        %v2666 = vrcp.pop %v2654
        %v2667 = vmul.f32 1.0, %v2666
        %v2668 = vrcp.pop %v2655
        %v2669 = vmul.f32 1.0, %v2668
        %v2670 = vrcp.pop %v2656
        %v2671 = vmul.f32 1.0, %v2670
        %v2672 = vrcp.pop %v2657
        %v2673 = vmul.f32 1.0, %v2672
        %v2674 = vmul.f32 %v2567, %v2659
        %v2675 = vmul.f32 %v2569, %v2661
        %v2676 = vmul.f32 %v2610, %v2663
        %v2677 = vmul.f32 %v2612, %v2665
        %v2678 = vmul.f32 %v2571, %v2667
        %v2679 = vmul.f32 %v2573, %v2669
        %v2680 = vmul.f32 %v2614, %v2671
        %v2681 = vmul.f32 %v2616, %v2673
        %v2682 = vpack.c.bf16 %v2678, %v2674
        %v2683 = vpack.c.bf16 %v2679, %v2675
        %v2684 = vpack.c.bf16 %v2680, %v2676
        %v2685 = vpack.c.bf16 %v2681, %v2677
        %v2686 = vld [vmem:[%s710] sm:$0xf]
        %v2687 = vld [vmem:[%s710 + $0x4] sm:$0xf]
        %v2688 = vld [vmem:[%s710 + $0x8] sm:$0xf]
        %v2689 = vld [vmem:[%s710 + $0xc] sm:$0xf]
        %v2690 = vld [vmem:[%s710 + $0x10] sm:$0xf]
        %v2691 = vld [vmem:[%s710 + $0x14] sm:$0xf]
        %v2692 = vld [vmem:[%s710 + $0x18] sm:$0xf]
        %v2693 = vld [vmem:[%s710 + $0x1c] sm:$0xf]
        %v2694 = vld [vmem:[%s710 + $0x20] sm:$0xf]
        %v2695 = vld [vmem:[%s710 + $0x24] sm:$0xf]
        %v2696 = vld [vmem:[%s710 + $0x28] sm:$0xf]
        %v2697 = vld [vmem:[%s710 + $0x2c] sm:$0xf]
        %v2698 = vld [vmem:[%s710 + $0x30] sm:$0xf]
        %v2699 = vld [vmem:[%s710 + $0x34] sm:$0xf]
        %v2700 = vld [vmem:[%s710 + $0x38] sm:$0xf]
        %v2701 = vld [vmem:[%s710 + $0x3c] sm:$0xf]
        %v2702 = vld [vmem:[%s710 + $0x40] sm:$0xf]
        %v2703 = vld [vmem:[%s710 + $0x44] sm:$0xf]
        %v2704 = vld [vmem:[%s710 + $0x48] sm:$0xf]
        %v2705 = vld [vmem:[%s710 + $0x4c] sm:$0xf]
        %v2706 = vld [vmem:[%s710 + $0x50] sm:$0xf]
        %v2707 = vld [vmem:[%s710 + $0x54] sm:$0xf]
        %v2708 = vld [vmem:[%s710 + $0x58] sm:$0xf]
        %v2709 = vld [vmem:[%s710 + $0x5c] sm:$0xf]
        %v2710 = vld [vmem:[%s710 + $0x60] sm:$0xf]
        %v2711 = vld [vmem:[%s710 + $0x64] sm:$0xf]
        %v2712 = vld [vmem:[%s710 + $0x68] sm:$0xf]
        %v2713 = vld [vmem:[%s710 + $0x6c] sm:$0xf]
        %v2714 = vld [vmem:[%s710 + $0x70] sm:$0xf]
        %v2715 = vld [vmem:[%s710 + $0x74] sm:$0xf]
        %v2716 = vld [vmem:[%s710 + $0x78] sm:$0xf]
        %v2717 = vld [vmem:[%s710 + $0x7c] sm:$0xf]
        %v2718 = vld [vmem:[%s710 + $0x80] sm:$0xf]
        %v2719 = vld [vmem:[%s710 + $0x84] sm:$0xf]
        %v2720 = vld [vmem:[%s710 + $0x88] sm:$0xf]
        %v2721 = vld [vmem:[%s710 + $0x8c] sm:$0xf]
        %v2722 = vld [vmem:[%s710 + $0x90] sm:$0xf]
        %v2723 = vld [vmem:[%s710 + $0x94] sm:$0xf]
        %v2724 = vld [vmem:[%s710 + $0x98] sm:$0xf]
        %v2725 = vld [vmem:[%s710 + $0x9c] sm:$0xf]
        %v2726 = vld [vmem:[%s710 + $0xa0] sm:$0xf]
        %v2727 = vld [vmem:[%s710 + $0xa4] sm:$0xf]
        %v2728 = vld [vmem:[%s710 + $0xa8] sm:$0xf]
        %v2729 = vld [vmem:[%s710 + $0xac] sm:$0xf]
        %v2730 = vld [vmem:[%s710 + $0xb0] sm:$0xf]
        %v2731 = vld [vmem:[%s710 + $0xb4] sm:$0xf]
        %v2732 = vld [vmem:[%s710 + $0xb8] sm:$0xf]
        %v2733 = vld [vmem:[%s710 + $0xbc] sm:$0xf]
        %v2734 = vld [vmem:[%s710 + $0xc0] sm:$0xf]
        %v2735 = vld [vmem:[%s710 + $0xc4] sm:$0xf]
        %v2736 = vld [vmem:[%s710 + $0xc8] sm:$0xf]
        %v2737 = vld [vmem:[%s710 + $0xcc] sm:$0xf]
        %v2738 = vld [vmem:[%s710 + $0xd0] sm:$0xf]
        %v2739 = vld [vmem:[%s710 + $0xd4] sm:$0xf]
        %v2740 = vld [vmem:[%s710 + $0xd8] sm:$0xf]
        %v2741 = vld [vmem:[%s710 + $0xdc] sm:$0xf]
        %v2742 = vld [vmem:[%s710 + $0xe0] sm:$0xf]
        %v2743 = vld [vmem:[%s710 + $0xe4] sm:$0xf]
        %v2744 = vld [vmem:[%s710 + $0xe8] sm:$0xf]
        %v2745 = vld [vmem:[%s710 + $0xec] sm:$0xf]
        %v2746 = vld [vmem:[%s710 + $0xf0] sm:$0xf]
        %v2747 = vld [vmem:[%s710 + $0xf4] sm:$0xf]
        %v2748 = vld [vmem:[%s710 + $0xf8] sm:$0xf]
        %v2749 = vld [vmem:[%s710 + $0xfc] sm:$0xf]
        %v2750 = vld [vmem:[%s817] sm:$0x1]
        %v2752 = vlaneseq
        %v2753 = vshrl.u32 %v2752, 7
        %v2754 = vsub.s32 0, %v2753
        %v2755 = vrot.slane %v2750, %v2754
        %v2821 = vunpack.c.l.b16 %v2686
        %v2822 = vunpack.c.l.b16 %v2687
        %v2823 = vunpack.c.l.b16 %v2688
        %v2824 = vunpack.c.l.b16 %v2689
        %v2825 = vunpack.c.l.b16 %v2690
        %v2826 = vunpack.c.l.b16 %v2691
        %v2827 = vunpack.c.l.b16 %v2692
        %v2828 = vunpack.c.l.b16 %v2693
        %v2829 = vunpack.c.l.b16 %v2694
        %v2830 = vunpack.c.l.b16 %v2695
        %v2831 = vunpack.c.l.b16 %v2696
        %v2832 = vunpack.c.l.b16 %v2697
        %v2833 = vunpack.c.l.b16 %v2698
        %v2834 = vunpack.c.l.b16 %v2699
        %v2835 = vunpack.c.l.b16 %v2700
        %v2836 = vunpack.c.l.b16 %v2701
        %v2837 = vunpack.c.l.b16 %v2702
        %v2838 = vunpack.c.l.b16 %v2703
        %v2839 = vunpack.c.l.b16 %v2704
        %v2840 = vunpack.c.l.b16 %v2705
        %v2841 = vunpack.c.l.b16 %v2706
        %v2842 = vunpack.c.l.b16 %v2707
        %v2843 = vunpack.c.l.b16 %v2708
        %v2844 = vunpack.c.l.b16 %v2709
        %v2845 = vunpack.c.l.b16 %v2710
        %v2846 = vunpack.c.l.b16 %v2711
        %v2847 = vunpack.c.l.b16 %v2712
        %v2848 = vunpack.c.l.b16 %v2713
        %v2849 = vunpack.c.l.b16 %v2714
        %v2850 = vunpack.c.l.b16 %v2715
        %v2851 = vunpack.c.l.b16 %v2716
        %v2852 = vunpack.c.l.b16 %v2717
        %v2853 = vunpack.c.l.b16 %v2718
        %v2854 = vunpack.c.l.b16 %v2719
        %v2855 = vunpack.c.l.b16 %v2720
        %v2856 = vunpack.c.l.b16 %v2721
        %v2857 = vunpack.c.l.b16 %v2722
        %v2858 = vunpack.c.l.b16 %v2723
        %v2859 = vunpack.c.l.b16 %v2724
        %v2860 = vunpack.c.l.b16 %v2725
        %v2861 = vunpack.c.l.b16 %v2726
        %v2862 = vunpack.c.l.b16 %v2727
        %v2863 = vunpack.c.l.b16 %v2728
        %v2864 = vunpack.c.l.b16 %v2729
        %v2865 = vunpack.c.l.b16 %v2730
        %v2866 = vunpack.c.l.b16 %v2731
        %v2867 = vunpack.c.l.b16 %v2732
        %v2868 = vunpack.c.l.b16 %v2733
        %v2869 = vunpack.c.l.b16 %v2734
        %v2870 = vunpack.c.l.b16 %v2735
        %v2871 = vunpack.c.l.b16 %v2736
        %v2872 = vunpack.c.l.b16 %v2737
        %v2873 = vunpack.c.l.b16 %v2738
        %v2874 = vunpack.c.l.b16 %v2739
        %v2875 = vunpack.c.l.b16 %v2740
        %v2876 = vunpack.c.l.b16 %v2741
        %v2877 = vunpack.c.l.b16 %v2742
        %v2878 = vunpack.c.l.b16 %v2743
        %v2879 = vunpack.c.l.b16 %v2744
        %v2880 = vunpack.c.l.b16 %v2745
        %v2881 = vunpack.c.l.b16 %v2746
        %v2882 = vunpack.c.l.b16 %v2747
        %v2883 = vunpack.c.l.b16 %v2748
        %v2884 = vunpack.c.l.b16 %v2749
        %v2885 = vpack.c.b16 %v2822, %v2821
        %v2886 = vpack.c.b16 %v2824, %v2823
        %v2887 = vpack.c.b16 %v2826, %v2825
        %v2888 = vpack.c.b16 %v2828, %v2827
        %v2889 = vpack.c.b16 %v2830, %v2829
        %v2890 = vpack.c.b16 %v2832, %v2831
        %v2891 = vpack.c.b16 %v2834, %v2833
        %v2892 = vpack.c.b16 %v2836, %v2835
        %v2893 = vpack.c.b16 %v2838, %v2837
        %v2894 = vpack.c.b16 %v2840, %v2839
        %v2895 = vpack.c.b16 %v2842, %v2841
        %v2896 = vpack.c.b16 %v2844, %v2843
        %v2897 = vpack.c.b16 %v2846, %v2845
        %v2898 = vpack.c.b16 %v2848, %v2847
        %v2899 = vpack.c.b16 %v2850, %v2849
        %v2900 = vpack.c.b16 %v2852, %v2851
        %v2901 = vpack.c.b16 %v2854, %v2853
        %v2902 = vpack.c.b16 %v2856, %v2855
        %v2903 = vpack.c.b16 %v2858, %v2857
        %v2904 = vpack.c.b16 %v2860, %v2859
        %v2905 = vpack.c.b16 %v2862, %v2861
        %v2906 = vpack.c.b16 %v2864, %v2863
        %v2907 = vpack.c.b16 %v2866, %v2865
        %v2908 = vpack.c.b16 %v2868, %v2867
        %v2909 = vpack.c.b16 %v2870, %v2869
        %v2910 = vpack.c.b16 %v2872, %v2871
        %v2911 = vpack.c.b16 %v2874, %v2873
        %v2912 = vpack.c.b16 %v2876, %v2875
        %v2913 = vpack.c.b16 %v2878, %v2877
        %v2914 = vpack.c.b16 %v2880, %v2879
        %v2915 = vpack.c.b16 %v2882, %v2881
        %v2916 = vpack.c.b16 %v2884, %v2883
        %2949 = vmatprep.subr.bf16.mxu0 0
        %2950 = vmatpush1.bf16.msra.mxu0 %v2892
        %2951 = vmatprep.subr.bf16.mxu0 0
        %2952 = vmatpush1.bf16.msra.mxu0 %v2891
        %2953 = vmatprep.subr.bf16.mxu0 0
        %2954 = vmatpush1.bf16.msra.mxu0 %v2890
        %2955 = vmatprep.subr.bf16.mxu0 0
        %2956 = vmatpush1.bf16.msra.mxu0 %v2889
        %2957 = vmatprep.subr.bf16.mxu0 0
        %2958 = vmatpush1.bf16.msra.mxu0 %v2888
        %2959 = vmatprep.subr.bf16.mxu0 0
        %2960 = vmatpush1.bf16.msra.mxu0 %v2887
        %2961 = vmatprep.subr.bf16.mxu0 0
        %2962 = vmatpush1.bf16.msra.mxu0 %v2886
        %2963 = vmatprep.subr.bf16.mxu0 0
        %2964 = vmatpush1.bf16.msra.mxu0 %v2885
        %2965 = vmatprep.subr.bf16.mxu0 0
        %2966 = vmatpush2.bf16.msra.mxu0 %v2900
        %2967 = vmatprep.subr.bf16.mxu0 0
        %2968 = vmatpush2.bf16.msra.mxu0 %v2899
        %2969 = vmatprep.subr.bf16.mxu0 0
        %2970 = vmatpush2.bf16.msra.mxu0 %v2898
        %2971 = vmatprep.subr.bf16.mxu0 0
        %2972 = vmatpush2.bf16.msra.mxu0 %v2897
        %2973 = vmatprep.subr.bf16.mxu0 0
        %2974 = vmatpush2.bf16.msra.mxu0 %v2896
        %2975 = vmatprep.subr.bf16.mxu0 0
        %2976 = vmatpush2.bf16.msra.mxu0 %v2895
        %2977 = vmatprep.subr.bf16.mxu0 0
        %2978 = vmatpush2.bf16.msra.mxu0 %v2894
        %2979 = vmatprep.subr.bf16.mxu0 0
        %2980 = vmatpush2.bf16.msra.mxu0 %v2893
        %2981 = vmatprep.mubr.bf16.mxu0 %v2683
        %2982 = vmatmul.mubr.bf16.gmra.mxu0 %v2682
        %v2983 = vpop.f32.mrf.mxu0
        %v2984 = vadd.f32 %v2755, %v2983
        %v2985 = vpop.f32.mrf.mxu0
        %v2986 = vpop.f32.mrf.mxu0
        %v2987 = vadd.f32 %v2755, %v2986
        %v2988 = vpop.f32.mrf.mxu0
        %2989 = vdwg.mxu0
        %2990 = vmatprep.subr.bf16.mxu0 0
        %2991 = vmatpush1.bf16.msra.mxu0 %v2908
        %2992 = vmatprep.subr.bf16.mxu0 0
        %2993 = vmatpush1.bf16.msra.mxu0 %v2907
        %2994 = vmatprep.subr.bf16.mxu0 0
        %2995 = vmatpush1.bf16.msra.mxu0 %v2906
        %2996 = vmatprep.subr.bf16.mxu0 0
        %2997 = vmatpush1.bf16.msra.mxu0 %v2905
        %2998 = vmatprep.subr.bf16.mxu0 0
        %2999 = vmatpush1.bf16.msra.mxu0 %v2904
        %3000 = vmatprep.subr.bf16.mxu0 0
        %3001 = vmatpush1.bf16.msra.mxu0 %v2903
        %3002 = vmatprep.subr.bf16.mxu0 0
        %3003 = vmatpush1.bf16.msra.mxu0 %v2902
        %3004 = vmatprep.subr.bf16.mxu0 0
        %3005 = vmatpush1.bf16.msra.mxu0 %v2901
        %3006 = vmatprep.subr.bf16.mxu0 0
        %3007 = vmatpush2.bf16.msra.mxu0 %v2916
        %3008 = vmatprep.subr.bf16.mxu0 0
        %3009 = vmatpush2.bf16.msra.mxu0 %v2915
        %3010 = vmatprep.subr.bf16.mxu0 0
        %3011 = vmatpush2.bf16.msra.mxu0 %v2914
        %3012 = vmatprep.subr.bf16.mxu0 0
        %3013 = vmatpush2.bf16.msra.mxu0 %v2913
        %3014 = vmatprep.subr.bf16.mxu0 0
        %3015 = vmatpush2.bf16.msra.mxu0 %v2912
        %3016 = vmatprep.subr.bf16.mxu0 0
        %3017 = vmatpush2.bf16.msra.mxu0 %v2911
        %3018 = vmatprep.subr.bf16.mxu0 0
        %3019 = vmatpush2.bf16.msra.mxu0 %v2910
        %3020 = vmatprep.subr.bf16.mxu0 0
        %3021 = vmatpush2.bf16.msra.mxu0 %v2909
        %3022 = vmatprep.mubr.bf16.mxu0 %v2685
        %3023 = vmatmul.mubr.bf16.gmra.mxu0 %v2684
        %v3024 = vpop.f32.mrf.mxu0
        %v3025 = vadd.f32 %v2984, %v3024
        %v3026 = vpop.f32.mrf.mxu0
        %v3027 = vpop.f32.mrf.mxu0
        %v3028 = vadd.f32 %v2987, %v3027
        %v3029 = vpop.f32.mrf.mxu0
        %3030 = vdwg.mxu0
        %v3031 = vadd.f32 %v2275, %v3025
        %v3032 = vadd.f32 %v2276, %v3028
        %3033 = vst [vmem:[%s802] sm:$0xff] %v3031
        %3034 = vst [vmem:[%s802 + $0x8] sm:$0xff] %v3032
        %s3035 = sand.u32 %s400, 1
        %s3036 = scalar_lea.sflag [#allocation4], %s3035
        %s3037 = sand.u32 %s400, 1
        %s3038 = smul.addr %s3037, 16
        %s3039 = scalar_lea.vmem [#allocation17], %s3038
        // Predicated region
        $region113: #{tpu_custom_call.1} parent=71 // pred_check
          %p3040 = pneg %p410
        $region114: #{tpu_custom_call.1} parent=71 // pred_check_branch
          %3042 = sbr.rel (%p3040) target = $region116
        $region115: #{tpu_custom_call.1} parent=71 // pred_region
          %s3043 = smul.u32 2, %s46
          %s3045 = ssub.s32 256, 256
          %3046 = vsyncadd %s3036, %s3045
          %s3047 = smul.addr %s3043, 128
          %s3048 = scalar_lea.hbm %s13, %s3047
          %s3049 = sshll.u32 %s3039, 4
          %s3050 = int_to_ptr.vmem [resolvable:$true] %s3049
          %3055 = dma.vmem_to_hbm [thread:$0]  %s3050, 256, %s3048, %s3036, 128, 128, 8
        $region116: #{tpu_custom_call.1} parent=71 // pred_fallthru
          _
      $region72: #{tpu_custom_call.1} parent=5 // pred_fallthru
        _
      %p3056 = scmp.le.s32.totalorder 2, %s37
      // Predicated region
      $region117: #{tpu_custom_call.1} parent=5 // pred_check
        %p3057 = pneg %p3056
      $region118: #{tpu_custom_call.1} parent=5 // pred_check_branch
        %3059 = sbr.rel (%p3057) target = $region120
      $region119: #{tpu_custom_call.1} parent=5 // pred_region
        %s3060 = ssub.s32 %s37, 2
        // Predicated region
        $region121: #{tpu_custom_call.1} parent=119 // pred_check
          %p3061 = pneg %p416
        $region122: #{tpu_custom_call.1} parent=119 // pred_check_branch
          %3063 = sbr.rel (%p3061) target = $region124
        $region123: #{tpu_custom_call.1} parent=119 // pred_region
          %s3064 = sand.u32 %s401, 1
          %s3065 = scalar_lea.sflag [#allocation4], %s3064
          %s3066 = sand.u32 %s401, 1
          %s3067 = smul.addr %s3066, 16
          %s3068 = scalar_lea.vmem [#allocation17], %s3067
          %3069 = dma.done %s3065, 256
        $region124: #{tpu_custom_call.1} parent=119 // pred_fallthru
          _
      $region120: #{tpu_custom_call.1} parent=5 // pred_fallthru
        _
    $region6: #{tpu_custom_call.1} parent=1 // loop_footer
      %s41 = sadd.s32 1, %s37
    $region7: #{tpu_custom_call.1} parent=1 // loop_footer_branch
      %36 = sbr.rel target = $region3
    $region8: #{tpu_custom_call.1} parent=1 // loop_exit
      _
    %3070 = vsyncpa [#allocation3], 1
    %s3071 = scalar_lea.sflag [#allocation3], 1
    %3072 = vsyncpa %s3071, 1
    %3073 = vsyncpa [#allocation6], 1
    %s3074 = scalar_lea.sflag [#allocation6], 1
    %3075 = vsyncpa %s3074, 1
    %3076 = vsyncpa [#allocation9], 1
    %s3077 = scalar_lea.sflag [#allocation9], 1
    %3078 = vsyncpa %s3077, 1
    %3079 = vsyncpa [#allocation12], 1
    %s3080 = scalar_lea.sflag [#allocation12], 1
    %3081 = vsyncpa %s3080, 1
    %3082 = vsyncpa [#allocation15], 1
    %s3083 = scalar_lea.sflag [#allocation15], 1
    %3084 = vsyncpa %s3083, 1
    %3085 = vsyncpa [#allocation4], 1
    %s3086 = scalar_lea.sflag [#allocation4], 1
    %3087 = vsyncpa %s3086, 1

</llo_original>
